<compile_context>
chip_gen: v6e
topology: v6e:2x2x1
jax: 0.10.0
libtpu: 0.0.40
codegen_flags: <defaults>
</compile_context>

<pallas_src>
import functools
import math

import numpy as np

import jax
import jax.numpy as jnp
from jax import lax
from jax.experimental import pallas as pl
from jax.experimental.pallas import tpu as pltpu


# Max images folded into one grid step (lane axis = Bt*H*W).  Sized so the
# per-step f32 footprint (double-buffered in/out blocks, two (9, N) masks, the
# (9C, N) im2col patches and a handful of (C, N) temporaries) stays ~4-5 MiB.
_BT_MAX = 16


# ----------------------------------------------------------------------------
# Parameter construction (glue, plain JAX / numpy)
# ----------------------------------------------------------------------------
def _quaternion_conv_weight(key, in_ch, out_ch, kh, kw):
    """Dense HWIO conv weight of a QuaternionConv via Hamilton block structure."""
    assert in_ch % 4 == 0 and out_ch % 4 == 0
    kr, ki, kj, kk = jax.random.split(key, 4)
    shape = (out_ch // 4, in_ch // 4, kh, kw)
    scale = 1.0 / math.sqrt(in_ch * kh * kw)
    r = jax.random.normal(kr, shape, jnp.float32) * scale
    i = jax.random.normal(ki, shape, jnp.float32) * scale
    j = jax.random.normal(kj, shape, jnp.float32) * scale
    k = jax.random.normal(kk, shape, jnp.float32) * scale
    row_r = jnp.concatenate([r, -i, -j, -k], axis=1)
    row_i = jnp.concatenate([i, r, -k, j], axis=1)
    row_j = jnp.concatenate([j, k, r, -i], axis=1)
    row_k = jnp.concatenate([k, -j, i, r], axis=1)
    w_oihw = jnp.concatenate([row_r, row_i, row_j, row_k], axis=0)  # (O, I, kh, kw)
    return jnp.transpose(w_oihw, (2, 3, 1, 0))                      # (kh, kw, I, O)


def _tap_mask(H, W, dil):
    """(9, H*W) 0/1 float mask: zero-padding validity of each 3x3 conv tap."""
    y = np.repeat(np.arange(H), W)          # (H*W,)
    x = np.tile(np.arange(W), H)            # (H*W,)
    rows = []
    for ky in range(3):
        for kx in range(3):
            dy, dx = (ky - 1) * dil, (kx - 1) * dil
            m = ((y + dy >= 0) & (y + dy < H) & (x + dx >= 0) & (x + dx < W))
            rows.append(m.astype(np.float32))
    return np.stack(rows, axis=0)           # (9, H*W)


def _prep_params(w_p1, b_p1, w_c0, b_c0, w_cs_full, b_cs, w_c1, b_c1, w_p2, b_p2):
    """HWIO weights -> matmul-ready (Cout, K) weights, (C, 1) biases."""
    C = b_p1.shape[0]

    def t1x1(w):                 # (1,1,Cin,Cout) -> (Cout, Cin)
        return jnp.transpose(w[0, 0], (1, 0))

    def t3x3(w):                 # (3,3,Cin,Cout) -> (Cout, 9*Cin), tap-major (ky,kx,ci)
        kh, kw, ci, co = w.shape
        return jnp.transpose(w.reshape(kh * kw * ci, co), (1, 0))

    # conv_spatial's input is cat([attn, attn], channel) -> fold the duplication
    # into the weight: W_eff = W[:, :, :C] + W[:, :, C:]
    w_cs = w_cs_full[:, :, :C, :] + w_cs_full[:, :, C:, :]

    col = lambda b: b.reshape(-1, 1)
    return (t1x1(w_p1), col(b_p1),
            t3x3(w_c0), col(b_c0),
            t3x3(w_cs), col(b_cs),
            t1x1(w_c1), col(b_c1),
            t1x1(w_p2), col(b_p2))


# ----------------------------------------------------------------------------
# In-kernel math helpers
# ----------------------------------------------------------------------------
def _gelu(x):
    # TODO(synk): nn.GELU() exact-erf GELU; erf via Abramowitz&Stegun 7.1.26
    # (abs err <= 1.5e-7) since lax.erf has no guaranteed Mosaic lowering.
    # exp and the approximate reciprocal ride the EUP slot (VALU stays light).
    z = x * 0.7071067811865476
    a1, a2, a3, a4, a5 = (0.254829592, -0.284496736, 1.421413741,
                          -1.453152027, 1.061405429)
    p = 0.3275911
    s = jnp.where(z >= 0.0, 1.0, -1.0)
    az = jnp.abs(z)
    t = pl.reciprocal(1.0 + p * az, approx=True)
    poly = t * (a1 + t * (a2 + t * (a3 + t * (a4 + t * a5))))
    erf = s * (1.0 - poly * jnp.exp(-az * az))
    return 0.5 * x * (1.0 + erf)


# ----------------------------------------------------------------------------
# Pallas kernel: full SpatialAttention forward for Bt images (lane-folded)
# ----------------------------------------------------------------------------
def _spatial_attention_kernel(x_ref,
                              w_p1_ref, b_p1_ref,      # proj_1 (1x1)
                              w_c0_ref, b_c0_ref,      # conv0 (3x3, pad 1)
                              w_cs_ref, b_cs_ref,      # conv_spatial (3x3, dil 3, pad 3)
                              w_c1_ref, b_c1_ref,      # conv1 (1x1)
                              w_p2_ref, b_p2_ref,      # proj_2 (1x1)
                              m_c0_ref, m_cs_ref,      # (9, N) tap masks (dil 1 / dil 3)
                              out_ref, *, W):
    N = out_ref.shape[1]                                # N = Bt * H * W (lane axis)
    x = x_ref[...].astype(jnp.float32)                  # (C, N), lane-dense

    def conv1x1(v, w_ref, b_ref):
        return jnp.dot(w_ref[...], v, preferred_element_type=jnp.float32) + b_ref[...]

    def conv3x3(v, w_ref, mask_ref, b_ref, dil):
        # 9 shifted taps via XLU lane-rotation.  Each tap is masked *before*
        # concatenation (halves the transient live set vs. masking the full
        # (9C, N) patches); the (1, N) mask row broadcasts over C sublanes.
        # The roll wrap across image boundaries only touches masked lanes.
        taps = []
        t = 0
        for ky in range(3):
            for kx in range(3):
                s = ((ky - 1) * dil) * W + (kx - 1) * dil   # flat offset of the tap
                tap = v if s == 0 else pltpu.roll(v, shift=(-s) % N, axis=1)
                if ky == 1 and kx == 1:
                    taps.append(tap)                         # center tap: mask == 1
                else:
                    taps.append(tap * mask_ref[pl.ds(t, 1), :])
                t += 1
        patches = jnp.concatenate(taps, axis=0)             # (9C, N)
        return (jnp.dot(w_ref[...], patches, preferred_element_type=jnp.float32)
                + b_ref[...])

    # ---- proj_1 (1x1 quaternion conv) + GELU --------------------------------
    u = _gelu(conv1x1(x, w_p1_ref, b_p1_ref))                # AttentionModule input

    # ---- spatial gating unit (AttentionModule) ------------------------------
    attn = conv3x3(u, w_c0_ref, m_c0_ref, b_c0_ref, dil=1)      # conv0
    attn = conv3x3(attn, w_cs_ref, m_cs_ref, b_cs_ref, dil=3)   # conv_spatial (cat folded)
    attn = conv1x1(attn, w_c1_ref, b_c1_ref)                    # conv1
    attn = u * attn                                             # u * attn gating

    # ---- proj_2 (1x1) + residual --------------------------------------------
    z = conv1x1(attn, w_p2_ref, b_p2_ref)
    out_ref[...] = (z + x).astype(out_ref.dtype)


# ----------------------------------------------------------------------------
# Wrapper
# ----------------------------------------------------------------------------
def _choose_block_batch(B):
    bt = min(B, _BT_MAX)
    if B > 1:
        # keep >= 2 grid steps so both TensorCores on v7x get work
        bt = min(bt, -(-B // 2))
    return max(bt, 1)


def spatial_attention(x_nchw, kparams, *, block_batch=None):
    """x_nchw: (B, C, H, W) float32 (PyTorch NCHW layout)."""
    B, C, H, W = x_nchw.shape
    HW = H * W
    Bt = block_batch if block_batch is not None else _choose_block_batch(B)
    n_blocks = -(-B // Bt)
    Bp = n_blocks * Bt

    # Lane-dense layout: channels on sublanes, (image, pixel) on lanes.
    # (wrapper-side layout plumbing only; single small XLA transpose)
    x2 = jnp.transpose(x_nchw.reshape(B, C, HW), (1, 0, 2))      # (C, B, HW)
    if Bp != B:
        x2 = jnp.pad(x2, ((0, 0), (0, Bp - B), (0, 0)))
    x2 = x2.reshape(C, Bp * HW)

    # (9, Bt*HW) tap-validity masks, tiled per image so pltpu.roll's wrap across
    # image boundaries inside a block only ever lands on masked lanes.
    m_c0 = jnp.asarray(np.tile(_tap_mask(H, W, dil=1), (1, Bt)))
    m_cs = jnp.asarray(np.tile(_tap_mask(H, W, dil=3), (1, Bt)))

    consts = list(kparams) + [m_c0, m_cs]

    def full_spec(a):
        nd = a.ndim
        # constant block index -> Pallas fetches these once (no re-DMA per step)
        return pl.BlockSpec(a.shape, lambda i, _nd=nd: (0,) * _nd)

    blk_spec = pl.BlockSpec((C, Bt * HW), lambda i: (0, i))
    kernel = functools.partial(_spatial_attention_kernel, W=W)

    out2 = pl.pallas_call(
        kernel,
        out_shape=jax.ShapeDtypeStruct((C, Bp * HW), x_nchw.dtype),
        grid_spec=pltpu.PrefetchScalarGridSpec(
            num_scalar_prefetch=0,
            grid=(n_blocks,),
            in_specs=[blk_spec] + [full_spec(a) for a in consts],
            out_specs=blk_spec,
        ),
        compiler_params=pltpu.CompilerParams(
            dimension_semantics=("parallel",),
            vmem_limit_bytes=32 * 1024 * 1024,
        ),
    )(x2, *consts)

    out = jnp.transpose(out2.reshape(C, Bp, HW), (1, 0, 2))[:B]
    return out.reshape(B, C, H, W)


# ----------------------------------------------------------------------------
# Pure-JAX reference (exact module semantics) for a numerical sanity check
# ----------------------------------------------------------------------------
def _conv_ref(x, w_hwio, b, *, padding, dilation):
    y = lax.conv_general_dilated(
        x, w_hwio, window_strides=(1, 1),
        padding=((padding, padding), (padding, padding)),
        rhs_dilation=(dilation, dilation),
        dimension_numbers=("NCHW", "HWIO", "NCHW"),
        precision=lax.Precision.HIGHEST)
    return y + b.reshape(1, -1, 1, 1)


def _reference_forward(x, w_p1, b_p1, w_c0, b_c0, w_cs, b_cs, w_c1, b_c1, w_p2, b_p2):
    shortcut = x
    h = _conv_ref(x, w_p1, b_p1, padding=0, dilation=1)
    h = 0.5 * h * (1.0 + lax.erf(h * 0.7071067811865476))       # exact-erf GELU
    u = h
    a = _conv_ref(h, w_c0, b_c0, padding=1, dilation=1)
    a = _conv_ref(jnp.concatenate([a, a], axis=1), w_cs, b_cs, padding=3, dilation=3)
    a = _conv_ref(a, w_c1, b_c1, padding=0, dilation=1)
    h = u * a
    h = _conv_ref(h, w_p2, b_p2, padding=0, dilation=1)
    return h + shortcut


# ----------------------------------------------------------------------------
if __name__ == "__main__":
    # d_model must be divisible by 4 (quaternion components)
    B, C, H, W = 8, 8, 16, 16   # B=8 exercises the batched grid (Bt=4, grid=(2,))

    key = jax.random.PRNGKey(0)
    keys = jax.random.split(key, 12)

    x = jax.random.normal(keys[0], (B, C, H, W), jnp.float32)   # NCHW like PyTorch

    def bias(k, n):
        return jax.random.normal(k, (n,), jnp.float32) * 0.01

    # proj_1: QuaternionConv(d_model, d_model, 1, 1)
    w_p1 = _quaternion_conv_weight(keys[1], C, C, 1, 1)
    b_p1 = bias(keys[2], C)
    # spatial_gating_unit.conv0: QuaternionConv(dim, dim, 3, padding=1, stride=1)
    w_c0 = _quaternion_conv_weight(keys[3], C, C, 3, 3)
    b_c0 = bias(keys[4], C)
    # spatial_gating_unit.conv_spatial: QuaternionConv(2*dim, dim, 3, 1, padding=3, dilatation=3)
    w_cs = _quaternion_conv_weight(keys[5], 2 * C, C, 3, 3)
    b_cs = bias(keys[6], C)
    # spatial_gating_unit.conv1: QuaternionConv(dim, dim, 1, 1)
    w_c1 = _quaternion_conv_weight(keys[7], C, C, 1, 1)
    b_c1 = bias(keys[8], C)
    # proj_2: QuaternionConv(d_model, d_model, 1, 1)
    w_p2 = _quaternion_conv_weight(keys[9], C, C, 1, 1)
    b_p2 = bias(keys[10], C)

    kparams = _prep_params(w_p1, b_p1, w_c0, b_c0, w_cs, b_cs, w_c1, b_c1, w_p2, b_p2)

    out = spatial_attention(x, kparams)
    out = jax.block_until_ready(out)
    assert out.shape == (B, C, H, W) and out.dtype == jnp.float32

    ref = _reference_forward(x, w_p1, b_p1, w_c0, b_c0, w_cs, b_cs, w_c1, b_c1, w_p2, b_p2)
    err = float(jnp.max(jnp.abs(out - ref)))
    assert err < 5e-3, f"max abs error vs reference: {err}"
    print("KERNEL_OK")
</pallas_src>

<mosaic_0001>
module attributes {stable_mosaic.version = 11 : i64} {
  func.func @_spatial_attention_kernel(%arg0: i32, %arg1: memref<8x1024xf32, #tpu.memory_space<vmem>>, %arg2: memref<8x8xf32, #tpu.memory_space<vmem>>, %arg3: memref<8x1xf32, #tpu.memory_space<vmem>>, %arg4: memref<8x72xf32, #tpu.memory_space<vmem>>, %arg5: memref<8x1xf32, #tpu.memory_space<vmem>>, %arg6: memref<8x72xf32, #tpu.memory_space<vmem>>, %arg7: memref<8x1xf32, #tpu.memory_space<vmem>>, %arg8: memref<8x8xf32, #tpu.memory_space<vmem>>, %arg9: memref<8x1xf32, #tpu.memory_space<vmem>>, %arg10: memref<8x8xf32, #tpu.memory_space<vmem>>, %arg11: memref<8x1xf32, #tpu.memory_space<vmem>>, %arg12: memref<9x1024xf32, #tpu.memory_space<vmem>>, %arg13: memref<9x1024xf32, #tpu.memory_space<vmem>>, %arg14: memref<8x1024xf32, #tpu.memory_space<vmem>>) attributes {dimension_semantics = [#tpu.dimension_semantics<parallel>], iteration_bounds = array<i64: 2>, scalar_prefetch = 0 : i64, scratch_operands = 0 : i64, tpu.core_type = #tpu.core_type<tc>, window_params = [{transform_indices = @transform_0, window_bounds = array<i64: 8, 1024>}, {pipeline_mode = #tpu.pipeline_mode<synchronous>, transform_indices = @transform_1, window_bounds = array<i64: 8, 8>}, {pipeline_mode = #tpu.pipeline_mode<synchronous>, transform_indices = @transform_2, window_bounds = array<i64: 8, 1>}, {pipeline_mode = #tpu.pipeline_mode<synchronous>, transform_indices = @transform_3, window_bounds = array<i64: 8, 72>}, {pipeline_mode = #tpu.pipeline_mode<synchronous>, transform_indices = @transform_4, window_bounds = array<i64: 8, 1>}, {pipeline_mode = #tpu.pipeline_mode<synchronous>, transform_indices = @transform_5, window_bounds = array<i64: 8, 72>}, {pipeline_mode = #tpu.pipeline_mode<synchronous>, transform_indices = @transform_6, window_bounds = array<i64: 8, 1>}, {pipeline_mode = #tpu.pipeline_mode<synchronous>, transform_indices = @transform_7, window_bounds = array<i64: 8, 8>}, {pipeline_mode = #tpu.pipeline_mode<synchronous>, transform_indices = @transform_8, window_bounds = array<i64: 8, 1>}, {pipeline_mode = #tpu.pipeline_mode<synchronous>, transform_indices = @transform_9, window_bounds = array<i64: 8, 8>}, {pipeline_mode = #tpu.pipeline_mode<synchronous>, transform_indices = @transform_10, window_bounds = array<i64: 8, 1>}, {pipeline_mode = #tpu.pipeline_mode<synchronous>, transform_indices = @transform_11, window_bounds = array<i64: 9, 1024>}, {pipeline_mode = #tpu.pipeline_mode<synchronous>, transform_indices = @transform_12, window_bounds = array<i64: 9, 1024>}, {transform_indices = @transform_13, window_bounds = array<i64: 8, 1024>}]} {
    %c0 = arith.constant 0 : index
    %c0_0 = arith.constant 0 : index
    %0 = vector.load %arg1[%c0, %c0_0] : memref<8x1024xf32, #tpu.memory_space<vmem>>, vector<8x1024xf32>
    %c0_1 = arith.constant 0 : index
    %c0_2 = arith.constant 0 : index
    %1 = vector.load %arg2[%c0_1, %c0_2] : memref<8x8xf32, #tpu.memory_space<vmem>>, vector<8x8xf32>
    %cst = arith.constant dense<0.000000e+00> : vector<8x1024xf32>
    %2 = tpu.matmul %1, %0, %cst {dimension_numbers = #tpu.dot_dimension_numbers<[1], [0], [0], [1], [0, 0, 1, 1], [], []>} : vector<8x8xf32>, vector<8x1024xf32>, vector<8x1024xf32> -> vector<8x1024xf32>
    %c0_3 = arith.constant 0 : index
    %c0_4 = arith.constant 0 : index
    %3 = vector.load %arg3[%c0_3, %c0_4] : memref<8x1xf32, #tpu.memory_space<vmem>>, vector<8x1xf32>
    %4 = vector.broadcast %3 : vector<8x1xf32> to vector<8x1024xf32>
    %5 = arith.addf %2, %4 : vector<8x1024xf32>
    %cst_5 = arith.constant 0.707106769 : f32
    %6 = vector.broadcast %cst_5 : f32 to vector<8x1024xf32>
    %7 = arith.mulf %5, %6 : vector<8x1024xf32>
    %cst_6 = arith.constant 0.000000e+00 : f32
    %8 = vector.broadcast %cst_6 : f32 to vector<8x1024xf32>
    %9 = arith.cmpf oge, %7, %8 : vector<8x1024xf32>
    %cst_7 = arith.constant 1.000000e+00 : f32
    %cst_8 = arith.constant -1.000000e+00 : f32
    %10 = vector.broadcast %cst_7 : f32 to vector<8x1024xf32>
    %11 = vector.broadcast %cst_8 : f32 to vector<8x1024xf32>
    %12 = arith.select %9, %10, %11 : vector<8x1024xi1>, vector<8x1024xf32>
    %13 = math.absf %7 : vector<8x1024xf32>
    %cst_9 = arith.constant 0.327591091 : f32
    %14 = vector.broadcast %cst_9 : f32 to vector<8x1024xf32>
    %15 = arith.mulf %14, %13 : vector<8x1024xf32>
    %cst_10 = arith.constant 1.000000e+00 : f32
    %16 = vector.broadcast %cst_10 : f32 to vector<8x1024xf32>
    %17 = arith.addf %16, %15 : vector<8x1024xf32>
    %18 = tpu.reciprocal %17 {approx = true} : vector<8x1024xf32> -> vector<8x1024xf32>
    %cst_11 = arith.constant 1.06140542 : f32
    %19 = vector.broadcast %cst_11 : f32 to vector<8x1024xf32>
    %20 = arith.mulf %18, %19 : vector<8x1024xf32>
    %cst_12 = arith.constant -1.45315206 : f32
    %21 = vector.broadcast %cst_12 : f32 to vector<8x1024xf32>
    %22 = arith.addf %21, %20 : vector<8x1024xf32>
    %23 = arith.mulf %18, %22 : vector<8x1024xf32>
    %cst_13 = arith.constant 1.42141378 : f32
    %24 = vector.broadcast %cst_13 : f32 to vector<8x1024xf32>
    %25 = arith.addf %24, %23 : vector<8x1024xf32>
    %26 = arith.mulf %18, %25 : vector<8x1024xf32>
    %cst_14 = arith.constant -0.284496725 : f32
    %27 = vector.broadcast %cst_14 : f32 to vector<8x1024xf32>
    %28 = arith.addf %27, %26 : vector<8x1024xf32>
    %29 = arith.mulf %18, %28 : vector<8x1024xf32>
    %cst_15 = arith.constant 0.254829586 : f32
    %30 = vector.broadcast %cst_15 : f32 to vector<8x1024xf32>
    %31 = arith.addf %30, %29 : vector<8x1024xf32>
    %32 = arith.mulf %18, %31 : vector<8x1024xf32>
    %cst_16 = arith.constant 0.000000e+00 : f32
    %33 = vector.broadcast %cst_16 : f32 to vector<8x1024xf32>
    %34 = arith.subf %33, %13 : vector<8x1024xf32>
    %35 = arith.mulf %34, %13 : vector<8x1024xf32>
    %36 = math.exp %35 : vector<8x1024xf32>
    %37 = arith.mulf %32, %36 : vector<8x1024xf32>
    %cst_17 = arith.constant 1.000000e+00 : f32
    %38 = vector.broadcast %cst_17 : f32 to vector<8x1024xf32>
    %39 = arith.subf %38, %37 : vector<8x1024xf32>
    %40 = arith.mulf %12, %39 : vector<8x1024xf32>
    %cst_18 = arith.constant 5.000000e-01 : f32
    %41 = vector.broadcast %cst_18 : f32 to vector<8x1024xf32>
    %42 = arith.mulf %41, %5 : vector<8x1024xf32>
    %cst_19 = arith.constant 1.000000e+00 : f32
    %43 = vector.broadcast %cst_19 : f32 to vector<8x1024xf32>
    %44 = arith.addf %43, %40 : vector<8x1024xf32>
    %45 = arith.mulf %42, %44 : vector<8x1024xf32>
    %c17_i32 = arith.constant 17 : i32
    %46 = tpu.dynamic_rotate %45 by %c17_i32 dim 1 : vector<8x1024xf32>, i32 -> vector<8x1024xf32>
    %c0_20 = arith.constant 0 : index
    %c0_21 = arith.constant 0 : index
    %47 = vector.load %arg12[%c0_20, %c0_21] : memref<9x1024xf32, #tpu.memory_space<vmem>>, vector<1x1024xf32>
    %48 = vector.broadcast %47 : vector<1x1024xf32> to vector<8x1024xf32>
    %49 = arith.mulf %46, %48 : vector<8x1024xf32>
    %c16_i32 = arith.constant 16 : i32
    %50 = tpu.dynamic_rotate %45 by %c16_i32 dim 1 : vector<8x1024xf32>, i32 -> vector<8x1024xf32>
    %c1 = arith.constant 1 : index
    %c0_22 = arith.constant 0 : index
    %51 = vector.load %arg12[%c1, %c0_22] : memref<9x1024xf32, #tpu.memory_space<vmem>>, vector<1x1024xf32>
    %52 = vector.broadcast %51 : vector<1x1024xf32> to vector<8x1024xf32>
    %53 = arith.mulf %50, %52 : vector<8x1024xf32>
    %c15_i32 = arith.constant 15 : i32
    %54 = tpu.dynamic_rotate %45 by %c15_i32 dim 1 : vector<8x1024xf32>, i32 -> vector<8x1024xf32>
    %c2 = arith.constant 2 : index
    %c0_23 = arith.constant 0 : index
    %55 = vector.load %arg12[%c2, %c0_23] : memref<9x1024xf32, #tpu.memory_space<vmem>>, vector<1x1024xf32>
    %56 = vector.broadcast %55 : vector<1x1024xf32> to vector<8x1024xf32>
    %57 = arith.mulf %54, %56 : vector<8x1024xf32>
    %c1_i32 = arith.constant 1 : i32
    %58 = tpu.dynamic_rotate %45 by %c1_i32 dim 1 : vector<8x1024xf32>, i32 -> vector<8x1024xf32>
    %c3 = arith.constant 3 : index
    %c0_24 = arith.constant 0 : index
    %59 = vector.load %arg12[%c3, %c0_24] : memref<9x1024xf32, #tpu.memory_space<vmem>>, vector<1x1024xf32>
    %60 = vector.broadcast %59 : vector<1x1024xf32> to vector<8x1024xf32>
    %61 = arith.mulf %58, %60 : vector<8x1024xf32>
    %c1023_i32 = arith.constant 1023 : i32
    %62 = tpu.dynamic_rotate %45 by %c1023_i32 dim 1 : vector<8x1024xf32>, i32 -> vector<8x1024xf32>
    %c5 = arith.constant 5 : index
    %c0_25 = arith.constant 0 : index
    %63 = vector.load %arg12[%c5, %c0_25] : memref<9x1024xf32, #tpu.memory_space<vmem>>, vector<1x1024xf32>
    %64 = vector.broadcast %63 : vector<1x1024xf32> to vector<8x1024xf32>
    %65 = arith.mulf %62, %64 : vector<8x1024xf32>
    %c1009_i32 = arith.constant 1009 : i32
    %66 = tpu.dynamic_rotate %45 by %c1009_i32 dim 1 : vector<8x1024xf32>, i32 -> vector<8x1024xf32>
    %c6 = arith.constant 6 : index
    %c0_26 = arith.constant 0 : index
    %67 = vector.load %arg12[%c6, %c0_26] : memref<9x1024xf32, #tpu.memory_space<vmem>>, vector<1x1024xf32>
    %68 = vector.broadcast %67 : vector<1x1024xf32> to vector<8x1024xf32>
    %69 = arith.mulf %66, %68 : vector<8x1024xf32>
    %c1008_i32 = arith.constant 1008 : i32
    %70 = tpu.dynamic_rotate %45 by %c1008_i32 dim 1 : vector<8x1024xf32>, i32 -> vector<8x1024xf32>
    %c7 = arith.constant 7 : index
    %c0_27 = arith.constant 0 : index
    %71 = vector.load %arg12[%c7, %c0_27] : memref<9x1024xf32, #tpu.memory_space<vmem>>, vector<1x1024xf32>
    %72 = vector.broadcast %71 : vector<1x1024xf32> to vector<8x1024xf32>
    %73 = arith.mulf %70, %72 : vector<8x1024xf32>
    %c1007_i32 = arith.constant 1007 : i32
    %74 = tpu.dynamic_rotate %45 by %c1007_i32 dim 1 : vector<8x1024xf32>, i32 -> vector<8x1024xf32>
    %c8 = arith.constant 8 : index
    %c0_28 = arith.constant 0 : index
    %75 = vector.load %arg12[%c8, %c0_28] : memref<9x1024xf32, #tpu.memory_space<vmem>>, vector<1x1024xf32>
    %76 = vector.broadcast %75 : vector<1x1024xf32> to vector<8x1024xf32>
    %77 = arith.mulf %74, %76 : vector<8x1024xf32>
    %78 = tpu.concatenate %49, %53, %57, %61, %45, %65, %69, %73, %77 in 0 : vector<8x1024xf32>, vector<8x1024xf32>, vector<8x1024xf32>, vector<8x1024xf32>, vector<8x1024xf32>, vector<8x1024xf32>, vector<8x1024xf32>, vector<8x1024xf32>, vector<8x1024xf32> -> vector<72x1024xf32>
    %c0_29 = arith.constant 0 : index
    %c0_30 = arith.constant 0 : index
    %79 = vector.load %arg4[%c0_29, %c0_30] : memref<8x72xf32, #tpu.memory_space<vmem>>, vector<8x72xf32>
    %cst_31 = arith.constant dense<0.000000e+00> : vector<8x1024xf32>
    %80 = tpu.matmul %79, %78, %cst_31 {dimension_numbers = #tpu.dot_dimension_numbers<[1], [0], [0], [1], [0, 0, 1, 1], [], []>} : vector<8x72xf32>, vector<72x1024xf32>, vector<8x1024xf32> -> vector<8x1024xf32>
    %c0_32 = arith.constant 0 : index
    %c0_33 = arith.constant 0 : index
    %81 = vector.load %arg5[%c0_32, %c0_33] : memref<8x1xf32, #tpu.memory_space<vmem>>, vector<8x1xf32>
    %82 = vector.broadcast %81 : vector<8x1xf32> to vector<8x1024xf32>
    %83 = arith.addf %80, %82 : vector<8x1024xf32>
    %c51_i32 = arith.constant 51 : i32
    %84 = tpu.dynamic_rotate %83 by %c51_i32 dim 1 : vector<8x1024xf32>, i32 -> vector<8x1024xf32>
    %c0_34 = arith.constant 0 : index
    %c0_35 = arith.constant 0 : index
    %85 = vector.load %arg13[%c0_34, %c0_35] : memref<9x1024xf32, #tpu.memory_space<vmem>>, vector<1x1024xf32>
    %86 = vector.broadcast %85 : vector<1x1024xf32> to vector<8x1024xf32>
    %87 = arith.mulf %84, %86 : vector<8x1024xf32>
    %c48_i32 = arith.constant 48 : i32
    %88 = tpu.dynamic_rotate %83 by %c48_i32 dim 1 : vector<8x1024xf32>, i32 -> vector<8x1024xf32>
    %c1_36 = arith.constant 1 : index
    %c0_37 = arith.constant 0 : index
    %89 = vector.load %arg13[%c1_36, %c0_37] : memref<9x1024xf32, #tpu.memory_space<vmem>>, vector<1x1024xf32>
    %90 = vector.broadcast %89 : vector<1x1024xf32> to vector<8x1024xf32>
    %91 = arith.mulf %88, %90 : vector<8x1024xf32>
    %c45_i32 = arith.constant 45 : i32
    %92 = tpu.dynamic_rotate %83 by %c45_i32 dim 1 : vector<8x1024xf32>, i32 -> vector<8x1024xf32>
    %c2_38 = arith.constant 2 : index
    %c0_39 = arith.constant 0 : index
    %93 = vector.load %arg13[%c2_38, %c0_39] : memref<9x1024xf32, #tpu.memory_space<vmem>>, vector<1x1024xf32>
    %94 = vector.broadcast %93 : vector<1x1024xf32> to vector<8x1024xf32>
    %95 = arith.mulf %92, %94 : vector<8x1024xf32>
    %c3_i32 = arith.constant 3 : i32
    %96 = tpu.dynamic_rotate %83 by %c3_i32 dim 1 : vector<8x1024xf32>, i32 -> vector<8x1024xf32>
    %c3_40 = arith.constant 3 : index
    %c0_41 = arith.constant 0 : index
    %97 = vector.load %arg13[%c3_40, %c0_41] : memref<9x1024xf32, #tpu.memory_space<vmem>>, vector<1x1024xf32>
    %98 = vector.broadcast %97 : vector<1x1024xf32> to vector<8x1024xf32>
    %99 = arith.mulf %96, %98 : vector<8x1024xf32>
    %c1021_i32 = arith.constant 1021 : i32
    %100 = tpu.dynamic_rotate %83 by %c1021_i32 dim 1 : vector<8x1024xf32>, i32 -> vector<8x1024xf32>
    %c5_42 = arith.constant 5 : index
    %c0_43 = arith.constant 0 : index
    %101 = vector.load %arg13[%c5_42, %c0_43] : memref<9x1024xf32, #tpu.memory_space<vmem>>, vector<1x1024xf32>
    %102 = vector.broadcast %101 : vector<1x1024xf32> to vector<8x1024xf32>
    %103 = arith.mulf %100, %102 : vector<8x1024xf32>
    %c979_i32 = arith.constant 979 : i32
    %104 = tpu.dynamic_rotate %83 by %c979_i32 dim 1 : vector<8x1024xf32>, i32 -> vector<8x1024xf32>
    %c6_44 = arith.constant 6 : index
    %c0_45 = arith.constant 0 : index
    %105 = vector.load %arg13[%c6_44, %c0_45] : memref<9x1024xf32, #tpu.memory_space<vmem>>, vector<1x1024xf32>
    %106 = vector.broadcast %105 : vector<1x1024xf32> to vector<8x1024xf32>
    %107 = arith.mulf %104, %106 : vector<8x1024xf32>
    %c976_i32 = arith.constant 976 : i32
    %108 = tpu.dynamic_rotate %83 by %c976_i32 dim 1 : vector<8x1024xf32>, i32 -> vector<8x1024xf32>
    %c7_46 = arith.constant 7 : index
    %c0_47 = arith.constant 0 : index
    %109 = vector.load %arg13[%c7_46, %c0_47] : memref<9x1024xf32, #tpu.memory_space<vmem>>, vector<1x1024xf32>
    %110 = vector.broadcast %109 : vector<1x1024xf32> to vector<8x1024xf32>
    %111 = arith.mulf %108, %110 : vector<8x1024xf32>
    %c973_i32 = arith.constant 973 : i32
    %112 = tpu.dynamic_rotate %83 by %c973_i32 dim 1 : vector<8x1024xf32>, i32 -> vector<8x1024xf32>
    %c8_48 = arith.constant 8 : index
    %c0_49 = arith.constant 0 : index
    %113 = vector.load %arg13[%c8_48, %c0_49] : memref<9x1024xf32, #tpu.memory_space<vmem>>, vector<1x1024xf32>
    %114 = vector.broadcast %113 : vector<1x1024xf32> to vector<8x1024xf32>
    %115 = arith.mulf %112, %114 : vector<8x1024xf32>
    %116 = tpu.concatenate %87, %91, %95, %99, %83, %103, %107, %111, %115 in 0 : vector<8x1024xf32>, vector<8x1024xf32>, vector<8x1024xf32>, vector<8x1024xf32>, vector<8x1024xf32>, vector<8x1024xf32>, vector<8x1024xf32>, vector<8x1024xf32>, vector<8x1024xf32> -> vector<72x1024xf32>
    %c0_50 = arith.constant 0 : index
    %c0_51 = arith.constant 0 : index
    %117 = vector.load %arg6[%c0_50, %c0_51] : memref<8x72xf32, #tpu.memory_space<vmem>>, vector<8x72xf32>
    %cst_52 = arith.constant dense<0.000000e+00> : vector<8x1024xf32>
    %118 = tpu.matmul %117, %116, %cst_52 {dimension_numbers = #tpu.dot_dimension_numbers<[1], [0], [0], [1], [0, 0, 1, 1], [], []>} : vector<8x72xf32>, vector<72x1024xf32>, vector<8x1024xf32> -> vector<8x1024xf32>
    %c0_53 = arith.constant 0 : index
    %c0_54 = arith.constant 0 : index
    %119 = vector.load %arg7[%c0_53, %c0_54] : memref<8x1xf32, #tpu.memory_space<vmem>>, vector<8x1xf32>
    %120 = vector.broadcast %119 : vector<8x1xf32> to vector<8x1024xf32>
    %121 = arith.addf %118, %120 : vector<8x1024xf32>
    %c0_55 = arith.constant 0 : index
    %c0_56 = arith.constant 0 : index
    %122 = vector.load %arg8[%c0_55, %c0_56] : memref<8x8xf32, #tpu.memory_space<vmem>>, vector<8x8xf32>
    %cst_57 = arith.constant dense<0.000000e+00> : vector<8x1024xf32>
    %123 = tpu.matmul %122, %121, %cst_57 {dimension_numbers = #tpu.dot_dimension_numbers<[1], [0], [0], [1], [0, 0, 1, 1], [], []>} : vector<8x8xf32>, vector<8x1024xf32>, vector<8x1024xf32> -> vector<8x1024xf32>
    %c0_58 = arith.constant 0 : index
    %c0_59 = arith.constant 0 : index
    %124 = vector.load %arg9[%c0_58, %c0_59] : memref<8x1xf32, #tpu.memory_space<vmem>>, vector<8x1xf32>
    %125 = vector.broadcast %124 : vector<8x1xf32> to vector<8x1024xf32>
    %126 = arith.addf %123, %125 : vector<8x1024xf32>
    %127 = arith.mulf %45, %126 : vector<8x1024xf32>
    %c0_60 = arith.constant 0 : index
    %c0_61 = arith.constant 0 : index
    %128 = vector.load %arg10[%c0_60, %c0_61] : memref<8x8xf32, #tpu.memory_space<vmem>>, vector<8x8xf32>
    %cst_62 = arith.constant dense<0.000000e+00> : vector<8x1024xf32>
    %129 = tpu.matmul %128, %127, %cst_62 {dimension_numbers = #tpu.dot_dimension_numbers<[1], [0], [0], [1], [0, 0, 1, 1], [], []>} : vector<8x8xf32>, vector<8x1024xf32>, vector<8x1024xf32> -> vector<8x1024xf32>
    %c0_63 = arith.constant 0 : index
    %c0_64 = arith.constant 0 : index
    %130 = vector.load %arg11[%c0_63, %c0_64] : memref<8x1xf32, #tpu.memory_space<vmem>>, vector<8x1xf32>
    %131 = vector.broadcast %130 : vector<8x1xf32> to vector<8x1024xf32>
    %132 = arith.addf %129, %131 : vector<8x1024xf32>
    %133 = arith.addf %132, %0 : vector<8x1024xf32>
    %c0_65 = arith.constant 0 : index
    %c0_66 = arith.constant 0 : index
    %134 = vector.load %arg14[%c0_65, %c0_66] : memref<8x1024xf32, #tpu.memory_space<vmem>>, vector<8x1024xf32>
    tpu.vector_store %arg14[%c0_65, %c0_66], %133 {strides = array<i32>} : memref<8x1024xf32, #tpu.memory_space<vmem>>, vector<8x1024xf32>,
    return
  }
  func.func @transform_0(%arg0: i32) -> (i32, i32) {
    %c0_i32 = arith.constant 0 : i32
    %c0_i32_0 = arith.constant 0 : i32
    return %c0_i32, %arg0 : i32, i32
  }
  func.func @transform_1(%arg0: i32) -> (i32, i32) {
    %c0_i32 = arith.constant 0 : i32
    %c0_i32_0 = arith.constant 0 : i32
    %c0_i32_1 = arith.constant 0 : i32
    return %c0_i32, %c0_i32_0 : i32, i32
  }
  func.func @transform_2(%arg0: i32) -> (i32, i32) {
    %c0_i32 = arith.constant 0 : i32
    %c0_i32_0 = arith.constant 0 : i32
    %c0_i32_1 = arith.constant 0 : i32
    return %c0_i32, %c0_i32_0 : i32, i32
  }
  func.func @transform_3(%arg0: i32) -> (i32, i32) {
    %c0_i32 = arith.constant 0 : i32
    %c0_i32_0 = arith.constant 0 : i32
    %c0_i32_1 = arith.constant 0 : i32
    return %c0_i32, %c0_i32_0 : i32, i32
  }
  func.func @transform_4(%arg0: i32) -> (i32, i32) {
    %c0_i32 = arith.constant 0 : i32
    %c0_i32_0 = arith.constant 0 : i32
    %c0_i32_1 = arith.constant 0 : i32
    return %c0_i32, %c0_i32_0 : i32, i32
  }
  func.func @transform_5(%arg0: i32) -> (i32, i32) {
    %c0_i32 = arith.constant 0 : i32
    %c0_i32_0 = arith.constant 0 : i32
    %c0_i32_1 = arith.constant 0 : i32
    return %c0_i32, %c0_i32_0 : i32, i32
  }
  func.func @transform_6(%arg0: i32) -> (i32, i32) {
    %c0_i32 = arith.constant 0 : i32
    %c0_i32_0 = arith.constant 0 : i32
    %c0_i32_1 = arith.constant 0 : i32
    return %c0_i32, %c0_i32_0 : i32, i32
  }
  func.func @transform_7(%arg0: i32) -> (i32, i32) {
    %c0_i32 = arith.constant 0 : i32
    %c0_i32_0 = arith.constant 0 : i32
    %c0_i32_1 = arith.constant 0 : i32
    return %c0_i32, %c0_i32_0 : i32, i32
  }
  func.func @transform_8(%arg0: i32) -> (i32, i32) {
    %c0_i32 = arith.constant 0 : i32
    %c0_i32_0 = arith.constant 0 : i32
    %c0_i32_1 = arith.constant 0 : i32
    return %c0_i32, %c0_i32_0 : i32, i32
  }
  func.func @transform_9(%arg0: i32) -> (i32, i32) {
    %c0_i32 = arith.constant 0 : i32
    %c0_i32_0 = arith.constant 0 : i32
    %c0_i32_1 = arith.constant 0 : i32
    return %c0_i32, %c0_i32_0 : i32, i32
  }
  func.func @transform_10(%arg0: i32) -> (i32, i32) {
    %c0_i32 = arith.constant 0 : i32
    %c0_i32_0 = arith.constant 0 : i32
    %c0_i32_1 = arith.constant 0 : i32
    return %c0_i32, %c0_i32_0 : i32, i32
  }
  func.func @transform_11(%arg0: i32) -> (i32, i32) {
    %c0_i32 = arith.constant 0 : i32
    %c0_i32_0 = arith.constant 0 : i32
    %c0_i32_1 = arith.constant 0 : i32
    return %c0_i32, %c0_i32_0 : i32, i32
  }
  func.func @transform_12(%arg0: i32) -> (i32, i32) {
    %c0_i32 = arith.constant 0 : i32
    %c0_i32_0 = arith.constant 0 : i32
    %c0_i32_1 = arith.constant 0 : i32
    return %c0_i32, %c0_i32_0 : i32, i32
  }
  func.func @transform_13(%arg0: i32) -> (i32, i32) {
    %c0_i32 = arith.constant 0 : i32
    %c0_i32_0 = arith.constant 0 : i32
    return %c0_i32, %arg0 : i32, i32
  }
}

</mosaic_0001>

<llo_original>
// kernel: tpu_custom_call.1
$region0: #{tpu_custom_call.1}
  #allocation0 [shape = 'u32[]', space=smem, size = 0x4, offset = 0x4, fixed_abs, tag = 'smem constant byte address 0x4 - core index']
  #allocation1 [shape = 'u32[144,128]{1,0:T(1,128)}', space=vmem, size = 0x12000, scoped, tag = 'internal scratch']
  %s0 = inlined_call_operand.hbm [shape: f32[8,2048], index: 0, kind: input, shape index: {}]
  %s1 = inlined_call_operand.vmem [shape: f32[8,8], index: 1, kind: input, shape index: {}]
  %s2 = inlined_call_operand.vmem [shape: f32[8,1], index: 2, kind: input, shape index: {}]
  %s3 = inlined_call_operand.vmem [shape: f32[8,72], index: 3, kind: input, shape index: {}]
  %s4 = inlined_call_operand.vmem [shape: f32[8,1], index: 4, kind: input, shape index: {}]
  %s5 = inlined_call_operand.vmem [shape: f32[8,72], index: 5, kind: input, shape index: {}]
  %s6 = inlined_call_operand.vmem [shape: f32[8,1], index: 6, kind: input, shape index: {}]
  %s7 = inlined_call_operand.vmem [shape: f32[8,8], index: 7, kind: input, shape index: {}]
  %s8 = inlined_call_operand.vmem [shape: f32[8,1], index: 8, kind: input, shape index: {}]
  %s9 = inlined_call_operand.vmem [shape: f32[8,8], index: 9, kind: input, shape index: {}]
  %s10 = inlined_call_operand.vmem [shape: f32[8,1], index: 10, kind: input, shape index: {}]
  %s11 = inlined_call_operand.hbm [shape: f32[9,1024], index: 11, kind: input, shape index: {}]
  %s12 = inlined_call_operand.hbm [shape: f32[9,1024], index: 12, kind: input, shape index: {}]
  %s13 = inlined_call_operand.hbm [shape: f32[8,2048], index: 13, kind: output, shape index: {}]
  %s14 = sld [smem:[#allocation0]]
  $region97: #{tpu_custom_call.1} parent=0
    _
  %s16 = ssub.s32 1, %s14
  %s17 = scalar_select 0, %s16, %s14
  $region1: #{tpu_custom_call.1} parent=0
    #allocation2 [shape = 'u8[65536]{0}', space=vmem, size = 0x10000, scoped, tag = 'input window, operand 0']
    #allocation3 [shape = 's32[2]{0}', space=sflag, size = 0x8, scoped, tag = 'scoped memory for tpu_custom_call.1']
    #allocation4 [shape = 's32[2]{0}', space=sflag, size = 0x8, scoped, tag = 'scoped memory for tpu_custom_call.1']
    #allocation5 [shape = 'u8[65536]{0}', space=vmem, size = 0x10000, scoped, tag = 'input window, operand 11, single buffered']
    #allocation6 [shape = 's32[1]{0}', space=sflag, size = 0x4, scoped, tag = 'scoped memory for tpu_custom_call.1']
    #allocation7 [shape = 'u8[65536]{0}', space=vmem, size = 0x10000, scoped, tag = 'input window, operand 12, single buffered']
    #allocation8 [shape = 'u8[65536]{0}', space=vmem, size = 0x10000, scoped, tag = 'output window, operand 0']
    %18 = vsyncpa [#allocation3], 0
    %s19 = scalar_lea.sflag [#allocation3], 1
    %20 = vsyncpa %s19, 0
    %21 = vsyncpa [#allocation6], 0
    %22 = vsyncpa [#allocation4], 0
    %s23 = scalar_lea.sflag [#allocation4], 1
    %24 = vsyncpa %s23, 0
    loop: start=0, step=1, limit=4
    $region2: #{tpu_custom_call.1} parent=1 // loop_pre_header
      _
    $region3: #{tpu_custom_call.1} parent=1 // loop_header
      %s26 = sphi 0, %s30
      %p27 = scmp.ge.s32.totalorder %s26, 4
      %s36 = sphi 0, %s38
      %s39 = sphi 0, %s36
      %s40 = sphi 0, %s39
      %s56 = sphi 0, %s40
      %s60 = sphi 0, %s60
      %s62 = sphi 0, %s60
      %s63 = sphi 0, %s62
      %s77 = sphi 0, %s63
      %s81 = sphi 0, %s81
      %s83 = sphi 0, %s81
      %s84 = sphi 0, %s83
      %s98 = sphi 0, %s84
      %s102 = sphi 0, %s102
      %s104 = sphi 0, %s102
      %s105 = sphi 0, %s104
      %s119 = sphi 0, %s105
      %s123 = sphi 0, %s123
      %s125 = sphi 0, %s123
      %s126 = sphi 0, %s125
      %s140 = sphi 0, %s126
      %s144 = sphi 0, %s144
      %s146 = sphi 0, %s144
      %s147 = sphi 0, %s146
      %s161 = sphi 0, %s147
      %s165 = sphi 0, %s165
      %s167 = sphi 0, %s165
      %s168 = sphi 0, %s167
      %s182 = sphi 0, %s168
      %s186 = sphi 0, %s186
      %s188 = sphi 0, %s186
      %s189 = sphi 0, %s188
      %s203 = sphi 0, %s189
      %s207 = sphi 0, %s207
      %s209 = sphi 0, %s207
      %s210 = sphi 0, %s209
      %s224 = sphi 0, %s210
      %s228 = sphi 0, %s228
      %s230 = sphi 0, %s228
      %s231 = sphi 0, %s230
      %s245 = sphi 0, %s231
      %s249 = sphi 0, %s249
      %s251 = sphi 0, %s249
      %s252 = sphi 0, %s251
      %s266 = sphi 0, %s252
      %s270 = sphi 0, %s270
      %s272 = sphi 0, %s270
      %s273 = sphi 0, %s272
      %s287 = sphi 0, %s273
      %s291 = sphi 0, %s291
      %s293 = sphi 0, %s291
      %s294 = sphi 0, %s293
      %s308 = sphi 0, %s294
      %s314 = sphi 0, %s316
      %s317 = sphi 0, %s314
      %s318 = sphi 0, %s317
      %s334 = sphi 0, %s318
    $region4: #{tpu_custom_call.1} parent=1 // loop_header_branch
      %29 = sbr.rel (%p27) target = $region8
    $region5: #{tpu_custom_call.1} parent=1 // loop_body
      %s31 = ssub.s32 %s26, 1
      %s32 = ssub.s32 %s26, 2
      %s33 = sadd.s32 %s26, 1
      %s34 = ssub.s32 %s26, %s33
      %p35 = scmp.eq.s32.totalorder %s34, 0
      %s37 = sadd.s32 %s36, 1
      %s38 = scalar_select %p35, %s36, %s37
      %p41 = pneg %p35
      %p42 = scmp.eq.s32.totalorder %s26, 1
      %p43 = por %p41, %p42
      %p44 = scmp.ne.s32.totalorder %s36, %s39
      %p45 = scmp.eq.s32.totalorder %s26, 0
      %p46 = por %p44, %p45
      %p47 = scmp.ne.s32.totalorder %s36, %s39
      %p48 = scmp.eq.s32.totalorder %s31, 1
      %p49 = por %p47, %p48
      %p50 = scmp.ne.s32.totalorder %s39, %s40
      %p51 = scmp.eq.s32.totalorder %s31, 0
      %p52 = por %p50, %p51
      %p53 = scmp.ne.s32.totalorder %s39, %s40
      %p54 = scmp.eq.s32.totalorder %s32, 1
      %p55 = por %p53, %p54
      %p57 = scmp.ne.s32.totalorder %s40, %s56
      %p58 = scmp.eq.s32.totalorder %s32, 0
      %p59 = por %p57, %p58
      %s61 = sadd.s32 %s60, 1
      %p64 = scmp.eq.s32.totalorder %s26, 1
      %p65 = scmp.ne.s32.totalorder %s60, %s62
      %p66 = scmp.eq.s32.totalorder %s26, 0
      %p67 = por %p65, %p66
      %p68 = scmp.ne.s32.totalorder %s60, %s62
      %p69 = scmp.eq.s32.totalorder %s31, 1
      %p70 = por %p68, %p69
      %p71 = scmp.ne.s32.totalorder %s62, %s63
      %p72 = scmp.eq.s32.totalorder %s31, 0
      %p73 = por %p71, %p72
      %p74 = scmp.ne.s32.totalorder %s62, %s63
      %p75 = scmp.eq.s32.totalorder %s32, 1
      %p76 = por %p74, %p75
      %p78 = scmp.ne.s32.totalorder %s63, %s77
      %p79 = scmp.eq.s32.totalorder %s32, 0
      %p80 = por %p78, %p79
      %s82 = sadd.s32 %s81, 1
      %p85 = scmp.eq.s32.totalorder %s26, 1
      %p86 = scmp.ne.s32.totalorder %s81, %s83
      %p87 = scmp.eq.s32.totalorder %s26, 0
      %p88 = por %p86, %p87
      %p89 = scmp.ne.s32.totalorder %s81, %s83
      %p90 = scmp.eq.s32.totalorder %s31, 1
      %p91 = por %p89, %p90
      %p92 = scmp.ne.s32.totalorder %s83, %s84
      %p93 = scmp.eq.s32.totalorder %s31, 0
      %p94 = por %p92, %p93
      %p95 = scmp.ne.s32.totalorder %s83, %s84
      %p96 = scmp.eq.s32.totalorder %s32, 1
      %p97 = por %p95, %p96
      %p99 = scmp.ne.s32.totalorder %s84, %s98
      %p100 = scmp.eq.s32.totalorder %s32, 0
      %p101 = por %p99, %p100
      %s103 = sadd.s32 %s102, 1
      %p106 = scmp.eq.s32.totalorder %s26, 1
      %p107 = scmp.ne.s32.totalorder %s102, %s104
      %p108 = scmp.eq.s32.totalorder %s26, 0
      %p109 = por %p107, %p108
      %p110 = scmp.ne.s32.totalorder %s102, %s104
      %p111 = scmp.eq.s32.totalorder %s31, 1
      %p112 = por %p110, %p111
      %p113 = scmp.ne.s32.totalorder %s104, %s105
      %p114 = scmp.eq.s32.totalorder %s31, 0
      %p115 = por %p113, %p114
      %p116 = scmp.ne.s32.totalorder %s104, %s105
      %p117 = scmp.eq.s32.totalorder %s32, 1
      %p118 = por %p116, %p117
      %p120 = scmp.ne.s32.totalorder %s105, %s119
      %p121 = scmp.eq.s32.totalorder %s32, 0
      %p122 = por %p120, %p121
      %s124 = sadd.s32 %s123, 1
      %p127 = scmp.eq.s32.totalorder %s26, 1
      %p128 = scmp.ne.s32.totalorder %s123, %s125
      %p129 = scmp.eq.s32.totalorder %s26, 0
      %p130 = por %p128, %p129
      %p131 = scmp.ne.s32.totalorder %s123, %s125
      %p132 = scmp.eq.s32.totalorder %s31, 1
      %p133 = por %p131, %p132
      %p134 = scmp.ne.s32.totalorder %s125, %s126
      %p135 = scmp.eq.s32.totalorder %s31, 0
      %p136 = por %p134, %p135
      %p137 = scmp.ne.s32.totalorder %s125, %s126
      %p138 = scmp.eq.s32.totalorder %s32, 1
      %p139 = por %p137, %p138
      %p141 = scmp.ne.s32.totalorder %s126, %s140
      %p142 = scmp.eq.s32.totalorder %s32, 0
      %p143 = por %p141, %p142
      %s145 = sadd.s32 %s144, 1
      %p148 = scmp.eq.s32.totalorder %s26, 1
      %p149 = scmp.ne.s32.totalorder %s144, %s146
      %p150 = scmp.eq.s32.totalorder %s26, 0
      %p151 = por %p149, %p150
      %p152 = scmp.ne.s32.totalorder %s144, %s146
      %p153 = scmp.eq.s32.totalorder %s31, 1
      %p154 = por %p152, %p153
      %p155 = scmp.ne.s32.totalorder %s146, %s147
      %p156 = scmp.eq.s32.totalorder %s31, 0
      %p157 = por %p155, %p156
      %p158 = scmp.ne.s32.totalorder %s146, %s147
      %p159 = scmp.eq.s32.totalorder %s32, 1
      %p160 = por %p158, %p159
      %p162 = scmp.ne.s32.totalorder %s147, %s161
      %p163 = scmp.eq.s32.totalorder %s32, 0
      %p164 = por %p162, %p163
      %s166 = sadd.s32 %s165, 1
      %p169 = scmp.eq.s32.totalorder %s26, 1
      %p170 = scmp.ne.s32.totalorder %s165, %s167
      %p171 = scmp.eq.s32.totalorder %s26, 0
      %p172 = por %p170, %p171
      %p173 = scmp.ne.s32.totalorder %s165, %s167
      %p174 = scmp.eq.s32.totalorder %s31, 1
      %p175 = por %p173, %p174
      %p176 = scmp.ne.s32.totalorder %s167, %s168
      %p177 = scmp.eq.s32.totalorder %s31, 0
      %p178 = por %p176, %p177
      %p179 = scmp.ne.s32.totalorder %s167, %s168
      %p180 = scmp.eq.s32.totalorder %s32, 1
      %p181 = por %p179, %p180
      %p183 = scmp.ne.s32.totalorder %s168, %s182
      %p184 = scmp.eq.s32.totalorder %s32, 0
      %p185 = por %p183, %p184
      %s187 = sadd.s32 %s186, 1
      %p190 = scmp.eq.s32.totalorder %s26, 1
      %p191 = scmp.ne.s32.totalorder %s186, %s188
      %p192 = scmp.eq.s32.totalorder %s26, 0
      %p193 = por %p191, %p192
      %p194 = scmp.ne.s32.totalorder %s186, %s188
      %p195 = scmp.eq.s32.totalorder %s31, 1
      %p196 = por %p194, %p195
      %p197 = scmp.ne.s32.totalorder %s188, %s189
      %p198 = scmp.eq.s32.totalorder %s31, 0
      %p199 = por %p197, %p198
      %p200 = scmp.ne.s32.totalorder %s188, %s189
      %p201 = scmp.eq.s32.totalorder %s32, 1
      %p202 = por %p200, %p201
      %p204 = scmp.ne.s32.totalorder %s189, %s203
      %p205 = scmp.eq.s32.totalorder %s32, 0
      %p206 = por %p204, %p205
      %s208 = sadd.s32 %s207, 1
      %p211 = scmp.eq.s32.totalorder %s26, 1
      %p212 = scmp.ne.s32.totalorder %s207, %s209
      %p213 = scmp.eq.s32.totalorder %s26, 0
      %p214 = por %p212, %p213
      %p215 = scmp.ne.s32.totalorder %s207, %s209
      %p216 = scmp.eq.s32.totalorder %s31, 1
      %p217 = por %p215, %p216
      %p218 = scmp.ne.s32.totalorder %s209, %s210
      %p219 = scmp.eq.s32.totalorder %s31, 0
      %p220 = por %p218, %p219
      %p221 = scmp.ne.s32.totalorder %s209, %s210
      %p222 = scmp.eq.s32.totalorder %s32, 1
      %p223 = por %p221, %p222
      %p225 = scmp.ne.s32.totalorder %s210, %s224
      %p226 = scmp.eq.s32.totalorder %s32, 0
      %p227 = por %p225, %p226
      %s229 = sadd.s32 %s228, 1
      %p232 = scmp.eq.s32.totalorder %s26, 1
      %p233 = scmp.ne.s32.totalorder %s228, %s230
      %p234 = scmp.eq.s32.totalorder %s26, 0
      %p235 = por %p233, %p234
      %p236 = scmp.ne.s32.totalorder %s228, %s230
      %p237 = scmp.eq.s32.totalorder %s31, 1
      %p238 = por %p236, %p237
      %p239 = scmp.ne.s32.totalorder %s230, %s231
      %p240 = scmp.eq.s32.totalorder %s31, 0
      %p241 = por %p239, %p240
      %p242 = scmp.ne.s32.totalorder %s230, %s231
      %p243 = scmp.eq.s32.totalorder %s32, 1
      %p244 = por %p242, %p243
      %p246 = scmp.ne.s32.totalorder %s231, %s245
      %p247 = scmp.eq.s32.totalorder %s32, 0
      %p248 = por %p246, %p247
      %s250 = sadd.s32 %s249, 1
      %p253 = scmp.eq.s32.totalorder %s26, 1
      %p254 = scmp.ne.s32.totalorder %s249, %s251
      %p255 = scmp.eq.s32.totalorder %s26, 0
      %p256 = por %p254, %p255
      %p257 = scmp.ne.s32.totalorder %s249, %s251
      %p258 = scmp.eq.s32.totalorder %s31, 1
      %p259 = por %p257, %p258
      %p260 = scmp.ne.s32.totalorder %s251, %s252
      %p261 = scmp.eq.s32.totalorder %s31, 0
      %p262 = por %p260, %p261
      %p263 = scmp.ne.s32.totalorder %s251, %s252
      %p264 = scmp.eq.s32.totalorder %s32, 1
      %p265 = por %p263, %p264
      %p267 = scmp.ne.s32.totalorder %s252, %s266
      %p268 = scmp.eq.s32.totalorder %s32, 0
      %p269 = por %p267, %p268
      %s271 = sadd.s32 %s270, 1
      %p274 = scmp.eq.s32.totalorder %s26, 1
      %p275 = scmp.ne.s32.totalorder %s270, %s272
      %p276 = scmp.eq.s32.totalorder %s26, 0
      %p277 = por %p275, %p276
      %p278 = scmp.ne.s32.totalorder %s270, %s272
      %p279 = scmp.eq.s32.totalorder %s31, 1
      %p280 = por %p278, %p279
      %p281 = scmp.ne.s32.totalorder %s272, %s273
      %p282 = scmp.eq.s32.totalorder %s31, 0
      %p283 = por %p281, %p282
      %p284 = scmp.ne.s32.totalorder %s272, %s273
      %p285 = scmp.eq.s32.totalorder %s32, 1
      %p286 = por %p284, %p285
      %p288 = scmp.ne.s32.totalorder %s273, %s287
      %p289 = scmp.eq.s32.totalorder %s32, 0
      %p290 = por %p288, %p289
      %s292 = sadd.s32 %s291, 1
      %p295 = scmp.eq.s32.totalorder %s26, 1
      %p296 = scmp.ne.s32.totalorder %s291, %s293
      %p297 = scmp.eq.s32.totalorder %s26, 0
      %p298 = por %p296, %p297
      %p299 = scmp.ne.s32.totalorder %s291, %s293
      %p300 = scmp.eq.s32.totalorder %s31, 1
      %p301 = por %p299, %p300
      %p302 = scmp.ne.s32.totalorder %s293, %s294
      %p303 = scmp.eq.s32.totalorder %s31, 0
      %p304 = por %p302, %p303
      %p305 = scmp.ne.s32.totalorder %s293, %s294
      %p306 = scmp.eq.s32.totalorder %s32, 1
      %p307 = por %p305, %p306
      %p309 = scmp.ne.s32.totalorder %s294, %s308
      %p310 = scmp.eq.s32.totalorder %s32, 0
      %p311 = por %p309, %p310
      %s312 = ssub.s32 %s26, %s33
      %p313 = scmp.eq.s32.totalorder %s312, 0
      %s315 = sadd.s32 %s314, 1
      %s316 = scalar_select %p313, %s314, %s315
      %p319 = pneg %p313
      %p320 = scmp.eq.s32.totalorder %s26, 1
      %p321 = por %p319, %p320
      %p322 = scmp.ne.s32.totalorder %s314, %s317
      %p323 = scmp.eq.s32.totalorder %s26, 0
      %p324 = por %p322, %p323
      %p325 = scmp.ne.s32.totalorder %s314, %s317
      %p326 = scmp.eq.s32.totalorder %s31, 1
      %p327 = por %p325, %p326
      %p328 = scmp.ne.s32.totalorder %s317, %s318
      %p329 = scmp.eq.s32.totalorder %s31, 0
      %p330 = por %p328, %p329
      %p331 = scmp.ne.s32.totalorder %s317, %s318
      %p332 = scmp.eq.s32.totalorder %s32, 1
      %p333 = por %p331, %p332
      %p335 = scmp.ne.s32.totalorder %s318, %s334
      %p336 = scmp.eq.s32.totalorder %s32, 0
      %p337 = por %p335, %p336
      %p338 = scmp.le.s32.totalorder 1, %s26
      %p339 = scmp.lt.s32.totalorder %s26, 3
      %p340 = pnand %p338, %p339
      %p341 = pneg %p340
      // Predicated region
      $region9: #{tpu_custom_call.1} parent=5 // pred_check
        _
      $region10: #{tpu_custom_call.1} parent=5 // pred_check_branch
        %343 = sbr.rel (%p340) target = $region12
      $region11: #{tpu_custom_call.1} parent=5 // pred_region
        %s344 = ssub.s32 %s26, 1
        // Predicated region
        $region13: #{tpu_custom_call.1} parent=11 // pred_check
          %p345 = pneg %p73
        $region14: #{tpu_custom_call.1} parent=11 // pred_check_branch
          %347 = sbr.rel (%p345) target = $region16
        $region15: #{tpu_custom_call.1} parent=11 // pred_region
          _
        $region16: #{tpu_custom_call.1} parent=11 // pred_fallthru
          _
        // Predicated region
        $region17: #{tpu_custom_call.1} parent=11 // pred_check
          %p348 = pneg %p94
        $region18: #{tpu_custom_call.1} parent=11 // pred_check_branch
          %350 = sbr.rel (%p348) target = $region20
        $region19: #{tpu_custom_call.1} parent=11 // pred_region
          _
        $region20: #{tpu_custom_call.1} parent=11 // pred_fallthru
          _
        // Predicated region
        $region21: #{tpu_custom_call.1} parent=11 // pred_check
          %p351 = pneg %p115
        $region22: #{tpu_custom_call.1} parent=11 // pred_check_branch
          %353 = sbr.rel (%p351) target = $region24
        $region23: #{tpu_custom_call.1} parent=11 // pred_region
          _
        $region24: #{tpu_custom_call.1} parent=11 // pred_fallthru
          _
        // Predicated region
        $region25: #{tpu_custom_call.1} parent=11 // pred_check
          %p354 = pneg %p136
        $region26: #{tpu_custom_call.1} parent=11 // pred_check_branch
          %356 = sbr.rel (%p354) target = $region28
        $region27: #{tpu_custom_call.1} parent=11 // pred_region
          _
        $region28: #{tpu_custom_call.1} parent=11 // pred_fallthru
          _
        // Predicated region
        $region29: #{tpu_custom_call.1} parent=11 // pred_check
          %p357 = pneg %p157
        $region30: #{tpu_custom_call.1} parent=11 // pred_check_branch
          %359 = sbr.rel (%p357) target = $region32
        $region31: #{tpu_custom_call.1} parent=11 // pred_region
          _
        $region32: #{tpu_custom_call.1} parent=11 // pred_fallthru
          _
        // Predicated region
        $region33: #{tpu_custom_call.1} parent=11 // pred_check
          %p360 = pneg %p178
        $region34: #{tpu_custom_call.1} parent=11 // pred_check_branch
          %362 = sbr.rel (%p360) target = $region36
        $region35: #{tpu_custom_call.1} parent=11 // pred_region
          _
        $region36: #{tpu_custom_call.1} parent=11 // pred_fallthru
          _
        // Predicated region
        $region37: #{tpu_custom_call.1} parent=11 // pred_check
          %p363 = pneg %p199
        $region38: #{tpu_custom_call.1} parent=11 // pred_check_branch
          %365 = sbr.rel (%p363) target = $region40
        $region39: #{tpu_custom_call.1} parent=11 // pred_region
          _
        $region40: #{tpu_custom_call.1} parent=11 // pred_fallthru
          _
        // Predicated region
        $region41: #{tpu_custom_call.1} parent=11 // pred_check
          %p366 = pneg %p220
        $region42: #{tpu_custom_call.1} parent=11 // pred_check_branch
          %368 = sbr.rel (%p366) target = $region44
        $region43: #{tpu_custom_call.1} parent=11 // pred_region
          _
        $region44: #{tpu_custom_call.1} parent=11 // pred_fallthru
          _
        // Predicated region
        $region45: #{tpu_custom_call.1} parent=11 // pred_check
          %p369 = pneg %p241
        $region46: #{tpu_custom_call.1} parent=11 // pred_check_branch
          %371 = sbr.rel (%p369) target = $region48
        $region47: #{tpu_custom_call.1} parent=11 // pred_region
          _
        $region48: #{tpu_custom_call.1} parent=11 // pred_fallthru
          _
        // Predicated region
        $region49: #{tpu_custom_call.1} parent=11 // pred_check
          %p372 = pneg %p262
        $region50: #{tpu_custom_call.1} parent=11 // pred_check_branch
          %374 = sbr.rel (%p372) target = $region52
        $region51: #{tpu_custom_call.1} parent=11 // pred_region
          _
        $region52: #{tpu_custom_call.1} parent=11 // pred_fallthru
          _
        // Predicated region
        $region53: #{tpu_custom_call.1} parent=11 // pred_check
          %p375 = pneg %p283
        $region54: #{tpu_custom_call.1} parent=11 // pred_check_branch
          %377 = sbr.rel (%p375) target = $region56
        $region55: #{tpu_custom_call.1} parent=11 // pred_region
          %s379 = ssub.s32 2048, 2048
          %380 = vsyncadd [#allocation6], %s379
          %s381 = sshll.u32 [#allocation5], 4
          %s382 = int_to_ptr.vmem [resolvable:$true] %s381
          %387 = dma.hbm_to_vmem [thread:$0]  %s11, 2048, %s382, [#allocation6], 1024, 1024, 64
        $region56: #{tpu_custom_call.1} parent=11 // pred_fallthru
          _
        // Predicated region
        $region57: #{tpu_custom_call.1} parent=11 // pred_check
          %p388 = pneg %p304
        $region58: #{tpu_custom_call.1} parent=11 // pred_check_branch
          %390 = sbr.rel (%p388) target = $region60
        $region59: #{tpu_custom_call.1} parent=11 // pred_region
          %s392 = ssub.s32 2048, 2048
          %393 = vsyncadd [#allocation6], %s392
          %s394 = sshll.u32 [#allocation7], 4
          %s395 = int_to_ptr.vmem [resolvable:$true] %s394
          %400 = dma.hbm_to_vmem [thread:$0]  %s12, 2048, %s395, [#allocation6], 1024, 1024, 64
        $region60: #{tpu_custom_call.1} parent=11 // pred_fallthru
          _
      $region12: #{tpu_custom_call.1} parent=5 // pred_fallthru
        _
      %p401 = scmp.lt.s32.totalorder %s26, 2
      // Predicated region
      $region61: #{tpu_custom_call.1} parent=5 // pred_check
        %p402 = pneg %p401
      $region62: #{tpu_custom_call.1} parent=5 // pred_check_branch
        %404 = sbr.rel (%p402) target = $region64
      $region63: #{tpu_custom_call.1} parent=5 // pred_region
        // Predicated region
        $region65: #{tpu_custom_call.1} parent=63 // pred_check
          %p405 = pneg %p46
        $region66: #{tpu_custom_call.1} parent=63 // pred_check_branch
          %407 = sbr.rel (%p405) target = $region68
        $region67: #{tpu_custom_call.1} parent=63 // pred_region
          %s408 = sand.u32 %s36, 1
          %s409 = scalar_lea.sflag [#allocation3], %s408
          %s410 = sand.u32 %s36, 1
          %s411 = smul.addr %s410, 64
          %s412 = scalar_lea.vmem [#allocation2], %s411
          %s413 = smul.u32 8, %s26
          %s415 = ssub.s32 1024, 1024
          %416 = vsyncadd %s409, %s415
          %s417 = smul.addr %s413, 128
          %s418 = scalar_lea.hbm %s0, %s417
          %s420 = sshll.u32 %s412, 4
          %s421 = int_to_ptr.vmem [resolvable:$true] %s420
          %423 = dma.hbm_to_vmem [thread:$0]  %s418, 1024, %s421, %s409
        $region68: #{tpu_custom_call.1} parent=63 // pred_fallthru
          _
      $region64: #{tpu_custom_call.1} parent=5 // pred_fallthru
        _
      %p424 = scmp.le.s32.totalorder 1, %s26
      %p425 = scmp.lt.s32.totalorder %s26, 3
      %p426 = pnand %p424, %p425
      %p427 = pneg %p426
      // Predicated region
      $region69: #{tpu_custom_call.1} parent=5 // pred_check
        _
      $region70: #{tpu_custom_call.1} parent=5 // pred_check_branch
        %429 = sbr.rel (%p426) target = $region72
      $region71: #{tpu_custom_call.1} parent=5 // pred_region
        %s430 = ssub.s32 %s26, 1
        %s431 = sand.u32 %s39, 1
        %s432 = scalar_lea.sflag [#allocation3], %s431
        %s433 = sand.u32 %s39, 1
        %s434 = smul.addr %s433, 64
        %s435 = scalar_lea.vmem [#allocation2], %s434
        // Predicated region
        $region73: #{tpu_custom_call.1} parent=71 // pred_check
          %p436 = pneg %p52
        $region74: #{tpu_custom_call.1} parent=71 // pred_check_branch
          %438 = sbr.rel (%p436) target = $region76
        $region75: #{tpu_custom_call.1} parent=71 // pred_region
          %439 = dma.done %s432, 1024
        $region76: #{tpu_custom_call.1} parent=71 // pred_fallthru
          _
        // Predicated region
        $region77: #{tpu_custom_call.1} parent=71 // pred_check
          %p440 = pneg %p283
        $region78: #{tpu_custom_call.1} parent=71 // pred_check_branch
          %442 = sbr.rel (%p440) target = $region80
        $region79: #{tpu_custom_call.1} parent=71 // pred_region
          %443 = dma.done [#allocation6], 2048
        $region80: #{tpu_custom_call.1} parent=71 // pred_fallthru
          _
        // Predicated region
        $region81: #{tpu_custom_call.1} parent=71 // pred_check
          %p444 = pneg %p304
        $region82: #{tpu_custom_call.1} parent=71 // pred_check_branch
          %446 = sbr.rel (%p444) target = $region84
        $region83: #{tpu_custom_call.1} parent=71 // pred_region
          %447 = dma.done [#allocation6], 2048
        $region84: #{tpu_custom_call.1} parent=71 // pred_fallthru
          _
        %s448 = sand.u32 %s39, 1
        %s449 = scalar_lea.sflag [#allocation3], %s448
        %s450 = sand.u32 %s39, 1
        %s451 = smul.addr %s450, 64
        %s452 = scalar_lea.vmem [#allocation2], %s451
        %p453 = pneg %p52
        %p454 = pneg %p49
        %p455 = pneg %p73
        %p456 = pneg %p70
        %p457 = pneg %p94
        %p458 = pneg %p91
        %p459 = pneg %p115
        %p460 = pneg %p112
        %p461 = pneg %p136
        %p462 = pneg %p133
        %p463 = pneg %p157
        %p464 = pneg %p154
        %p465 = pneg %p178
        %p466 = pneg %p175
        %p467 = pneg %p199
        %p468 = pneg %p196
        %p469 = pneg %p220
        %p470 = pneg %p217
        %p471 = pneg %p241
        %p472 = pneg %p238
        %p473 = pneg %p262
        %p474 = pneg %p259
        %p475 = pneg %p283
        %p476 = pneg %p280
        %p477 = pneg %p304
        %p478 = pneg %p301
        %p479 = pneg %p330
        %p480 = pneg %p327
        %s481 = sand.u32 %s317, 1
        %s482 = scalar_lea.sflag [#allocation4], %s481
        %s483 = sand.u32 %s317, 1
        %s484 = smul.addr %s483, 64
        %s485 = scalar_lea.vmem [#allocation8], %s484
        %s486 = smul.u32 8, %s31
        %s487 = smul.u32 8, %s31
        %v488 = vld [vmem:[%s435] sm:$0xff]
        %v489 = vld [vmem:[%s435 + $0x8] sm:$0xff]
        %v490 = vld [vmem:[%s435 + $0x10] sm:$0xff]
        %v491 = vld [vmem:[%s435 + $0x18] sm:$0xff]
        %v492 = vld [vmem:[%s435 + $0x20] sm:$0xff]
        %v493 = vld [vmem:[%s435 + $0x28] sm:$0xff]
        %v494 = vld [vmem:[%s435 + $0x30] sm:$0xff]
        %v495 = vld [vmem:[%s435 + $0x38] sm:$0xff]
        %v496 = vld [vmem:[%s1] sm:$0xff]
        %v497 = vld [vmem:[%s2] sm:$0xff]
        %499 = vset.pattern.permute.xlu0 0
        %500 = vperm.xlu0 %499, %v497
        %v501 = vpop.permute.xlu0 %500
        %vm503 = vcmask 64512
        %v505 = vsel %vm503, %v496, 0
        %507 = vmatprep.subr.mxu0 0.0
        %508 = vmatpush1.msra.mxu0 0.0
        %509 = vmatprep.subr.mxu0 0.0
        %510 = vmatpush1.msra.mxu0 0.0
        %511 = vmatprep.subr.mxu0 0.0
        %512 = vmatpush1.msra.mxu0 0.0
        %513 = vmatprep.subr.mxu0 0.0
        %514 = vmatpush1.msra.mxu0 0.0
        %515 = vmatprep.subr.mxu0 0.0
        %516 = vmatpush1.msra.mxu0 0.0
        %517 = vmatprep.subr.mxu0 0.0
        %518 = vmatpush1.msra.mxu0 0.0
        %519 = vmatprep.subr.mxu0 0.0
        %520 = vmatpush1.msra.mxu0 0.0
        %521 = vmatprep.subr.mxu0 0.0
        %522 = vmatpush1.msra.mxu0 0.0
        %523 = vmatprep.subr.mxu0 0.0
        %524 = vmatpush1.msra.mxu0 0.0
        %525 = vmatprep.subr.mxu0 0.0
        %526 = vmatpush1.msra.mxu0 0.0
        %527 = vmatprep.subr.mxu0 0.0
        %528 = vmatpush1.msra.mxu0 0.0
        %529 = vmatprep.subr.mxu0 0.0
        %530 = vmatpush1.msra.mxu0 0.0
        %531 = vmatprep.subr.mxu0 0.0
        %532 = vmatpush1.msra.mxu0 0.0
        %533 = vmatprep.subr.mxu0 0.0
        %534 = vmatpush1.msra.mxu0 0.0
        %535 = vmatprep.subr.mxu0 0.0
        %536 = vmatpush1.msra.mxu0 0.0
        %537 = vmatprep.subr.mxu0 %v489
        %538 = vmatpush1.msra.mxu0 %v488
        %539 = vmatprep.subr.mxu0 0.0
        %540 = vmatpush2.msra.mxu0 0.0
        %541 = vmatprep.subr.mxu0 0.0
        %542 = vmatpush2.msra.mxu0 0.0
        %543 = vmatprep.subr.mxu0 0.0
        %544 = vmatpush2.msra.mxu0 0.0
        %545 = vmatprep.subr.mxu0 0.0
        %546 = vmatpush2.msra.mxu0 0.0
        %547 = vmatprep.subr.mxu0 0.0
        %548 = vmatpush2.msra.mxu0 0.0
        %549 = vmatprep.subr.mxu0 0.0
        %550 = vmatpush2.msra.mxu0 0.0
        %551 = vmatprep.subr.mxu0 0.0
        %552 = vmatpush2.msra.mxu0 0.0
        %553 = vmatprep.subr.mxu0 0.0
        %554 = vmatpush2.msra.mxu0 0.0
        %555 = vmatprep.subr.mxu0 0.0
        %556 = vmatpush2.msra.mxu0 0.0
        %557 = vmatprep.subr.mxu0 0.0
        %558 = vmatpush2.msra.mxu0 0.0
        %559 = vmatprep.subr.mxu0 0.0
        %560 = vmatpush2.msra.mxu0 0.0
        %561 = vmatprep.subr.mxu0 0.0
        %562 = vmatpush2.msra.mxu0 0.0
        %563 = vmatprep.subr.mxu0 0.0
        %564 = vmatpush2.msra.mxu0 0.0
        %565 = vmatprep.subr.mxu0 0.0
        %566 = vmatpush2.msra.mxu0 0.0
        %567 = vmatprep.subr.mxu0 0.0
        %568 = vmatpush2.msra.mxu0 0.0
        %569 = vmatprep.subr.mxu0 0.0
        %570 = vmatpush2.msra.mxu0 0.0
        %571 = vmatprep.mubr.f32.mxu0 0.0
        %572 = vmatmul.mubr.f32.gmra.mxu0 %v505
        %v573 = vpop.f32.mrf.mxu0
        %v574 = vadd.f32 %v501, %v573
        %v575 = vpop.f32.mrf.mxu0
        %v576 = vadd.f32 %v501, %v575
        %577 = vdwg.mxu0
        %578 = vmatprep.subr.mxu0 0.0
        %579 = vmatpush1.msra.mxu0 0.0
        %580 = vmatprep.subr.mxu0 0.0
        %581 = vmatpush1.msra.mxu0 0.0
        %582 = vmatprep.subr.mxu0 0.0
        %583 = vmatpush1.msra.mxu0 0.0
        %584 = vmatprep.subr.mxu0 0.0
        %585 = vmatpush1.msra.mxu0 0.0
        %586 = vmatprep.subr.mxu0 0.0
        %587 = vmatpush1.msra.mxu0 0.0
        %588 = vmatprep.subr.mxu0 0.0
        %589 = vmatpush1.msra.mxu0 0.0
        %590 = vmatprep.subr.mxu0 0.0
        %591 = vmatpush1.msra.mxu0 0.0
        %592 = vmatprep.subr.mxu0 0.0
        %593 = vmatpush1.msra.mxu0 0.0
        %594 = vmatprep.subr.mxu0 0.0
        %595 = vmatpush1.msra.mxu0 0.0
        %596 = vmatprep.subr.mxu0 0.0
        %597 = vmatpush1.msra.mxu0 0.0
        %598 = vmatprep.subr.mxu0 0.0
        %599 = vmatpush1.msra.mxu0 0.0
        %600 = vmatprep.subr.mxu0 0.0
        %601 = vmatpush1.msra.mxu0 0.0
        %602 = vmatprep.subr.mxu0 0.0
        %603 = vmatpush1.msra.mxu0 0.0
        %604 = vmatprep.subr.mxu0 0.0
        %605 = vmatpush1.msra.mxu0 0.0
        %606 = vmatprep.subr.mxu0 0.0
        %607 = vmatpush1.msra.mxu0 0.0
        %608 = vmatprep.subr.mxu0 %v491
        %609 = vmatpush1.msra.mxu0 %v490
        %610 = vmatprep.subr.mxu0 0.0
        %611 = vmatpush2.msra.mxu0 0.0
        %612 = vmatprep.subr.mxu0 0.0
        %613 = vmatpush2.msra.mxu0 0.0
        %614 = vmatprep.subr.mxu0 0.0
        %615 = vmatpush2.msra.mxu0 0.0
        %616 = vmatprep.subr.mxu0 0.0
        %617 = vmatpush2.msra.mxu0 0.0
        %618 = vmatprep.subr.mxu0 0.0
        %619 = vmatpush2.msra.mxu0 0.0
        %620 = vmatprep.subr.mxu0 0.0
        %621 = vmatpush2.msra.mxu0 0.0
        %622 = vmatprep.subr.mxu0 0.0
        %623 = vmatpush2.msra.mxu0 0.0
        %624 = vmatprep.subr.mxu0 0.0
        %625 = vmatpush2.msra.mxu0 0.0
        %626 = vmatprep.subr.mxu0 0.0
        %627 = vmatpush2.msra.mxu0 0.0
        %628 = vmatprep.subr.mxu0 0.0
        %629 = vmatpush2.msra.mxu0 0.0
        %630 = vmatprep.subr.mxu0 0.0
        %631 = vmatpush2.msra.mxu0 0.0
        %632 = vmatprep.subr.mxu0 0.0
        %633 = vmatpush2.msra.mxu0 0.0
        %634 = vmatprep.subr.mxu0 0.0
        %635 = vmatpush2.msra.mxu0 0.0
        %636 = vmatprep.subr.mxu0 0.0
        %637 = vmatpush2.msra.mxu0 0.0
        %638 = vmatprep.subr.mxu0 0.0
        %639 = vmatpush2.msra.mxu0 0.0
        %640 = vmatprep.subr.mxu0 0.0
        %641 = vmatpush2.msra.mxu0 0.0
        %642 = vmatprep.mubr.f32.mxu0 0.0
        %643 = vmatmul.mubr.f32.gmra.mxu0 %v505
        %v644 = vpop.f32.mrf.mxu0
        %v645 = vadd.f32 %v501, %v644
        %v646 = vpop.f32.mrf.mxu0
        %v647 = vadd.f32 %v501, %v646
        %648 = vdwg.mxu0
        %649 = vmatprep.subr.mxu0 0.0
        %650 = vmatpush1.msra.mxu0 0.0
        %651 = vmatprep.subr.mxu0 0.0
        %652 = vmatpush1.msra.mxu0 0.0
        %653 = vmatprep.subr.mxu0 0.0
        %654 = vmatpush1.msra.mxu0 0.0
        %655 = vmatprep.subr.mxu0 0.0
        %656 = vmatpush1.msra.mxu0 0.0
        %657 = vmatprep.subr.mxu0 0.0
        %658 = vmatpush1.msra.mxu0 0.0
        %659 = vmatprep.subr.mxu0 0.0
        %660 = vmatpush1.msra.mxu0 0.0
        %661 = vmatprep.subr.mxu0 0.0
        %662 = vmatpush1.msra.mxu0 0.0
        %663 = vmatprep.subr.mxu0 0.0
        %664 = vmatpush1.msra.mxu0 0.0
        %665 = vmatprep.subr.mxu0 0.0
        %666 = vmatpush1.msra.mxu0 0.0
        %667 = vmatprep.subr.mxu0 0.0
        %668 = vmatpush1.msra.mxu0 0.0
        %669 = vmatprep.subr.mxu0 0.0
        %670 = vmatpush1.msra.mxu0 0.0
        %671 = vmatprep.subr.mxu0 0.0
        %672 = vmatpush1.msra.mxu0 0.0
        %673 = vmatprep.subr.mxu0 0.0
        %674 = vmatpush1.msra.mxu0 0.0
        %675 = vmatprep.subr.mxu0 0.0
        %676 = vmatpush1.msra.mxu0 0.0
        %677 = vmatprep.subr.mxu0 0.0
        %678 = vmatpush1.msra.mxu0 0.0
        %679 = vmatprep.subr.mxu0 %v493
        %680 = vmatpush1.msra.mxu0 %v492
        %681 = vmatprep.subr.mxu0 0.0
        %682 = vmatpush2.msra.mxu0 0.0
        %683 = vmatprep.subr.mxu0 0.0
        %684 = vmatpush2.msra.mxu0 0.0
        %685 = vmatprep.subr.mxu0 0.0
        %686 = vmatpush2.msra.mxu0 0.0
        %687 = vmatprep.subr.mxu0 0.0
        %688 = vmatpush2.msra.mxu0 0.0
        %689 = vmatprep.subr.mxu0 0.0
        %690 = vmatpush2.msra.mxu0 0.0
        %691 = vmatprep.subr.mxu0 0.0
        %692 = vmatpush2.msra.mxu0 0.0
        %693 = vmatprep.subr.mxu0 0.0
        %694 = vmatpush2.msra.mxu0 0.0
        %695 = vmatprep.subr.mxu0 0.0
        %696 = vmatpush2.msra.mxu0 0.0
        %697 = vmatprep.subr.mxu0 0.0
        %698 = vmatpush2.msra.mxu0 0.0
        %699 = vmatprep.subr.mxu0 0.0
        %700 = vmatpush2.msra.mxu0 0.0
        %701 = vmatprep.subr.mxu0 0.0
        %702 = vmatpush2.msra.mxu0 0.0
        %703 = vmatprep.subr.mxu0 0.0
        %704 = vmatpush2.msra.mxu0 0.0
        %705 = vmatprep.subr.mxu0 0.0
        %706 = vmatpush2.msra.mxu0 0.0
        %707 = vmatprep.subr.mxu0 0.0
        %708 = vmatpush2.msra.mxu0 0.0
        %709 = vmatprep.subr.mxu0 0.0
        %710 = vmatpush2.msra.mxu0 0.0
        %711 = vmatprep.subr.mxu0 0.0
        %712 = vmatpush2.msra.mxu0 0.0
        %713 = vmatprep.mubr.f32.mxu0 0.0
        %714 = vmatmul.mubr.f32.gmra.mxu0 %v505
        %v715 = vpop.f32.mrf.mxu0
        %v716 = vadd.f32 %v501, %v715
        %v717 = vpop.f32.mrf.mxu0
        %v718 = vadd.f32 %v501, %v717
        %719 = vdwg.mxu0
        %720 = vmatprep.subr.mxu0 0.0
        %721 = vmatpush1.msra.mxu0 0.0
        %722 = vmatprep.subr.mxu0 0.0
        %723 = vmatpush1.msra.mxu0 0.0
        %724 = vmatprep.subr.mxu0 0.0
        %725 = vmatpush1.msra.mxu0 0.0
        %726 = vmatprep.subr.mxu0 0.0
        %727 = vmatpush1.msra.mxu0 0.0
        %728 = vmatprep.subr.mxu0 0.0
        %729 = vmatpush1.msra.mxu0 0.0
        %730 = vmatprep.subr.mxu0 0.0
        %731 = vmatpush1.msra.mxu0 0.0
        %732 = vmatprep.subr.mxu0 0.0
        %733 = vmatpush1.msra.mxu0 0.0
        %734 = vmatprep.subr.mxu0 0.0
        %735 = vmatpush1.msra.mxu0 0.0
        %736 = vmatprep.subr.mxu0 0.0
        %737 = vmatpush1.msra.mxu0 0.0
        %738 = vmatprep.subr.mxu0 0.0
        %739 = vmatpush1.msra.mxu0 0.0
        %740 = vmatprep.subr.mxu0 0.0
        %741 = vmatpush1.msra.mxu0 0.0
        %742 = vmatprep.subr.mxu0 0.0
        %743 = vmatpush1.msra.mxu0 0.0
        %744 = vmatprep.subr.mxu0 0.0
        %745 = vmatpush1.msra.mxu0 0.0
        %746 = vmatprep.subr.mxu0 0.0
        %747 = vmatpush1.msra.mxu0 0.0
        %748 = vmatprep.subr.mxu0 0.0
        %749 = vmatpush1.msra.mxu0 0.0
        %750 = vmatprep.subr.mxu0 %v495
        %751 = vmatpush1.msra.mxu0 %v494
        %752 = vmatprep.subr.mxu0 0.0
        %753 = vmatpush2.msra.mxu0 0.0
        %754 = vmatprep.subr.mxu0 0.0
        %755 = vmatpush2.msra.mxu0 0.0
        %756 = vmatprep.subr.mxu0 0.0
        %757 = vmatpush2.msra.mxu0 0.0
        %758 = vmatprep.subr.mxu0 0.0
        %759 = vmatpush2.msra.mxu0 0.0
        %760 = vmatprep.subr.mxu0 0.0
        %761 = vmatpush2.msra.mxu0 0.0
        %762 = vmatprep.subr.mxu0 0.0
        %763 = vmatpush2.msra.mxu0 0.0
        %764 = vmatprep.subr.mxu0 0.0
        %765 = vmatpush2.msra.mxu0 0.0
        %766 = vmatprep.subr.mxu0 0.0
        %767 = vmatpush2.msra.mxu0 0.0
        %768 = vmatprep.subr.mxu0 0.0
        %769 = vmatpush2.msra.mxu0 0.0
        %770 = vmatprep.subr.mxu0 0.0
        %771 = vmatpush2.msra.mxu0 0.0
        %772 = vmatprep.subr.mxu0 0.0
        %773 = vmatpush2.msra.mxu0 0.0
        %774 = vmatprep.subr.mxu0 0.0
        %775 = vmatpush2.msra.mxu0 0.0
        %776 = vmatprep.subr.mxu0 0.0
        %777 = vmatpush2.msra.mxu0 0.0
        %778 = vmatprep.subr.mxu0 0.0
        %779 = vmatpush2.msra.mxu0 0.0
        %780 = vmatprep.subr.mxu0 0.0
        %781 = vmatpush2.msra.mxu0 0.0
        %782 = vmatprep.subr.mxu0 0.0
        %783 = vmatpush2.msra.mxu0 0.0
        %784 = vmatprep.mubr.f32.mxu0 0.0
        %785 = vmatmul.mubr.f32.gmra.mxu0 %v505
        %v786 = vpop.f32.mrf.mxu0
        %v787 = vadd.f32 %v501, %v786
        %v788 = vpop.f32.mrf.mxu0
        %v789 = vadd.f32 %v501, %v788
        %790 = vdwg.mxu0
        %v791 = vmul.f32 %v574, 0.70710677
        %v792 = vmul.f32 %v576, 0.70710677
        %v793 = vmul.f32 %v645, 0.70710677
        %v794 = vmul.f32 %v647, 0.70710677
        %v795 = vmul.f32 %v716, 0.70710677
        %v796 = vmul.f32 %v718, 0.70710677
        %v797 = vmul.f32 %v787, 0.70710677
        %v798 = vmul.f32 %v789, 0.70710677
        %vm799 = vcmp.ge.f32.partialorder %v791, 0.0
        %vm800 = vcmp.ge.f32.partialorder %v792, 0.0
        %vm801 = vcmp.ge.f32.partialorder %v793, 0.0
        %vm802 = vcmp.ge.f32.partialorder %v794, 0.0
        %vm803 = vcmp.ge.f32.partialorder %v795, 0.0
        %vm804 = vcmp.ge.f32.partialorder %v796, 0.0
        %vm805 = vcmp.ge.f32.partialorder %v797, 0.0
        %vm806 = vcmp.ge.f32.partialorder %v798, 0.0
        %v807 = vsel %vm799, 1.0, -1.0
        %v808 = vsel %vm800, 1.0, -1.0
        %v809 = vsel %vm801, 1.0, -1.0
        %v810 = vsel %vm802, 1.0, -1.0
        %v811 = vsel %vm803, 1.0, -1.0
        %v812 = vsel %vm804, 1.0, -1.0
        %v813 = vsel %vm805, 1.0, -1.0
        %v814 = vsel %vm806, 1.0, -1.0
        %v815 = vand.u32 2147483647, %v791
        %v816 = vand.u32 2147483647, %v792
        %v817 = vand.u32 2147483647, %v793
        %v818 = vand.u32 2147483647, %v794
        %v819 = vand.u32 2147483647, %v795
        %v820 = vand.u32 2147483647, %v796
        %v821 = vand.u32 2147483647, %v797
        %v822 = vand.u32 2147483647, %v798
        %v823 = vmul.f32 %v815, 0.3275911
        %v824 = vmul.f32 %v816, 0.3275911
        %v825 = vmul.f32 %v817, 0.3275911
        %v826 = vmul.f32 %v818, 0.3275911
        %v827 = vmul.f32 %v819, 0.3275911
        %v828 = vmul.f32 %v820, 0.3275911
        %v829 = vmul.f32 %v821, 0.3275911
        %v830 = vmul.f32 %v822, 0.3275911
        %v831 = vadd.f32 %v823, 1.0
        %v832 = vadd.f32 %v824, 1.0
        %v833 = vadd.f32 %v825, 1.0
        %v834 = vadd.f32 %v826, 1.0
        %v835 = vadd.f32 %v827, 1.0
        %v836 = vadd.f32 %v828, 1.0
        %v837 = vadd.f32 %v829, 1.0
        %v838 = vadd.f32 %v830, 1.0
        %v839 = vrcp.pop %v831
        %v840 = vrcp.pop %v832
        %v841 = vrcp.pop %v833
        %v842 = vrcp.pop %v834
        %v843 = vrcp.pop %v835
        %v844 = vrcp.pop %v836
        %v845 = vrcp.pop %v837
        %v846 = vrcp.pop %v838
        %v847 = vmul.f32 %v839, 1.0614054
        %v848 = vmul.f32 %v840, 1.0614054
        %v849 = vmul.f32 %v841, 1.0614054
        %v850 = vmul.f32 %v842, 1.0614054
        %v851 = vmul.f32 %v843, 1.0614054
        %v852 = vmul.f32 %v844, 1.0614054
        %v853 = vmul.f32 %v845, 1.0614054
        %v854 = vmul.f32 %v846, 1.0614054
        %v855 = vadd.f32 %v847, -1.4531521
        %v856 = vadd.f32 %v848, -1.4531521
        %v857 = vadd.f32 %v849, -1.4531521
        %v858 = vadd.f32 %v850, -1.4531521
        %v859 = vadd.f32 %v851, -1.4531521
        %v860 = vadd.f32 %v852, -1.4531521
        %v861 = vadd.f32 %v853, -1.4531521
        %v862 = vadd.f32 %v854, -1.4531521
        %v863 = vmul.f32 %v839, %v855
        %v864 = vmul.f32 %v840, %v856
        %v865 = vmul.f32 %v841, %v857
        %v866 = vmul.f32 %v842, %v858
        %v867 = vmul.f32 %v843, %v859
        %v868 = vmul.f32 %v844, %v860
        %v869 = vmul.f32 %v845, %v861
        %v870 = vmul.f32 %v846, %v862
        %v871 = vadd.f32 %v863, 1.4214138
        %v872 = vadd.f32 %v864, 1.4214138
        %v873 = vadd.f32 %v865, 1.4214138
        %v874 = vadd.f32 %v866, 1.4214138
        %v875 = vadd.f32 %v867, 1.4214138
        %v876 = vadd.f32 %v868, 1.4214138
        %v877 = vadd.f32 %v869, 1.4214138
        %v878 = vadd.f32 %v870, 1.4214138
        %v879 = vmul.f32 %v839, %v871
        %v880 = vmul.f32 %v840, %v872
        %v881 = vmul.f32 %v841, %v873
        %v882 = vmul.f32 %v842, %v874
        %v883 = vmul.f32 %v843, %v875
        %v884 = vmul.f32 %v844, %v876
        %v885 = vmul.f32 %v845, %v877
        %v886 = vmul.f32 %v846, %v878
        %v887 = vadd.f32 %v879, -0.28449672
        %v888 = vadd.f32 %v880, -0.28449672
        %v889 = vadd.f32 %v881, -0.28449672
        %v890 = vadd.f32 %v882, -0.28449672
        %v891 = vadd.f32 %v883, -0.28449672
        %v892 = vadd.f32 %v884, -0.28449672
        %v893 = vadd.f32 %v885, -0.28449672
        %v894 = vadd.f32 %v886, -0.28449672
        %v895 = vmul.f32 %v839, %v887
        %v896 = vmul.f32 %v840, %v888
        %v897 = vmul.f32 %v841, %v889
        %v898 = vmul.f32 %v842, %v890
        %v899 = vmul.f32 %v843, %v891
        %v900 = vmul.f32 %v844, %v892
        %v901 = vmul.f32 %v845, %v893
        %v902 = vmul.f32 %v846, %v894
        %v903 = vadd.f32 %v895, 0.2548296
        %v904 = vadd.f32 %v896, 0.2548296
        %v905 = vadd.f32 %v897, 0.2548296
        %v906 = vadd.f32 %v898, 0.2548296
        %v907 = vadd.f32 %v899, 0.2548296
        %v908 = vadd.f32 %v900, 0.2548296
        %v909 = vadd.f32 %v901, 0.2548296
        %v910 = vadd.f32 %v902, 0.2548296
        %v911 = vmul.f32 %v839, %v903
        %v912 = vmul.f32 %v840, %v904
        %v913 = vmul.f32 %v841, %v905
        %v914 = vmul.f32 %v842, %v906
        %v915 = vmul.f32 %v843, %v907
        %v916 = vmul.f32 %v844, %v908
        %v917 = vmul.f32 %v845, %v909
        %v918 = vmul.f32 %v846, %v910
        %v919 = vsub.f32 0.0, %v815
        %v920 = vsub.f32 0.0, %v816
        %v921 = vsub.f32 0.0, %v817
        %v922 = vsub.f32 0.0, %v818
        %v923 = vsub.f32 0.0, %v819
        %v924 = vsub.f32 0.0, %v820
        %v925 = vsub.f32 0.0, %v821
        %v926 = vsub.f32 0.0, %v822
        %v927 = vmul.f32 %v919, %v815
        %v928 = vmul.f32 %v920, %v816
        %v929 = vmul.f32 %v921, %v817
        %v930 = vmul.f32 %v922, %v818
        %v931 = vmul.f32 %v923, %v819
        %v932 = vmul.f32 %v924, %v820
        %v933 = vmul.f32 %v925, %v821
        %v934 = vmul.f32 %v926, %v822
        %v935 = vmul.f32 %v927, 1.442695
        %v936 = vpow.pop %v935
        %v937 = vmul.f32 %v928, 1.442695
        %v938 = vpow.pop %v937
        %v939 = vmul.f32 %v929, 1.442695
        %v940 = vpow.pop %v939
        %v941 = vmul.f32 %v930, 1.442695
        %v942 = vpow.pop %v941
        %v943 = vmul.f32 %v931, 1.442695
        %v944 = vpow.pop %v943
        %v945 = vmul.f32 %v932, 1.442695
        %v946 = vpow.pop %v945
        %v947 = vmul.f32 %v933, 1.442695
        %v948 = vpow.pop %v947
        %v949 = vmul.f32 %v934, 1.442695
        %v950 = vpow.pop %v949
        %v951 = vmul.f32 %v911, %v936
        %v952 = vmul.f32 %v912, %v938
        %v953 = vmul.f32 %v913, %v940
        %v954 = vmul.f32 %v914, %v942
        %v955 = vmul.f32 %v915, %v944
        %v956 = vmul.f32 %v916, %v946
        %v957 = vmul.f32 %v917, %v948
        %v958 = vmul.f32 %v918, %v950
        %v959 = vsub.f32 1.0, %v951
        %v960 = vsub.f32 1.0, %v952
        %v961 = vsub.f32 1.0, %v953
        %v962 = vsub.f32 1.0, %v954
        %v963 = vsub.f32 1.0, %v955
        %v964 = vsub.f32 1.0, %v956
        %v965 = vsub.f32 1.0, %v957
        %v966 = vsub.f32 1.0, %v958
        %v967 = vmul.f32 %v807, %v959
        %v968 = vmul.f32 %v808, %v960
        %v969 = vmul.f32 %v809, %v961
        %v970 = vmul.f32 %v810, %v962
        %v971 = vmul.f32 %v811, %v963
        %v972 = vmul.f32 %v812, %v964
        %v973 = vmul.f32 %v813, %v965
        %v974 = vmul.f32 %v814, %v966
        %v975 = vmul.f32 %v574, 0.5
        %v976 = vmul.f32 %v576, 0.5
        %v977 = vmul.f32 %v645, 0.5
        %v978 = vmul.f32 %v647, 0.5
        %v979 = vmul.f32 %v716, 0.5
        %v980 = vmul.f32 %v718, 0.5
        %v981 = vmul.f32 %v787, 0.5
        %v982 = vmul.f32 %v789, 0.5
        %v983 = vadd.f32 %v967, 1.0
        %v984 = vadd.f32 %v968, 1.0
        %v985 = vadd.f32 %v969, 1.0
        %v986 = vadd.f32 %v970, 1.0
        %v987 = vadd.f32 %v971, 1.0
        %v988 = vadd.f32 %v972, 1.0
        %v989 = vadd.f32 %v973, 1.0
        %v990 = vadd.f32 %v974, 1.0
        %v991 = vmul.f32 %v975, %v983
        %v992 = vmul.f32 %v976, %v984
        %v993 = vmul.f32 %v977, %v985
        %v994 = vmul.f32 %v978, %v986
        %v995 = vmul.f32 %v979, %v987
        %v996 = vmul.f32 %v980, %v988
        %v997 = vmul.f32 %v981, %v989
        %v998 = vmul.f32 %v982, %v990
        %999 = vrot.lane.b32.xlu0 %v991, 17
        %v1000 = vpop.permute.xlu0 %999
        %1001 = vrot.lane.b32.xlu0 %v992, 17
        %v1002 = vpop.permute.xlu0 %1001
        %1003 = vrot.lane.b32.xlu0 %v993, 17
        %v1004 = vpop.permute.xlu0 %1003
        %1005 = vrot.lane.b32.xlu0 %v994, 17
        %v1006 = vpop.permute.xlu0 %1005
        %1007 = vrot.lane.b32.xlu0 %v995, 17
        %v1008 = vpop.permute.xlu0 %1007
        %1009 = vrot.lane.b32.xlu0 %v996, 17
        %v1010 = vpop.permute.xlu0 %1009
        %1011 = vrot.lane.b32.xlu0 %v997, 17
        %v1012 = vpop.permute.xlu0 %1011
        %1013 = vrot.lane.b32.xlu0 %v998, 17
        %v1014 = vpop.permute.xlu0 %1013
        %v1015 = vlaneseq
        %v1016 = vand.u32 %v1015, 127
        %vm1017 = vcmp.lt.s32.totalorder %v1016, 17
        %v1018 = vsel %vm1017, %v1012, %v1014
        %v1019 = vsel %vm1017, %v1010, %v1012
        %v1020 = vsel %vm1017, %v1008, %v1010
        %v1021 = vsel %vm1017, %v1006, %v1008
        %v1022 = vsel %vm1017, %v1004, %v1006
        %v1023 = vsel %vm1017, %v1002, %v1004
        %v1024 = vsel %vm1017, %v1000, %v1002
        %v1025 = vsel %vm1017, %v1014, %v1000
        %v1026 = vld [vmem:[#allocation5] ss:$8 sm:$0xf]
        %v1027 = vld [vmem:[#allocation5] ss:$8 sm:$0xf0]
        %v1028 = vor.u32 %v1026, %v1027
        %v1030 = vlaneseq
        %v1031 = vshrl.u32 %v1030, 7
        %v1032 = vsub.s32 0, %v1031
        %v1033 = vrot.slane %v1028, %v1032
        %v1034 = vlaneseq
        %v1035 = vshrl.u32 %v1034, 7
        %v1036 = vsub.s32 1, %v1035
        %v1037 = vrot.slane %v1028, %v1036
        %v1038 = vlaneseq
        %v1039 = vshrl.u32 %v1038, 7
        %v1040 = vsub.s32 2, %v1039
        %v1041 = vrot.slane %v1028, %v1040
        %v1042 = vlaneseq
        %v1043 = vshrl.u32 %v1042, 7
        %v1044 = vsub.s32 3, %v1043
        %v1045 = vrot.slane %v1028, %v1044
        %v1046 = vlaneseq
        %v1047 = vshrl.u32 %v1046, 7
        %v1048 = vsub.s32 4, %v1047
        %v1049 = vrot.slane %v1028, %v1048
        %v1050 = vlaneseq
        %v1051 = vshrl.u32 %v1050, 7
        %v1052 = vsub.s32 5, %v1051
        %v1053 = vrot.slane %v1028, %v1052
        %v1054 = vlaneseq
        %v1055 = vshrl.u32 %v1054, 7
        %v1056 = vsub.s32 6, %v1055
        %v1057 = vrot.slane %v1028, %v1056
        %v1058 = vlaneseq
        %v1059 = vshrl.u32 %v1058, 7
        %v1060 = vsub.s32 7, %v1059
        %v1061 = vrot.slane %v1028, %v1060
        %v1070 = vmul.f32 %v1025, %v1033
        %v1071 = vmul.f32 %v1024, %v1037
        %v1072 = vmul.f32 %v1023, %v1041
        %v1073 = vmul.f32 %v1022, %v1045
        %v1074 = vmul.f32 %v1021, %v1049
        %v1075 = vmul.f32 %v1020, %v1053
        %v1076 = vmul.f32 %v1019, %v1057
        %v1077 = vmul.f32 %v1018, %v1061
        %1078 = vrot.lane.b32.xlu0 %v991, 16
        %v1079 = vpop.permute.xlu0 %1078
        %1080 = vrot.lane.b32.xlu0 %v992, 16
        %v1081 = vpop.permute.xlu0 %1080
        %1082 = vrot.lane.b32.xlu0 %v993, 16
        %v1083 = vpop.permute.xlu0 %1082
        %1084 = vrot.lane.b32.xlu0 %v994, 16
        %v1085 = vpop.permute.xlu0 %1084
        %1086 = vrot.lane.b32.xlu0 %v995, 16
        %v1087 = vpop.permute.xlu0 %1086
        %1088 = vrot.lane.b32.xlu0 %v996, 16
        %v1089 = vpop.permute.xlu0 %1088
        %1090 = vrot.lane.b32.xlu0 %v997, 16
        %v1091 = vpop.permute.xlu0 %1090
        %1092 = vrot.lane.b32.xlu0 %v998, 16
        %v1093 = vpop.permute.xlu0 %1092
        %vm1094 = vcmp.lt.s32.totalorder %v1016, 16
        %v1095 = vsel %vm1094, %v1091, %v1093
        %v1096 = vsel %vm1094, %v1089, %v1091
        %v1097 = vsel %vm1094, %v1087, %v1089
        %v1098 = vsel %vm1094, %v1085, %v1087
        %v1099 = vsel %vm1094, %v1083, %v1085
        %v1100 = vsel %vm1094, %v1081, %v1083
        %v1101 = vsel %vm1094, %v1079, %v1081
        %v1102 = vsel %vm1094, %v1093, %v1079
        %s1103 = scalar_lea.vmem [#allocation5], 1
        %v1104 = vld [vmem:[%s1103] ss:$8 sm:$0xf]
        %v1105 = vld [vmem:[%s1103] ss:$8 sm:$0xf0]
        %v1106 = vor.u32 %v1104, %v1105
        %v1108 = vlaneseq
        %v1109 = vshrl.u32 %v1108, 7
        %v1110 = vsub.s32 0, %v1109
        %v1111 = vrot.slane %v1106, %v1110
        %v1112 = vlaneseq
        %v1113 = vshrl.u32 %v1112, 7
        %v1114 = vsub.s32 1, %v1113
        %v1115 = vrot.slane %v1106, %v1114
        %v1116 = vlaneseq
        %v1117 = vshrl.u32 %v1116, 7
        %v1118 = vsub.s32 2, %v1117
        %v1119 = vrot.slane %v1106, %v1118
        %v1120 = vlaneseq
        %v1121 = vshrl.u32 %v1120, 7
        %v1122 = vsub.s32 3, %v1121
        %v1123 = vrot.slane %v1106, %v1122
        %v1124 = vlaneseq
        %v1125 = vshrl.u32 %v1124, 7
        %v1126 = vsub.s32 4, %v1125
        %v1127 = vrot.slane %v1106, %v1126
        %v1128 = vlaneseq
        %v1129 = vshrl.u32 %v1128, 7
        %v1130 = vsub.s32 5, %v1129
        %v1131 = vrot.slane %v1106, %v1130
        %v1132 = vlaneseq
        %v1133 = vshrl.u32 %v1132, 7
        %v1134 = vsub.s32 6, %v1133
        %v1135 = vrot.slane %v1106, %v1134
        %v1136 = vlaneseq
        %v1137 = vshrl.u32 %v1136, 7
        %v1138 = vsub.s32 7, %v1137
        %v1139 = vrot.slane %v1106, %v1138
        %v1148 = vmul.f32 %v1102, %v1111
        %v1149 = vmul.f32 %v1101, %v1115
        %v1150 = vmul.f32 %v1100, %v1119
        %v1151 = vmul.f32 %v1099, %v1123
        %v1152 = vmul.f32 %v1098, %v1127
        %v1153 = vmul.f32 %v1097, %v1131
        %v1154 = vmul.f32 %v1096, %v1135
        %v1155 = vmul.f32 %v1095, %v1139
        %1156 = vrot.lane.b32.xlu0 %v991, 15
        %v1157 = vpop.permute.xlu0 %1156
        %1158 = vrot.lane.b32.xlu0 %v992, 15
        %v1159 = vpop.permute.xlu0 %1158
        %1160 = vrot.lane.b32.xlu0 %v993, 15
        %v1161 = vpop.permute.xlu0 %1160
        %1162 = vrot.lane.b32.xlu0 %v994, 15
        %v1163 = vpop.permute.xlu0 %1162
        %1164 = vrot.lane.b32.xlu0 %v995, 15
        %v1165 = vpop.permute.xlu0 %1164
        %1166 = vrot.lane.b32.xlu0 %v996, 15
        %v1167 = vpop.permute.xlu0 %1166
        %1168 = vrot.lane.b32.xlu0 %v997, 15
        %v1169 = vpop.permute.xlu0 %1168
        %1170 = vrot.lane.b32.xlu0 %v998, 15
        %v1171 = vpop.permute.xlu0 %1170
        %vm1172 = vcmp.lt.s32.totalorder %v1016, 15
        %v1173 = vsel %vm1172, %v1169, %v1171
        %v1174 = vsel %vm1172, %v1167, %v1169
        %v1175 = vsel %vm1172, %v1165, %v1167
        %v1176 = vsel %vm1172, %v1163, %v1165
        %v1177 = vsel %vm1172, %v1161, %v1163
        %v1178 = vsel %vm1172, %v1159, %v1161
        %v1179 = vsel %vm1172, %v1157, %v1159
        %v1180 = vsel %vm1172, %v1171, %v1157
        %s1181 = scalar_lea.vmem [#allocation5], 2
        %v1182 = vld [vmem:[%s1181] ss:$8 sm:$0xf]
        %v1183 = vld [vmem:[%s1181] ss:$8 sm:$0xf0]
        %v1184 = vor.u32 %v1182, %v1183
        %v1186 = vlaneseq
        %v1187 = vshrl.u32 %v1186, 7
        %v1188 = vsub.s32 0, %v1187
        %v1189 = vrot.slane %v1184, %v1188
        %v1190 = vlaneseq
        %v1191 = vshrl.u32 %v1190, 7
        %v1192 = vsub.s32 1, %v1191
        %v1193 = vrot.slane %v1184, %v1192
        %v1194 = vlaneseq
        %v1195 = vshrl.u32 %v1194, 7
        %v1196 = vsub.s32 2, %v1195
        %v1197 = vrot.slane %v1184, %v1196
        %v1198 = vlaneseq
        %v1199 = vshrl.u32 %v1198, 7
        %v1200 = vsub.s32 3, %v1199
        %v1201 = vrot.slane %v1184, %v1200
        %v1202 = vlaneseq
        %v1203 = vshrl.u32 %v1202, 7
        %v1204 = vsub.s32 4, %v1203
        %v1205 = vrot.slane %v1184, %v1204
        %v1206 = vlaneseq
        %v1207 = vshrl.u32 %v1206, 7
        %v1208 = vsub.s32 5, %v1207
        %v1209 = vrot.slane %v1184, %v1208
        %v1210 = vlaneseq
        %v1211 = vshrl.u32 %v1210, 7
        %v1212 = vsub.s32 6, %v1211
        %v1213 = vrot.slane %v1184, %v1212
        %v1214 = vlaneseq
        %v1215 = vshrl.u32 %v1214, 7
        %v1216 = vsub.s32 7, %v1215
        %v1217 = vrot.slane %v1184, %v1216
        %v1226 = vmul.f32 %v1180, %v1189
        %v1227 = vmul.f32 %v1179, %v1193
        %v1228 = vmul.f32 %v1178, %v1197
        %v1229 = vmul.f32 %v1177, %v1201
        %v1230 = vmul.f32 %v1176, %v1205
        %v1231 = vmul.f32 %v1175, %v1209
        %v1232 = vmul.f32 %v1174, %v1213
        %v1233 = vmul.f32 %v1173, %v1217
        %1234 = vrot.lane.b32.xlu0 %v991, 1
        %v1235 = vpop.permute.xlu0 %1234
        %1236 = vrot.lane.b32.xlu0 %v992, 1
        %v1237 = vpop.permute.xlu0 %1236
        %1238 = vrot.lane.b32.xlu0 %v993, 1
        %v1239 = vpop.permute.xlu0 %1238
        %1240 = vrot.lane.b32.xlu0 %v994, 1
        %v1241 = vpop.permute.xlu0 %1240
        %1242 = vrot.lane.b32.xlu0 %v995, 1
        %v1243 = vpop.permute.xlu0 %1242
        %1244 = vrot.lane.b32.xlu0 %v996, 1
        %v1245 = vpop.permute.xlu0 %1244
        %1246 = vrot.lane.b32.xlu0 %v997, 1
        %v1247 = vpop.permute.xlu0 %1246
        %1248 = vrot.lane.b32.xlu0 %v998, 1
        %v1249 = vpop.permute.xlu0 %1248
        %vm1250 = vcmp.lt.s32.totalorder %v1016, 1
        %v1251 = vsel %vm1250, %v1247, %v1249
        %v1252 = vsel %vm1250, %v1245, %v1247
        %v1253 = vsel %vm1250, %v1243, %v1245
        %v1254 = vsel %vm1250, %v1241, %v1243
        %v1255 = vsel %vm1250, %v1239, %v1241
        %v1256 = vsel %vm1250, %v1237, %v1239
        %v1257 = vsel %vm1250, %v1235, %v1237
        %v1258 = vsel %vm1250, %v1249, %v1235
        %s1259 = scalar_lea.vmem [#allocation5], 3
        %v1260 = vld [vmem:[%s1259] ss:$8 sm:$0xf]
        %v1261 = vld [vmem:[%s1259] ss:$8 sm:$0xf0]
        %v1262 = vor.u32 %v1260, %v1261
        %v1264 = vlaneseq
        %v1265 = vshrl.u32 %v1264, 7
        %v1266 = vsub.s32 0, %v1265
        %v1267 = vrot.slane %v1262, %v1266
        %v1268 = vlaneseq
        %v1269 = vshrl.u32 %v1268, 7
        %v1270 = vsub.s32 1, %v1269
        %v1271 = vrot.slane %v1262, %v1270
        %v1272 = vlaneseq
        %v1273 = vshrl.u32 %v1272, 7
        %v1274 = vsub.s32 2, %v1273
        %v1275 = vrot.slane %v1262, %v1274
        %v1276 = vlaneseq
        %v1277 = vshrl.u32 %v1276, 7
        %v1278 = vsub.s32 3, %v1277
        %v1279 = vrot.slane %v1262, %v1278
        %v1280 = vlaneseq
        %v1281 = vshrl.u32 %v1280, 7
        %v1282 = vsub.s32 4, %v1281
        %v1283 = vrot.slane %v1262, %v1282
        %v1284 = vlaneseq
        %v1285 = vshrl.u32 %v1284, 7
        %v1286 = vsub.s32 5, %v1285
        %v1287 = vrot.slane %v1262, %v1286
        %v1288 = vlaneseq
        %v1289 = vshrl.u32 %v1288, 7
        %v1290 = vsub.s32 6, %v1289
        %v1291 = vrot.slane %v1262, %v1290
        %v1292 = vlaneseq
        %v1293 = vshrl.u32 %v1292, 7
        %v1294 = vsub.s32 7, %v1293
        %v1295 = vrot.slane %v1262, %v1294
        %v1304 = vmul.f32 %v1258, %v1267
        %v1305 = vmul.f32 %v1257, %v1271
        %v1306 = vmul.f32 %v1256, %v1275
        %v1307 = vmul.f32 %v1255, %v1279
        %v1308 = vmul.f32 %v1254, %v1283
        %v1309 = vmul.f32 %v1253, %v1287
        %v1310 = vmul.f32 %v1252, %v1291
        %v1311 = vmul.f32 %v1251, %v1295
        %1312 = vrot.lane.b32.xlu0 %v991, 127
        %v1313 = vpop.permute.xlu0 %1312
        %1314 = vrot.lane.b32.xlu0 %v992, 127
        %v1315 = vpop.permute.xlu0 %1314
        %1316 = vrot.lane.b32.xlu0 %v993, 127
        %v1317 = vpop.permute.xlu0 %1316
        %1318 = vrot.lane.b32.xlu0 %v994, 127
        %v1319 = vpop.permute.xlu0 %1318
        %1320 = vrot.lane.b32.xlu0 %v995, 127
        %v1321 = vpop.permute.xlu0 %1320
        %1322 = vrot.lane.b32.xlu0 %v996, 127
        %v1323 = vpop.permute.xlu0 %1322
        %1324 = vrot.lane.b32.xlu0 %v997, 127
        %v1325 = vpop.permute.xlu0 %1324
        %1326 = vrot.lane.b32.xlu0 %v998, 127
        %v1327 = vpop.permute.xlu0 %1326
        %vm1328 = vcmp.lt.s32.totalorder %v1016, 127
        %v1329 = vsel %vm1328, %v1325, %v1327
        %v1330 = vsel %vm1328, %v1323, %v1325
        %v1331 = vsel %vm1328, %v1321, %v1323
        %v1332 = vsel %vm1328, %v1319, %v1321
        %v1333 = vsel %vm1328, %v1317, %v1319
        %v1334 = vsel %vm1328, %v1315, %v1317
        %v1335 = vsel %vm1328, %v1313, %v1315
        %v1336 = vsel %vm1328, %v1327, %v1313
        %s1337 = scalar_lea.vmem [#allocation5], 5
        %v1338 = vld [vmem:[%s1337] ss:$8 sm:$0xf]
        %v1339 = vld [vmem:[%s1337] ss:$8 sm:$0xf0]
        %v1340 = vor.u32 %v1338, %v1339
        %v1342 = vlaneseq
        %v1343 = vshrl.u32 %v1342, 7
        %v1344 = vsub.s32 0, %v1343
        %v1345 = vrot.slane %v1340, %v1344
        %v1346 = vlaneseq
        %v1347 = vshrl.u32 %v1346, 7
        %v1348 = vsub.s32 1, %v1347
        %v1349 = vrot.slane %v1340, %v1348
        %v1350 = vlaneseq
        %v1351 = vshrl.u32 %v1350, 7
        %v1352 = vsub.s32 2, %v1351
        %v1353 = vrot.slane %v1340, %v1352
        %v1354 = vlaneseq
        %v1355 = vshrl.u32 %v1354, 7
        %v1356 = vsub.s32 3, %v1355
        %v1357 = vrot.slane %v1340, %v1356
        %v1358 = vlaneseq
        %v1359 = vshrl.u32 %v1358, 7
        %v1360 = vsub.s32 4, %v1359
        %v1361 = vrot.slane %v1340, %v1360
        %v1362 = vlaneseq
        %v1363 = vshrl.u32 %v1362, 7
        %v1364 = vsub.s32 5, %v1363
        %v1365 = vrot.slane %v1340, %v1364
        %v1366 = vlaneseq
        %v1367 = vshrl.u32 %v1366, 7
        %v1368 = vsub.s32 6, %v1367
        %v1369 = vrot.slane %v1340, %v1368
        %v1370 = vlaneseq
        %v1371 = vshrl.u32 %v1370, 7
        %v1372 = vsub.s32 7, %v1371
        %v1373 = vrot.slane %v1340, %v1372
        %v1382 = vmul.f32 %v1335, %v1345
        %v1383 = vmul.f32 %v1334, %v1349
        %v1384 = vmul.f32 %v1333, %v1353
        %v1385 = vmul.f32 %v1332, %v1357
        %v1386 = vmul.f32 %v1331, %v1361
        %v1387 = vmul.f32 %v1330, %v1365
        %v1388 = vmul.f32 %v1329, %v1369
        %v1389 = vmul.f32 %v1336, %v1373
        %1390 = vrot.lane.b32.xlu0 %v991, 113
        %v1391 = vpop.permute.xlu0 %1390
        %1392 = vrot.lane.b32.xlu0 %v992, 113
        %v1393 = vpop.permute.xlu0 %1392
        %1394 = vrot.lane.b32.xlu0 %v993, 113
        %v1395 = vpop.permute.xlu0 %1394
        %1396 = vrot.lane.b32.xlu0 %v994, 113
        %v1397 = vpop.permute.xlu0 %1396
        %1398 = vrot.lane.b32.xlu0 %v995, 113
        %v1399 = vpop.permute.xlu0 %1398
        %1400 = vrot.lane.b32.xlu0 %v996, 113
        %v1401 = vpop.permute.xlu0 %1400
        %1402 = vrot.lane.b32.xlu0 %v997, 113
        %v1403 = vpop.permute.xlu0 %1402
        %1404 = vrot.lane.b32.xlu0 %v998, 113
        %v1405 = vpop.permute.xlu0 %1404
        %vm1406 = vcmp.lt.s32.totalorder %v1016, 113
        %v1407 = vsel %vm1406, %v1403, %v1405
        %v1408 = vsel %vm1406, %v1401, %v1403
        %v1409 = vsel %vm1406, %v1399, %v1401
        %v1410 = vsel %vm1406, %v1397, %v1399
        %v1411 = vsel %vm1406, %v1395, %v1397
        %v1412 = vsel %vm1406, %v1393, %v1395
        %v1413 = vsel %vm1406, %v1391, %v1393
        %v1414 = vsel %vm1406, %v1405, %v1391
        %s1415 = scalar_lea.vmem [#allocation5], 6
        %v1416 = vld [vmem:[%s1415] ss:$8 sm:$0xf]
        %v1417 = vld [vmem:[%s1415] ss:$8 sm:$0xf0]
        %v1418 = vor.u32 %v1416, %v1417
        %v1420 = vlaneseq
        %v1421 = vshrl.u32 %v1420, 7
        %v1422 = vsub.s32 0, %v1421
        %v1423 = vrot.slane %v1418, %v1422
        %v1424 = vlaneseq
        %v1425 = vshrl.u32 %v1424, 7
        %v1426 = vsub.s32 1, %v1425
        %v1427 = vrot.slane %v1418, %v1426
        %v1428 = vlaneseq
        %v1429 = vshrl.u32 %v1428, 7
        %v1430 = vsub.s32 2, %v1429
        %v1431 = vrot.slane %v1418, %v1430
        %v1432 = vlaneseq
        %v1433 = vshrl.u32 %v1432, 7
        %v1434 = vsub.s32 3, %v1433
        %v1435 = vrot.slane %v1418, %v1434
        %v1436 = vlaneseq
        %v1437 = vshrl.u32 %v1436, 7
        %v1438 = vsub.s32 4, %v1437
        %v1439 = vrot.slane %v1418, %v1438
        %v1440 = vlaneseq
        %v1441 = vshrl.u32 %v1440, 7
        %v1442 = vsub.s32 5, %v1441
        %v1443 = vrot.slane %v1418, %v1442
        %v1444 = vlaneseq
        %v1445 = vshrl.u32 %v1444, 7
        %v1446 = vsub.s32 6, %v1445
        %v1447 = vrot.slane %v1418, %v1446
        %v1448 = vlaneseq
        %v1449 = vshrl.u32 %v1448, 7
        %v1450 = vsub.s32 7, %v1449
        %v1451 = vrot.slane %v1418, %v1450
        %v1460 = vmul.f32 %v1413, %v1423
        %v1461 = vmul.f32 %v1412, %v1427
        %v1462 = vmul.f32 %v1411, %v1431
        %v1463 = vmul.f32 %v1410, %v1435
        %v1464 = vmul.f32 %v1409, %v1439
        %v1465 = vmul.f32 %v1408, %v1443
        %v1466 = vmul.f32 %v1407, %v1447
        %v1467 = vmul.f32 %v1414, %v1451
        %1468 = vrot.lane.b32.xlu0 %v991, 112
        %v1469 = vpop.permute.xlu0 %1468
        %1470 = vrot.lane.b32.xlu0 %v992, 112
        %v1471 = vpop.permute.xlu0 %1470
        %1472 = vrot.lane.b32.xlu0 %v993, 112
        %v1473 = vpop.permute.xlu0 %1472
        %1474 = vrot.lane.b32.xlu0 %v994, 112
        %v1475 = vpop.permute.xlu0 %1474
        %1476 = vrot.lane.b32.xlu0 %v995, 112
        %v1477 = vpop.permute.xlu0 %1476
        %1478 = vrot.lane.b32.xlu0 %v996, 112
        %v1479 = vpop.permute.xlu0 %1478
        %1480 = vrot.lane.b32.xlu0 %v997, 112
        %v1481 = vpop.permute.xlu0 %1480
        %1482 = vrot.lane.b32.xlu0 %v998, 112
        %v1483 = vpop.permute.xlu0 %1482
        %vm1484 = vcmp.lt.s32.totalorder %v1016, 112
        %v1485 = vsel %vm1484, %v1481, %v1483
        %v1486 = vsel %vm1484, %v1479, %v1481
        %v1487 = vsel %vm1484, %v1477, %v1479
        %v1488 = vsel %vm1484, %v1475, %v1477
        %v1489 = vsel %vm1484, %v1473, %v1475
        %v1490 = vsel %vm1484, %v1471, %v1473
        %v1491 = vsel %vm1484, %v1469, %v1471
        %v1492 = vsel %vm1484, %v1483, %v1469
        %s1493 = scalar_lea.vmem [#allocation5], 7
        %v1494 = vld [vmem:[%s1493] ss:$8 sm:$0xf]
        %v1495 = vld [vmem:[%s1493] ss:$8 sm:$0xf0]
        %v1496 = vor.u32 %v1494, %v1495
        %v1498 = vlaneseq
        %v1499 = vshrl.u32 %v1498, 7
        %v1500 = vsub.s32 0, %v1499
        %v1501 = vrot.slane %v1496, %v1500
        %v1502 = vlaneseq
        %v1503 = vshrl.u32 %v1502, 7
        %v1504 = vsub.s32 1, %v1503
        %v1505 = vrot.slane %v1496, %v1504
        %v1506 = vlaneseq
        %v1507 = vshrl.u32 %v1506, 7
        %v1508 = vsub.s32 2, %v1507
        %v1509 = vrot.slane %v1496, %v1508
        %v1510 = vlaneseq
        %v1511 = vshrl.u32 %v1510, 7
        %v1512 = vsub.s32 3, %v1511
        %v1513 = vrot.slane %v1496, %v1512
        %v1514 = vlaneseq
        %v1515 = vshrl.u32 %v1514, 7
        %v1516 = vsub.s32 4, %v1515
        %v1517 = vrot.slane %v1496, %v1516
        %v1518 = vlaneseq
        %v1519 = vshrl.u32 %v1518, 7
        %v1520 = vsub.s32 5, %v1519
        %v1521 = vrot.slane %v1496, %v1520
        %v1522 = vlaneseq
        %v1523 = vshrl.u32 %v1522, 7
        %v1524 = vsub.s32 6, %v1523
        %v1525 = vrot.slane %v1496, %v1524
        %v1526 = vlaneseq
        %v1527 = vshrl.u32 %v1526, 7
        %v1528 = vsub.s32 7, %v1527
        %v1529 = vrot.slane %v1496, %v1528
        %v1538 = vmul.f32 %v1491, %v1501
        %v1539 = vmul.f32 %v1490, %v1505
        %v1540 = vmul.f32 %v1489, %v1509
        %v1541 = vmul.f32 %v1488, %v1513
        %v1542 = vmul.f32 %v1487, %v1517
        %v1543 = vmul.f32 %v1486, %v1521
        %v1544 = vmul.f32 %v1485, %v1525
        %v1545 = vmul.f32 %v1492, %v1529
        %1546 = vrot.lane.b32.xlu0 %v991, 111
        %v1547 = vpop.permute.xlu0 %1546
        %1548 = vrot.lane.b32.xlu0 %v992, 111
        %v1549 = vpop.permute.xlu0 %1548
        %1550 = vrot.lane.b32.xlu0 %v993, 111
        %v1551 = vpop.permute.xlu0 %1550
        %1552 = vrot.lane.b32.xlu0 %v994, 111
        %v1553 = vpop.permute.xlu0 %1552
        %1554 = vrot.lane.b32.xlu0 %v995, 111
        %v1555 = vpop.permute.xlu0 %1554
        %1556 = vrot.lane.b32.xlu0 %v996, 111
        %v1557 = vpop.permute.xlu0 %1556
        %1558 = vrot.lane.b32.xlu0 %v997, 111
        %v1559 = vpop.permute.xlu0 %1558
        %1560 = vrot.lane.b32.xlu0 %v998, 111
        %v1561 = vpop.permute.xlu0 %1560
        %vm1562 = vcmp.lt.s32.totalorder %v1016, 111
        %v1563 = vsel %vm1562, %v1559, %v1561
        %v1564 = vsel %vm1562, %v1557, %v1559
        %v1565 = vsel %vm1562, %v1555, %v1557
        %v1566 = vsel %vm1562, %v1553, %v1555
        %v1567 = vsel %vm1562, %v1551, %v1553
        %v1568 = vsel %vm1562, %v1549, %v1551
        %v1569 = vsel %vm1562, %v1547, %v1549
        %v1570 = vsel %vm1562, %v1561, %v1547
        %s1571 = scalar_lea.vmem [#allocation5], 64
        %v1572 = vld [vmem:[%s1571] ss:$8 sm:$0xf]
        %v1573 = vld [vmem:[%s1571] ss:$8 sm:$0xf0]
        %v1574 = vor.u32 %v1572, %v1573
        %v1576 = vlaneseq
        %v1577 = vshrl.u32 %v1576, 7
        %v1578 = vsub.s32 0, %v1577
        %v1579 = vrot.slane %v1574, %v1578
        %v1580 = vlaneseq
        %v1581 = vshrl.u32 %v1580, 7
        %v1582 = vsub.s32 1, %v1581
        %v1583 = vrot.slane %v1574, %v1582
        %v1584 = vlaneseq
        %v1585 = vshrl.u32 %v1584, 7
        %v1586 = vsub.s32 2, %v1585
        %v1587 = vrot.slane %v1574, %v1586
        %v1588 = vlaneseq
        %v1589 = vshrl.u32 %v1588, 7
        %v1590 = vsub.s32 3, %v1589
        %v1591 = vrot.slane %v1574, %v1590
        %v1592 = vlaneseq
        %v1593 = vshrl.u32 %v1592, 7
        %v1594 = vsub.s32 4, %v1593
        %v1595 = vrot.slane %v1574, %v1594
        %v1596 = vlaneseq
        %v1597 = vshrl.u32 %v1596, 7
        %v1598 = vsub.s32 5, %v1597
        %v1599 = vrot.slane %v1574, %v1598
        %v1600 = vlaneseq
        %v1601 = vshrl.u32 %v1600, 7
        %v1602 = vsub.s32 6, %v1601
        %v1603 = vrot.slane %v1574, %v1602
        %v1604 = vlaneseq
        %v1605 = vshrl.u32 %v1604, 7
        %v1606 = vsub.s32 7, %v1605
        %v1607 = vrot.slane %v1574, %v1606
        %v1616 = vmul.f32 %v1569, %v1579
        %v1617 = vmul.f32 %v1568, %v1583
        %v1618 = vmul.f32 %v1567, %v1587
        %v1619 = vmul.f32 %v1566, %v1591
        %v1620 = vmul.f32 %v1565, %v1595
        %v1621 = vmul.f32 %v1564, %v1599
        %v1622 = vmul.f32 %v1563, %v1603
        %v1623 = vmul.f32 %v1570, %v1607
        %v1624 = vld [vmem:[%s3] sm:$0xff]
        %v1625 = vld [vmem:[%s4] sm:$0xff]
        %1627 = vset.pattern.permute.xlu0 0
        %1628 = vperm.xlu0 %1627, %v1625
        %v1629 = vpop.permute.xlu0 %1628
        %vm1631 = vcmask 588800
        %v1633 = vsel %vm1631, %v1624, 0
        %1635 = vmatprep.subr.mxu0 0.0
        %1636 = vmatpush1.msra.mxu0 0.0
        %1637 = vmatprep.subr.mxu0 0.0
        %1638 = vmatpush1.msra.mxu0 0.0
        %1639 = vmatprep.subr.mxu0 0.0
        %1640 = vmatpush1.msra.mxu0 0.0
        %1641 = vmatprep.subr.mxu0 0.0
        %1642 = vmatpush1.msra.mxu0 0.0
        %1643 = vmatprep.subr.mxu0 0.0
        %1644 = vmatpush1.msra.mxu0 0.0
        %1645 = vmatprep.subr.mxu0 0.0
        %1646 = vmatpush1.msra.mxu0 0.0
        %1647 = vmatprep.subr.mxu0 0.0
        %1648 = vmatpush1.msra.mxu0 0.0
        %1649 = vmatprep.subr.mxu0 %v1617
        %1650 = vmatpush1.msra.mxu0 %v1616
        %1651 = vmatprep.subr.mxu0 %v1539
        %1652 = vmatpush1.msra.mxu0 %v1538
        %1653 = vmatprep.subr.mxu0 %v1461
        %1654 = vmatpush1.msra.mxu0 %v1460
        %1655 = vmatprep.subr.mxu0 %v1383
        %1656 = vmatpush1.msra.mxu0 %v1382
        %1657 = vmatprep.subr.mxu0 %v992
        %1658 = vmatpush1.msra.mxu0 %v991
        %1659 = vmatprep.subr.mxu0 %v1305
        %1660 = vmatpush1.msra.mxu0 %v1304
        %1661 = vmatprep.subr.mxu0 %v1227
        %1662 = vmatpush1.msra.mxu0 %v1226
        %1663 = vmatprep.subr.mxu0 %v1149
        %1664 = vmatpush1.msra.mxu0 %v1148
        %1665 = vmatprep.subr.mxu0 %v1071
        %1666 = vmatpush1.msra.mxu0 %v1070
        %1667 = vmatprep.subr.mxu0 0.0
        %1668 = vmatpush2.msra.mxu0 0.0
        %1669 = vmatprep.subr.mxu0 0.0
        %1670 = vmatpush2.msra.mxu0 0.0
        %1671 = vmatprep.subr.mxu0 0.0
        %1672 = vmatpush2.msra.mxu0 0.0
        %1673 = vmatprep.subr.mxu0 0.0
        %1674 = vmatpush2.msra.mxu0 0.0
        %1675 = vmatprep.subr.mxu0 0.0
        %1676 = vmatpush2.msra.mxu0 0.0
        %1677 = vmatprep.subr.mxu0 0.0
        %1678 = vmatpush2.msra.mxu0 0.0
        %1679 = vmatprep.subr.mxu0 0.0
        %1680 = vmatpush2.msra.mxu0 0.0
        %1681 = vmatprep.subr.mxu0 0.0
        %1682 = vmatpush2.msra.mxu0 0.0
        %1683 = vmatprep.subr.mxu0 0.0
        %1684 = vmatpush2.msra.mxu0 0.0
        %1685 = vmatprep.subr.mxu0 0.0
        %1686 = vmatpush2.msra.mxu0 0.0
        %1687 = vmatprep.subr.mxu0 0.0
        %1688 = vmatpush2.msra.mxu0 0.0
        %1689 = vmatprep.subr.mxu0 0.0
        %1690 = vmatpush2.msra.mxu0 0.0
        %1691 = vmatprep.subr.mxu0 0.0
        %1692 = vmatpush2.msra.mxu0 0.0
        %1693 = vmatprep.subr.mxu0 0.0
        %1694 = vmatpush2.msra.mxu0 0.0
        %1695 = vmatprep.subr.mxu0 0.0
        %1696 = vmatpush2.msra.mxu0 0.0
        %1697 = vmatprep.subr.mxu0 0.0
        %1698 = vmatpush2.msra.mxu0 0.0
        %1699 = vmatprep.mubr.f32.mxu0 0.0
        %1700 = vmatmul.mubr.f32.gmra.mxu0 %v1633
        %v1701 = vpop.f32.mrf.mxu0
        %v1702 = vadd.f32 %v1629, %v1701
        %v1703 = vpop.f32.mrf.mxu0
        %v1704 = vadd.f32 %v1629, %v1703
        %1705 = vdwg.mxu0
        %1706 = vmatprep.subr.mxu0 0.0
        %1707 = vmatpush1.msra.mxu0 0.0
        %1708 = vmatprep.subr.mxu0 0.0
        %1709 = vmatpush1.msra.mxu0 0.0
        %1710 = vmatprep.subr.mxu0 0.0
        %1711 = vmatpush1.msra.mxu0 0.0
        %1712 = vmatprep.subr.mxu0 0.0
        %1713 = vmatpush1.msra.mxu0 0.0
        %1714 = vmatprep.subr.mxu0 0.0
        %1715 = vmatpush1.msra.mxu0 0.0
        %1716 = vmatprep.subr.mxu0 0.0
        %1717 = vmatpush1.msra.mxu0 0.0
        %1718 = vmatprep.subr.mxu0 0.0
        %1719 = vmatpush1.msra.mxu0 0.0
        %1720 = vmatprep.subr.mxu0 %v1619
        %1721 = vmatpush1.msra.mxu0 %v1618
        %1722 = vmatprep.subr.mxu0 %v1541
        %1723 = vmatpush1.msra.mxu0 %v1540
        %1724 = vmatprep.subr.mxu0 %v1463
        %1725 = vmatpush1.msra.mxu0 %v1462
        %1726 = vmatprep.subr.mxu0 %v1385
        %1727 = vmatpush1.msra.mxu0 %v1384
        %1728 = vmatprep.subr.mxu0 %v994
        %1729 = vmatpush1.msra.mxu0 %v993
        %1730 = vmatprep.subr.mxu0 %v1307
        %1731 = vmatpush1.msra.mxu0 %v1306
        %1732 = vmatprep.subr.mxu0 %v1229
        %1733 = vmatpush1.msra.mxu0 %v1228
        %1734 = vmatprep.subr.mxu0 %v1151
        %1735 = vmatpush1.msra.mxu0 %v1150
        %1736 = vmatprep.subr.mxu0 %v1073
        %1737 = vmatpush1.msra.mxu0 %v1072
        %1738 = vmatprep.subr.mxu0 0.0
        %1739 = vmatpush2.msra.mxu0 0.0
        %1740 = vmatprep.subr.mxu0 0.0
        %1741 = vmatpush2.msra.mxu0 0.0
        %1742 = vmatprep.subr.mxu0 0.0
        %1743 = vmatpush2.msra.mxu0 0.0
        %1744 = vmatprep.subr.mxu0 0.0
        %1745 = vmatpush2.msra.mxu0 0.0
        %1746 = vmatprep.subr.mxu0 0.0
        %1747 = vmatpush2.msra.mxu0 0.0
        %1748 = vmatprep.subr.mxu0 0.0
        %1749 = vmatpush2.msra.mxu0 0.0
        %1750 = vmatprep.subr.mxu0 0.0
        %1751 = vmatpush2.msra.mxu0 0.0
        %1752 = vmatprep.subr.mxu0 0.0
        %1753 = vmatpush2.msra.mxu0 0.0
        %1754 = vmatprep.subr.mxu0 0.0
        %1755 = vmatpush2.msra.mxu0 0.0
        %1756 = vmatprep.subr.mxu0 0.0
        %1757 = vmatpush2.msra.mxu0 0.0
        %1758 = vmatprep.subr.mxu0 0.0
        %1759 = vmatpush2.msra.mxu0 0.0
        %1760 = vmatprep.subr.mxu0 0.0
        %1761 = vmatpush2.msra.mxu0 0.0
        %1762 = vmatprep.subr.mxu0 0.0
        %1763 = vmatpush2.msra.mxu0 0.0
        %1764 = vmatprep.subr.mxu0 0.0
        %1765 = vmatpush2.msra.mxu0 0.0
        %1766 = vmatprep.subr.mxu0 0.0
        %1767 = vmatpush2.msra.mxu0 0.0
        %1768 = vmatprep.subr.mxu0 0.0
        %1769 = vmatpush2.msra.mxu0 0.0
        %1770 = vmatprep.mubr.f32.mxu0 0.0
        %1771 = vmatmul.mubr.f32.gmra.mxu0 %v1633
        %v1772 = vpop.f32.mrf.mxu0
        %v1773 = vadd.f32 %v1629, %v1772
        %v1774 = vpop.f32.mrf.mxu0
        %v1775 = vadd.f32 %v1629, %v1774
        %1776 = vdwg.mxu0
        %1777 = vmatprep.subr.mxu0 0.0
        %1778 = vmatpush1.msra.mxu0 0.0
        %1779 = vmatprep.subr.mxu0 0.0
        %1780 = vmatpush1.msra.mxu0 0.0
        %1781 = vmatprep.subr.mxu0 0.0
        %1782 = vmatpush1.msra.mxu0 0.0
        %1783 = vmatprep.subr.mxu0 0.0
        %1784 = vmatpush1.msra.mxu0 0.0
        %1785 = vmatprep.subr.mxu0 0.0
        %1786 = vmatpush1.msra.mxu0 0.0
        %1787 = vmatprep.subr.mxu0 0.0
        %1788 = vmatpush1.msra.mxu0 0.0
        %1789 = vmatprep.subr.mxu0 0.0
        %1790 = vmatpush1.msra.mxu0 0.0
        %1791 = vmatprep.subr.mxu0 %v1621
        %1792 = vmatpush1.msra.mxu0 %v1620
        %1793 = vmatprep.subr.mxu0 %v1543
        %1794 = vmatpush1.msra.mxu0 %v1542
        %1795 = vmatprep.subr.mxu0 %v1465
        %1796 = vmatpush1.msra.mxu0 %v1464
        %1797 = vmatprep.subr.mxu0 %v1387
        %1798 = vmatpush1.msra.mxu0 %v1386
        %1799 = vmatprep.subr.mxu0 %v996
        %1800 = vmatpush1.msra.mxu0 %v995
        %1801 = vmatprep.subr.mxu0 %v1309
        %1802 = vmatpush1.msra.mxu0 %v1308
        %1803 = vmatprep.subr.mxu0 %v1231
        %1804 = vmatpush1.msra.mxu0 %v1230
        %1805 = vmatprep.subr.mxu0 %v1153
        %1806 = vmatpush1.msra.mxu0 %v1152
        %1807 = vmatprep.subr.mxu0 %v1075
        %1808 = vmatpush1.msra.mxu0 %v1074
        %1809 = vmatprep.subr.mxu0 0.0
        %1810 = vmatpush2.msra.mxu0 0.0
        %1811 = vmatprep.subr.mxu0 0.0
        %1812 = vmatpush2.msra.mxu0 0.0
        %1813 = vmatprep.subr.mxu0 0.0
        %1814 = vmatpush2.msra.mxu0 0.0
        %1815 = vmatprep.subr.mxu0 0.0
        %1816 = vmatpush2.msra.mxu0 0.0
        %1817 = vmatprep.subr.mxu0 0.0
        %1818 = vmatpush2.msra.mxu0 0.0
        %1819 = vmatprep.subr.mxu0 0.0
        %1820 = vmatpush2.msra.mxu0 0.0
        %1821 = vmatprep.subr.mxu0 0.0
        %1822 = vmatpush2.msra.mxu0 0.0
        %1823 = vmatprep.subr.mxu0 0.0
        %1824 = vmatpush2.msra.mxu0 0.0
        %1825 = vmatprep.subr.mxu0 0.0
        %1826 = vmatpush2.msra.mxu0 0.0
        %1827 = vmatprep.subr.mxu0 0.0
        %1828 = vmatpush2.msra.mxu0 0.0
        %1829 = vmatprep.subr.mxu0 0.0
        %1830 = vmatpush2.msra.mxu0 0.0
        %1831 = vmatprep.subr.mxu0 0.0
        %1832 = vmatpush2.msra.mxu0 0.0
        %1833 = vmatprep.subr.mxu0 0.0
        %1834 = vmatpush2.msra.mxu0 0.0
        %1835 = vmatprep.subr.mxu0 0.0
        %1836 = vmatpush2.msra.mxu0 0.0
        %1837 = vmatprep.subr.mxu0 0.0
        %1838 = vmatpush2.msra.mxu0 0.0
        %1839 = vmatprep.subr.mxu0 0.0
        %1840 = vmatpush2.msra.mxu0 0.0
        %1841 = vmatprep.mubr.f32.mxu0 0.0
        %1842 = vmatmul.mubr.f32.gmra.mxu0 %v1633
        %v1843 = vpop.f32.mrf.mxu0
        %v1844 = vadd.f32 %v1629, %v1843
        %v1845 = vpop.f32.mrf.mxu0
        %v1846 = vadd.f32 %v1629, %v1845
        %1847 = vdwg.mxu0
        %1848 = vmatprep.subr.mxu0 0.0
        %1849 = vmatpush1.msra.mxu0 0.0
        %1850 = vmatprep.subr.mxu0 0.0
        %1851 = vmatpush1.msra.mxu0 0.0
        %1852 = vmatprep.subr.mxu0 0.0
        %1853 = vmatpush1.msra.mxu0 0.0
        %1854 = vmatprep.subr.mxu0 0.0
        %1855 = vmatpush1.msra.mxu0 0.0
        %1856 = vmatprep.subr.mxu0 0.0
        %1857 = vmatpush1.msra.mxu0 0.0
        %1858 = vmatprep.subr.mxu0 0.0
        %1859 = vmatpush1.msra.mxu0 0.0
        %1860 = vmatprep.subr.mxu0 0.0
        %1861 = vmatpush1.msra.mxu0 0.0
        %1862 = vmatprep.subr.mxu0 %v1623
        %1863 = vmatpush1.msra.mxu0 %v1622
        %1864 = vmatprep.subr.mxu0 %v1545
        %1865 = vmatpush1.msra.mxu0 %v1544
        %1866 = vmatprep.subr.mxu0 %v1467
        %1867 = vmatpush1.msra.mxu0 %v1466
        %1868 = vmatprep.subr.mxu0 %v1389
        %1869 = vmatpush1.msra.mxu0 %v1388
        %1870 = vmatprep.subr.mxu0 %v998
        %1871 = vmatpush1.msra.mxu0 %v997
        %1872 = vmatprep.subr.mxu0 %v1311
        %1873 = vmatpush1.msra.mxu0 %v1310
        %1874 = vmatprep.subr.mxu0 %v1233
        %1875 = vmatpush1.msra.mxu0 %v1232
        %1876 = vmatprep.subr.mxu0 %v1155
        %1877 = vmatpush1.msra.mxu0 %v1154
        %1878 = vmatprep.subr.mxu0 %v1077
        %1879 = vmatpush1.msra.mxu0 %v1076
        %1880 = vmatprep.subr.mxu0 0.0
        %1881 = vmatpush2.msra.mxu0 0.0
        %1882 = vmatprep.subr.mxu0 0.0
        %1883 = vmatpush2.msra.mxu0 0.0
        %1884 = vmatprep.subr.mxu0 0.0
        %1885 = vmatpush2.msra.mxu0 0.0
        %1886 = vmatprep.subr.mxu0 0.0
        %1887 = vmatpush2.msra.mxu0 0.0
        %1888 = vmatprep.subr.mxu0 0.0
        %1889 = vmatpush2.msra.mxu0 0.0
        %1890 = vmatprep.subr.mxu0 0.0
        %1891 = vmatpush2.msra.mxu0 0.0
        %1892 = vmatprep.subr.mxu0 0.0
        %1893 = vmatpush2.msra.mxu0 0.0
        %1894 = vmatprep.subr.mxu0 0.0
        %1895 = vmatpush2.msra.mxu0 0.0
        %1896 = vmatprep.subr.mxu0 0.0
        %1897 = vmatpush2.msra.mxu0 0.0
        %1898 = vmatprep.subr.mxu0 0.0
        %1899 = vmatpush2.msra.mxu0 0.0
        %1900 = vmatprep.subr.mxu0 0.0
        %1901 = vmatpush2.msra.mxu0 0.0
        %1902 = vmatprep.subr.mxu0 0.0
        %1903 = vmatpush2.msra.mxu0 0.0
        %1904 = vmatprep.subr.mxu0 0.0
        %1905 = vmatpush2.msra.mxu0 0.0
        %1906 = vmatprep.subr.mxu0 0.0
        %1907 = vmatpush2.msra.mxu0 0.0
        %1908 = vmatprep.subr.mxu0 0.0
        %1909 = vmatpush2.msra.mxu0 0.0
        %1910 = vmatprep.subr.mxu0 0.0
        %1911 = vmatpush2.msra.mxu0 0.0
        %1912 = vmatprep.mubr.f32.mxu0 0.0
        %1913 = vmatmul.mubr.f32.gmra.mxu0 %v1633
        %v1914 = vpop.f32.mrf.mxu0
        %v1915 = vadd.f32 %v1629, %v1914
        %v1916 = vpop.f32.mrf.mxu0
        %v1917 = vadd.f32 %v1629, %v1916
        %1918 = vdwg.mxu0
        %1919 = vrot.lane.b32.xlu0 %v1702, 51
        %v1920 = vpop.permute.xlu0 %1919
        %1921 = vrot.lane.b32.xlu0 %v1704, 51
        %v1922 = vpop.permute.xlu0 %1921
        %1923 = vrot.lane.b32.xlu0 %v1773, 51
        %v1924 = vpop.permute.xlu0 %1923
        %1925 = vrot.lane.b32.xlu0 %v1775, 51
        %v1926 = vpop.permute.xlu0 %1925
        %1927 = vrot.lane.b32.xlu0 %v1844, 51
        %v1928 = vpop.permute.xlu0 %1927
        %1929 = vrot.lane.b32.xlu0 %v1846, 51
        %v1930 = vpop.permute.xlu0 %1929
        %1931 = vrot.lane.b32.xlu0 %v1915, 51
        %v1932 = vpop.permute.xlu0 %1931
        %1933 = vrot.lane.b32.xlu0 %v1917, 51
        %v1934 = vpop.permute.xlu0 %1933
        %vm1935 = vcmp.lt.s32.totalorder %v1016, 51
        %v1936 = vsel %vm1935, %v1932, %v1934
        %v1937 = vsel %vm1935, %v1930, %v1932
        %v1938 = vsel %vm1935, %v1928, %v1930
        %v1939 = vsel %vm1935, %v1926, %v1928
        %v1940 = vsel %vm1935, %v1924, %v1926
        %v1941 = vsel %vm1935, %v1922, %v1924
        %v1942 = vsel %vm1935, %v1920, %v1922
        %v1943 = vsel %vm1935, %v1934, %v1920
        %v1944 = vld [vmem:[#allocation7] ss:$8 sm:$0xf]
        %v1945 = vld [vmem:[#allocation7] ss:$8 sm:$0xf0]
        %v1946 = vor.u32 %v1944, %v1945
        %v1948 = vlaneseq
        %v1949 = vshrl.u32 %v1948, 7
        %v1950 = vsub.s32 0, %v1949
        %v1951 = vrot.slane %v1946, %v1950
        %v1952 = vlaneseq
        %v1953 = vshrl.u32 %v1952, 7
        %v1954 = vsub.s32 1, %v1953
        %v1955 = vrot.slane %v1946, %v1954
        %v1956 = vlaneseq
        %v1957 = vshrl.u32 %v1956, 7
        %v1958 = vsub.s32 2, %v1957
        %v1959 = vrot.slane %v1946, %v1958
        %v1960 = vlaneseq
        %v1961 = vshrl.u32 %v1960, 7
        %v1962 = vsub.s32 3, %v1961
        %v1963 = vrot.slane %v1946, %v1962
        %v1964 = vlaneseq
        %v1965 = vshrl.u32 %v1964, 7
        %v1966 = vsub.s32 4, %v1965
        %v1967 = vrot.slane %v1946, %v1966
        %v1968 = vlaneseq
        %v1969 = vshrl.u32 %v1968, 7
        %v1970 = vsub.s32 5, %v1969
        %v1971 = vrot.slane %v1946, %v1970
        %v1972 = vlaneseq
        %v1973 = vshrl.u32 %v1972, 7
        %v1974 = vsub.s32 6, %v1973
        %v1975 = vrot.slane %v1946, %v1974
        %v1976 = vlaneseq
        %v1977 = vshrl.u32 %v1976, 7
        %v1978 = vsub.s32 7, %v1977
        %v1979 = vrot.slane %v1946, %v1978
        %v1988 = vmul.f32 %v1943, %v1951
        %v1989 = vmul.f32 %v1942, %v1955
        %v1990 = vmul.f32 %v1941, %v1959
        %v1991 = vmul.f32 %v1940, %v1963
        %v1992 = vmul.f32 %v1939, %v1967
        %v1993 = vmul.f32 %v1938, %v1971
        %v1994 = vmul.f32 %v1937, %v1975
        %v1995 = vmul.f32 %v1936, %v1979
        %1996 = vrot.lane.b32.xlu0 %v1702, 48
        %v1997 = vpop.permute.xlu0 %1996
        %1998 = vrot.lane.b32.xlu0 %v1704, 48
        %v1999 = vpop.permute.xlu0 %1998
        %2000 = vrot.lane.b32.xlu0 %v1773, 48
        %v2001 = vpop.permute.xlu0 %2000
        %2002 = vrot.lane.b32.xlu0 %v1775, 48
        %v2003 = vpop.permute.xlu0 %2002
        %2004 = vrot.lane.b32.xlu0 %v1844, 48
        %v2005 = vpop.permute.xlu0 %2004
        %2006 = vrot.lane.b32.xlu0 %v1846, 48
        %v2007 = vpop.permute.xlu0 %2006
        %2008 = vrot.lane.b32.xlu0 %v1915, 48
        %v2009 = vpop.permute.xlu0 %2008
        %2010 = vrot.lane.b32.xlu0 %v1917, 48
        %v2011 = vpop.permute.xlu0 %2010
        %vm2012 = vcmp.lt.s32.totalorder %v1016, 48
        %v2013 = vsel %vm2012, %v2009, %v2011
        %v2014 = vsel %vm2012, %v2007, %v2009
        %v2015 = vsel %vm2012, %v2005, %v2007
        %v2016 = vsel %vm2012, %v2003, %v2005
        %v2017 = vsel %vm2012, %v2001, %v2003
        %v2018 = vsel %vm2012, %v1999, %v2001
        %v2019 = vsel %vm2012, %v1997, %v1999
        %v2020 = vsel %vm2012, %v2011, %v1997
        %s2021 = scalar_lea.vmem [#allocation7], 1
        %v2022 = vld [vmem:[%s2021] ss:$8 sm:$0xf]
        %v2023 = vld [vmem:[%s2021] ss:$8 sm:$0xf0]
        %v2024 = vor.u32 %v2022, %v2023
        %v2026 = vlaneseq
        %v2027 = vshrl.u32 %v2026, 7
        %v2028 = vsub.s32 0, %v2027
        %v2029 = vrot.slane %v2024, %v2028
        %v2030 = vlaneseq
        %v2031 = vshrl.u32 %v2030, 7
        %v2032 = vsub.s32 1, %v2031
        %v2033 = vrot.slane %v2024, %v2032
        %v2034 = vlaneseq
        %v2035 = vshrl.u32 %v2034, 7
        %v2036 = vsub.s32 2, %v2035
        %v2037 = vrot.slane %v2024, %v2036
        %v2038 = vlaneseq
        %v2039 = vshrl.u32 %v2038, 7
        %v2040 = vsub.s32 3, %v2039
        %v2041 = vrot.slane %v2024, %v2040
        %v2042 = vlaneseq
        %v2043 = vshrl.u32 %v2042, 7
        %v2044 = vsub.s32 4, %v2043
        %v2045 = vrot.slane %v2024, %v2044
        %v2046 = vlaneseq
        %v2047 = vshrl.u32 %v2046, 7
        %v2048 = vsub.s32 5, %v2047
        %v2049 = vrot.slane %v2024, %v2048
        %v2050 = vlaneseq
        %v2051 = vshrl.u32 %v2050, 7
        %v2052 = vsub.s32 6, %v2051
        %v2053 = vrot.slane %v2024, %v2052
        %v2054 = vlaneseq
        %v2055 = vshrl.u32 %v2054, 7
        %v2056 = vsub.s32 7, %v2055
        %v2057 = vrot.slane %v2024, %v2056
        %v2066 = vmul.f32 %v2020, %v2029
        %v2067 = vmul.f32 %v2019, %v2033
        %v2068 = vmul.f32 %v2018, %v2037
        %v2069 = vmul.f32 %v2017, %v2041
        %v2070 = vmul.f32 %v2016, %v2045
        %v2071 = vmul.f32 %v2015, %v2049
        %v2072 = vmul.f32 %v2014, %v2053
        %v2073 = vmul.f32 %v2013, %v2057
        %2074 = vrot.lane.b32.xlu0 %v1702, 45
        %v2075 = vpop.permute.xlu0 %2074
        %2076 = vrot.lane.b32.xlu0 %v1704, 45
        %v2077 = vpop.permute.xlu0 %2076
        %2078 = vrot.lane.b32.xlu0 %v1773, 45
        %v2079 = vpop.permute.xlu0 %2078
        %2080 = vrot.lane.b32.xlu0 %v1775, 45
        %v2081 = vpop.permute.xlu0 %2080
        %2082 = vrot.lane.b32.xlu0 %v1844, 45
        %v2083 = vpop.permute.xlu0 %2082
        %2084 = vrot.lane.b32.xlu0 %v1846, 45
        %v2085 = vpop.permute.xlu0 %2084
        %2086 = vrot.lane.b32.xlu0 %v1915, 45
        %v2087 = vpop.permute.xlu0 %2086
        %2088 = vrot.lane.b32.xlu0 %v1917, 45
        %v2089 = vpop.permute.xlu0 %2088
        %vm2090 = vcmp.lt.s32.totalorder %v1016, 45
        %v2091 = vsel %vm2090, %v2087, %v2089
        %v2092 = vsel %vm2090, %v2085, %v2087
        %v2093 = vsel %vm2090, %v2083, %v2085
        %v2094 = vsel %vm2090, %v2081, %v2083
        %v2095 = vsel %vm2090, %v2079, %v2081
        %v2096 = vsel %vm2090, %v2077, %v2079
        %v2097 = vsel %vm2090, %v2075, %v2077
        %v2098 = vsel %vm2090, %v2089, %v2075
        %s2099 = scalar_lea.vmem [#allocation7], 2
        %v2100 = vld [vmem:[%s2099] ss:$8 sm:$0xf]
        %v2101 = vld [vmem:[%s2099] ss:$8 sm:$0xf0]
        %v2102 = vor.u32 %v2100, %v2101
        %v2104 = vlaneseq
        %v2105 = vshrl.u32 %v2104, 7
        %v2106 = vsub.s32 0, %v2105
        %v2107 = vrot.slane %v2102, %v2106
        %v2108 = vlaneseq
        %v2109 = vshrl.u32 %v2108, 7
        %v2110 = vsub.s32 1, %v2109
        %v2111 = vrot.slane %v2102, %v2110
        %v2112 = vlaneseq
        %v2113 = vshrl.u32 %v2112, 7
        %v2114 = vsub.s32 2, %v2113
        %v2115 = vrot.slane %v2102, %v2114
        %v2116 = vlaneseq
        %v2117 = vshrl.u32 %v2116, 7
        %v2118 = vsub.s32 3, %v2117
        %v2119 = vrot.slane %v2102, %v2118
        %v2120 = vlaneseq
        %v2121 = vshrl.u32 %v2120, 7
        %v2122 = vsub.s32 4, %v2121
        %v2123 = vrot.slane %v2102, %v2122
        %v2124 = vlaneseq
        %v2125 = vshrl.u32 %v2124, 7
        %v2126 = vsub.s32 5, %v2125
        %v2127 = vrot.slane %v2102, %v2126
        %v2128 = vlaneseq
        %v2129 = vshrl.u32 %v2128, 7
        %v2130 = vsub.s32 6, %v2129
        %v2131 = vrot.slane %v2102, %v2130
        %v2132 = vlaneseq
        %v2133 = vshrl.u32 %v2132, 7
        %v2134 = vsub.s32 7, %v2133
        %v2135 = vrot.slane %v2102, %v2134
        %v2144 = vmul.f32 %v2098, %v2107
        %v2145 = vmul.f32 %v2097, %v2111
        %v2146 = vmul.f32 %v2096, %v2115
        %v2147 = vmul.f32 %v2095, %v2119
        %v2148 = vmul.f32 %v2094, %v2123
        %v2149 = vmul.f32 %v2093, %v2127
        %v2150 = vmul.f32 %v2092, %v2131
        %v2151 = vmul.f32 %v2091, %v2135
        %2152 = vrot.lane.b32.xlu0 %v1702, 3
        %v2153 = vpop.permute.xlu0 %2152
        %2154 = vrot.lane.b32.xlu0 %v1704, 3
        %v2155 = vpop.permute.xlu0 %2154
        %2156 = vrot.lane.b32.xlu0 %v1773, 3
        %v2157 = vpop.permute.xlu0 %2156
        %2158 = vrot.lane.b32.xlu0 %v1775, 3
        %v2159 = vpop.permute.xlu0 %2158
        %2160 = vrot.lane.b32.xlu0 %v1844, 3
        %v2161 = vpop.permute.xlu0 %2160
        %2162 = vrot.lane.b32.xlu0 %v1846, 3
        %v2163 = vpop.permute.xlu0 %2162
        %2164 = vrot.lane.b32.xlu0 %v1915, 3
        %v2165 = vpop.permute.xlu0 %2164
        %2166 = vrot.lane.b32.xlu0 %v1917, 3
        %v2167 = vpop.permute.xlu0 %2166
        %vm2168 = vcmp.lt.s32.totalorder %v1016, 3
        %v2169 = vsel %vm2168, %v2165, %v2167
        %v2170 = vsel %vm2168, %v2163, %v2165
        %v2171 = vsel %vm2168, %v2161, %v2163
        %v2172 = vsel %vm2168, %v2159, %v2161
        %v2173 = vsel %vm2168, %v2157, %v2159
        %v2174 = vsel %vm2168, %v2155, %v2157
        %v2175 = vsel %vm2168, %v2153, %v2155
        %v2176 = vsel %vm2168, %v2167, %v2153
        %s2177 = scalar_lea.vmem [#allocation7], 3
        %v2178 = vld [vmem:[%s2177] ss:$8 sm:$0xf]
        %v2179 = vld [vmem:[%s2177] ss:$8 sm:$0xf0]
        %v2180 = vor.u32 %v2178, %v2179
        %v2182 = vlaneseq
        %v2183 = vshrl.u32 %v2182, 7
        %v2184 = vsub.s32 0, %v2183
        %v2185 = vrot.slane %v2180, %v2184
        %v2186 = vlaneseq
        %v2187 = vshrl.u32 %v2186, 7
        %v2188 = vsub.s32 1, %v2187
        %v2189 = vrot.slane %v2180, %v2188
        %v2190 = vlaneseq
        %v2191 = vshrl.u32 %v2190, 7
        %v2192 = vsub.s32 2, %v2191
        %v2193 = vrot.slane %v2180, %v2192
        %v2194 = vlaneseq
        %v2195 = vshrl.u32 %v2194, 7
        %v2196 = vsub.s32 3, %v2195
        %v2197 = vrot.slane %v2180, %v2196
        %v2198 = vlaneseq
        %v2199 = vshrl.u32 %v2198, 7
        %v2200 = vsub.s32 4, %v2199
        %v2201 = vrot.slane %v2180, %v2200
        %v2202 = vlaneseq
        %v2203 = vshrl.u32 %v2202, 7
        %v2204 = vsub.s32 5, %v2203
        %v2205 = vrot.slane %v2180, %v2204
        %v2206 = vlaneseq
        %v2207 = vshrl.u32 %v2206, 7
        %v2208 = vsub.s32 6, %v2207
        %v2209 = vrot.slane %v2180, %v2208
        %v2210 = vlaneseq
        %v2211 = vshrl.u32 %v2210, 7
        %v2212 = vsub.s32 7, %v2211
        %v2213 = vrot.slane %v2180, %v2212
        %v2222 = vmul.f32 %v2176, %v2185
        %v2223 = vmul.f32 %v2175, %v2189
        %v2224 = vmul.f32 %v2174, %v2193
        %v2225 = vmul.f32 %v2173, %v2197
        %v2226 = vmul.f32 %v2172, %v2201
        %v2227 = vmul.f32 %v2171, %v2205
        %v2228 = vmul.f32 %v2170, %v2209
        %v2229 = vmul.f32 %v2169, %v2213
        %2230 = vrot.lane.b32.xlu0 %v1702, 125
        %v2231 = vpop.permute.xlu0 %2230
        %2232 = vrot.lane.b32.xlu0 %v1704, 125
        %v2233 = vpop.permute.xlu0 %2232
        %2234 = vrot.lane.b32.xlu0 %v1773, 125
        %v2235 = vpop.permute.xlu0 %2234
        %2236 = vrot.lane.b32.xlu0 %v1775, 125
        %v2237 = vpop.permute.xlu0 %2236
        %2238 = vrot.lane.b32.xlu0 %v1844, 125
        %v2239 = vpop.permute.xlu0 %2238
        %2240 = vrot.lane.b32.xlu0 %v1846, 125
        %v2241 = vpop.permute.xlu0 %2240
        %2242 = vrot.lane.b32.xlu0 %v1915, 125
        %v2243 = vpop.permute.xlu0 %2242
        %2244 = vrot.lane.b32.xlu0 %v1917, 125
        %v2245 = vpop.permute.xlu0 %2244
        %vm2246 = vcmp.lt.s32.totalorder %v1016, 125
        %v2247 = vsel %vm2246, %v2243, %v2245
        %v2248 = vsel %vm2246, %v2241, %v2243
        %v2249 = vsel %vm2246, %v2239, %v2241
        %v2250 = vsel %vm2246, %v2237, %v2239
        %v2251 = vsel %vm2246, %v2235, %v2237
        %v2252 = vsel %vm2246, %v2233, %v2235
        %v2253 = vsel %vm2246, %v2231, %v2233
        %v2254 = vsel %vm2246, %v2245, %v2231
        %s2255 = scalar_lea.vmem [#allocation7], 5
        %v2256 = vld [vmem:[%s2255] ss:$8 sm:$0xf]
        %v2257 = vld [vmem:[%s2255] ss:$8 sm:$0xf0]
        %v2258 = vor.u32 %v2256, %v2257
        %v2260 = vlaneseq
        %v2261 = vshrl.u32 %v2260, 7
        %v2262 = vsub.s32 0, %v2261
        %v2263 = vrot.slane %v2258, %v2262
        %v2264 = vlaneseq
        %v2265 = vshrl.u32 %v2264, 7
        %v2266 = vsub.s32 1, %v2265
        %v2267 = vrot.slane %v2258, %v2266
        %v2268 = vlaneseq
        %v2269 = vshrl.u32 %v2268, 7
        %v2270 = vsub.s32 2, %v2269
        %v2271 = vrot.slane %v2258, %v2270
        %v2272 = vlaneseq
        %v2273 = vshrl.u32 %v2272, 7
        %v2274 = vsub.s32 3, %v2273
        %v2275 = vrot.slane %v2258, %v2274
        %v2276 = vlaneseq
        %v2277 = vshrl.u32 %v2276, 7
        %v2278 = vsub.s32 4, %v2277
        %v2279 = vrot.slane %v2258, %v2278
        %v2280 = vlaneseq
        %v2281 = vshrl.u32 %v2280, 7
        %v2282 = vsub.s32 5, %v2281
        %v2283 = vrot.slane %v2258, %v2282
        %v2284 = vlaneseq
        %v2285 = vshrl.u32 %v2284, 7
        %v2286 = vsub.s32 6, %v2285
        %v2287 = vrot.slane %v2258, %v2286
        %v2288 = vlaneseq
        %v2289 = vshrl.u32 %v2288, 7
        %v2290 = vsub.s32 7, %v2289
        %v2291 = vrot.slane %v2258, %v2290
        %v2300 = vmul.f32 %v2253, %v2263
        %v2301 = vmul.f32 %v2252, %v2267
        %v2302 = vmul.f32 %v2251, %v2271
        %v2303 = vmul.f32 %v2250, %v2275
        %v2304 = vmul.f32 %v2249, %v2279
        %v2305 = vmul.f32 %v2248, %v2283
        %v2306 = vmul.f32 %v2247, %v2287
        %v2307 = vmul.f32 %v2254, %v2291
        %2308 = vrot.lane.b32.xlu0 %v1702, 83
        %v2309 = vpop.permute.xlu0 %2308
        %2310 = vrot.lane.b32.xlu0 %v1704, 83
        %v2311 = vpop.permute.xlu0 %2310
        %2312 = vrot.lane.b32.xlu0 %v1773, 83
        %v2313 = vpop.permute.xlu0 %2312
        %2314 = vrot.lane.b32.xlu0 %v1775, 83
        %v2315 = vpop.permute.xlu0 %2314
        %2316 = vrot.lane.b32.xlu0 %v1844, 83
        %v2317 = vpop.permute.xlu0 %2316
        %2318 = vrot.lane.b32.xlu0 %v1846, 83
        %v2319 = vpop.permute.xlu0 %2318
        %2320 = vrot.lane.b32.xlu0 %v1915, 83
        %v2321 = vpop.permute.xlu0 %2320
        %2322 = vrot.lane.b32.xlu0 %v1917, 83
        %v2323 = vpop.permute.xlu0 %2322
        %vm2324 = vcmp.lt.s32.totalorder %v1016, 83
        %v2325 = vsel %vm2324, %v2321, %v2323
        %v2326 = vsel %vm2324, %v2319, %v2321
        %v2327 = vsel %vm2324, %v2317, %v2319
        %v2328 = vsel %vm2324, %v2315, %v2317
        %v2329 = vsel %vm2324, %v2313, %v2315
        %v2330 = vsel %vm2324, %v2311, %v2313
        %v2331 = vsel %vm2324, %v2309, %v2311
        %v2332 = vsel %vm2324, %v2323, %v2309
        %s2333 = scalar_lea.vmem [#allocation7], 6
        %v2334 = vld [vmem:[%s2333] ss:$8 sm:$0xf]
        %v2335 = vld [vmem:[%s2333] ss:$8 sm:$0xf0]
        %v2336 = vor.u32 %v2334, %v2335
        %v2338 = vlaneseq
        %v2339 = vshrl.u32 %v2338, 7
        %v2340 = vsub.s32 0, %v2339
        %v2341 = vrot.slane %v2336, %v2340
        %v2342 = vlaneseq
        %v2343 = vshrl.u32 %v2342, 7
        %v2344 = vsub.s32 1, %v2343
        %v2345 = vrot.slane %v2336, %v2344
        %v2346 = vlaneseq
        %v2347 = vshrl.u32 %v2346, 7
        %v2348 = vsub.s32 2, %v2347
        %v2349 = vrot.slane %v2336, %v2348
        %v2350 = vlaneseq
        %v2351 = vshrl.u32 %v2350, 7
        %v2352 = vsub.s32 3, %v2351
        %v2353 = vrot.slane %v2336, %v2352
        %v2354 = vlaneseq
        %v2355 = vshrl.u32 %v2354, 7
        %v2356 = vsub.s32 4, %v2355
        %v2357 = vrot.slane %v2336, %v2356
        %v2358 = vlaneseq
        %v2359 = vshrl.u32 %v2358, 7
        %v2360 = vsub.s32 5, %v2359
        %v2361 = vrot.slane %v2336, %v2360
        %v2362 = vlaneseq
        %v2363 = vshrl.u32 %v2362, 7
        %v2364 = vsub.s32 6, %v2363
        %v2365 = vrot.slane %v2336, %v2364
        %v2366 = vlaneseq
        %v2367 = vshrl.u32 %v2366, 7
        %v2368 = vsub.s32 7, %v2367
        %v2369 = vrot.slane %v2336, %v2368
        %v2378 = vmul.f32 %v2331, %v2341
        %v2379 = vmul.f32 %v2330, %v2345
        %v2380 = vmul.f32 %v2329, %v2349
        %v2381 = vmul.f32 %v2328, %v2353
        %v2382 = vmul.f32 %v2327, %v2357
        %v2383 = vmul.f32 %v2326, %v2361
        %v2384 = vmul.f32 %v2325, %v2365
        %v2385 = vmul.f32 %v2332, %v2369
        %2386 = vrot.lane.b32.xlu0 %v1702, 80
        %v2387 = vpop.permute.xlu0 %2386
        %2388 = vrot.lane.b32.xlu0 %v1704, 80
        %v2389 = vpop.permute.xlu0 %2388
        %2390 = vrot.lane.b32.xlu0 %v1773, 80
        %v2391 = vpop.permute.xlu0 %2390
        %2392 = vrot.lane.b32.xlu0 %v1775, 80
        %v2393 = vpop.permute.xlu0 %2392
        %2394 = vrot.lane.b32.xlu0 %v1844, 80
        %v2395 = vpop.permute.xlu0 %2394
        %2396 = vrot.lane.b32.xlu0 %v1846, 80
        %v2397 = vpop.permute.xlu0 %2396
        %2398 = vrot.lane.b32.xlu0 %v1915, 80
        %v2399 = vpop.permute.xlu0 %2398
        %2400 = vrot.lane.b32.xlu0 %v1917, 80
        %v2401 = vpop.permute.xlu0 %2400
        %vm2402 = vcmp.lt.s32.totalorder %v1016, 80
        %v2403 = vsel %vm2402, %v2399, %v2401
        %v2404 = vsel %vm2402, %v2397, %v2399
        %v2405 = vsel %vm2402, %v2395, %v2397
        %v2406 = vsel %vm2402, %v2393, %v2395
        %v2407 = vsel %vm2402, %v2391, %v2393
        %v2408 = vsel %vm2402, %v2389, %v2391
        %v2409 = vsel %vm2402, %v2387, %v2389
        %v2410 = vsel %vm2402, %v2401, %v2387
        %s2411 = scalar_lea.vmem [#allocation7], 7
        %v2412 = vld [vmem:[%s2411] ss:$8 sm:$0xf]
        %v2413 = vld [vmem:[%s2411] ss:$8 sm:$0xf0]
        %v2414 = vor.u32 %v2412, %v2413
        %v2416 = vlaneseq
        %v2417 = vshrl.u32 %v2416, 7
        %v2418 = vsub.s32 0, %v2417
        %v2419 = vrot.slane %v2414, %v2418
        %v2420 = vlaneseq
        %v2421 = vshrl.u32 %v2420, 7
        %v2422 = vsub.s32 1, %v2421
        %v2423 = vrot.slane %v2414, %v2422
        %v2424 = vlaneseq
        %v2425 = vshrl.u32 %v2424, 7
        %v2426 = vsub.s32 2, %v2425
        %v2427 = vrot.slane %v2414, %v2426
        %v2428 = vlaneseq
        %v2429 = vshrl.u32 %v2428, 7
        %v2430 = vsub.s32 3, %v2429
        %v2431 = vrot.slane %v2414, %v2430
        %v2432 = vlaneseq
        %v2433 = vshrl.u32 %v2432, 7
        %v2434 = vsub.s32 4, %v2433
        %v2435 = vrot.slane %v2414, %v2434
        %v2436 = vlaneseq
        %v2437 = vshrl.u32 %v2436, 7
        %v2438 = vsub.s32 5, %v2437
        %v2439 = vrot.slane %v2414, %v2438
        %v2440 = vlaneseq
        %v2441 = vshrl.u32 %v2440, 7
        %v2442 = vsub.s32 6, %v2441
        %v2443 = vrot.slane %v2414, %v2442
        %v2444 = vlaneseq
        %v2445 = vshrl.u32 %v2444, 7
        %v2446 = vsub.s32 7, %v2445
        %v2447 = vrot.slane %v2414, %v2446
        %v2456 = vmul.f32 %v2409, %v2419
        %v2457 = vmul.f32 %v2408, %v2423
        %v2458 = vmul.f32 %v2407, %v2427
        %v2459 = vmul.f32 %v2406, %v2431
        %v2460 = vmul.f32 %v2405, %v2435
        %v2461 = vmul.f32 %v2404, %v2439
        %v2462 = vmul.f32 %v2403, %v2443
        %v2463 = vmul.f32 %v2410, %v2447
        %2464 = vrot.lane.b32.xlu0 %v1702, 77
        %v2465 = vpop.permute.xlu0 %2464
        %2466 = vrot.lane.b32.xlu0 %v1704, 77
        %v2467 = vpop.permute.xlu0 %2466
        %2468 = vrot.lane.b32.xlu0 %v1773, 77
        %v2469 = vpop.permute.xlu0 %2468
        %2470 = vrot.lane.b32.xlu0 %v1775, 77
        %v2471 = vpop.permute.xlu0 %2470
        %2472 = vrot.lane.b32.xlu0 %v1844, 77
        %v2473 = vpop.permute.xlu0 %2472
        %2474 = vrot.lane.b32.xlu0 %v1846, 77
        %v2475 = vpop.permute.xlu0 %2474
        %2476 = vrot.lane.b32.xlu0 %v1915, 77
        %v2477 = vpop.permute.xlu0 %2476
        %2478 = vrot.lane.b32.xlu0 %v1917, 77
        %v2479 = vpop.permute.xlu0 %2478
        %vm2480 = vcmp.lt.s32.totalorder %v1016, 77
        %v2481 = vsel %vm2480, %v2477, %v2479
        %v2482 = vsel %vm2480, %v2475, %v2477
        %v2483 = vsel %vm2480, %v2473, %v2475
        %v2484 = vsel %vm2480, %v2471, %v2473
        %v2485 = vsel %vm2480, %v2469, %v2471
        %v2486 = vsel %vm2480, %v2467, %v2469
        %v2487 = vsel %vm2480, %v2465, %v2467
        %v2488 = vsel %vm2480, %v2479, %v2465
        %s2489 = scalar_lea.vmem [#allocation7], 64
        %v2490 = vld [vmem:[%s2489] ss:$8 sm:$0xf]
        %v2491 = vld [vmem:[%s2489] ss:$8 sm:$0xf0]
        %v2492 = vor.u32 %v2490, %v2491
        %v2494 = vlaneseq
        %v2495 = vshrl.u32 %v2494, 7
        %v2496 = vsub.s32 0, %v2495
        %v2497 = vrot.slane %v2492, %v2496
        %v2498 = vlaneseq
        %v2499 = vshrl.u32 %v2498, 7
        %v2500 = vsub.s32 1, %v2499
        %v2501 = vrot.slane %v2492, %v2500
        %v2502 = vlaneseq
        %v2503 = vshrl.u32 %v2502, 7
        %v2504 = vsub.s32 2, %v2503
        %v2505 = vrot.slane %v2492, %v2504
        %v2506 = vlaneseq
        %v2507 = vshrl.u32 %v2506, 7
        %v2508 = vsub.s32 3, %v2507
        %v2509 = vrot.slane %v2492, %v2508
        %v2510 = vlaneseq
        %v2511 = vshrl.u32 %v2510, 7
        %v2512 = vsub.s32 4, %v2511
        %v2513 = vrot.slane %v2492, %v2512
        %v2514 = vlaneseq
        %v2515 = vshrl.u32 %v2514, 7
        %v2516 = vsub.s32 5, %v2515
        %v2517 = vrot.slane %v2492, %v2516
        %v2518 = vlaneseq
        %v2519 = vshrl.u32 %v2518, 7
        %v2520 = vsub.s32 6, %v2519
        %v2521 = vrot.slane %v2492, %v2520
        %v2522 = vlaneseq
        %v2523 = vshrl.u32 %v2522, 7
        %v2524 = vsub.s32 7, %v2523
        %v2525 = vrot.slane %v2492, %v2524
        %v2534 = vmul.f32 %v2487, %v2497
        %v2535 = vmul.f32 %v2486, %v2501
        %v2536 = vmul.f32 %v2485, %v2505
        %v2537 = vmul.f32 %v2484, %v2509
        %v2538 = vmul.f32 %v2483, %v2513
        %v2539 = vmul.f32 %v2482, %v2517
        %v2540 = vmul.f32 %v2481, %v2521
        %v2541 = vmul.f32 %v2488, %v2525
        %v2542 = vld [vmem:[%s5] sm:$0xff]
        %v2543 = vld [vmem:[%s6] sm:$0xff]
        %2545 = vset.pattern.permute.xlu0 0
        %2546 = vperm.xlu0 %2545, %v2543
        %v2547 = vpop.permute.xlu0 %2546
        %v2550 = vsel %vm1631, %v2542, 0
        %2552 = vmatprep.subr.mxu0 0.0
        %2553 = vmatpush1.msra.mxu0 0.0
        %2554 = vmatprep.subr.mxu0 0.0
        %2555 = vmatpush1.msra.mxu0 0.0
        %2556 = vmatprep.subr.mxu0 0.0
        %2557 = vmatpush1.msra.mxu0 0.0
        %2558 = vmatprep.subr.mxu0 0.0
        %2559 = vmatpush1.msra.mxu0 0.0
        %2560 = vmatprep.subr.mxu0 0.0
        %2561 = vmatpush1.msra.mxu0 0.0
        %2562 = vmatprep.subr.mxu0 0.0
        %2563 = vmatpush1.msra.mxu0 0.0
        %2564 = vmatprep.subr.mxu0 0.0
        %2565 = vmatpush1.msra.mxu0 0.0
        %2566 = vmatprep.subr.mxu0 %v2535
        %2567 = vmatpush1.msra.mxu0 %v2534
        %2568 = vmatprep.subr.mxu0 %v2457
        %2569 = vmatpush1.msra.mxu0 %v2456
        %2570 = vmatprep.subr.mxu0 %v2379
        %2571 = vmatpush1.msra.mxu0 %v2378
        %2572 = vmatprep.subr.mxu0 %v2301
        %2573 = vmatpush1.msra.mxu0 %v2300
        %2574 = vmatprep.subr.mxu0 %v1704
        %2575 = vmatpush1.msra.mxu0 %v1702
        %2576 = vmatprep.subr.mxu0 %v2223
        %2577 = vmatpush1.msra.mxu0 %v2222
        %2578 = vmatprep.subr.mxu0 %v2145
        %2579 = vmatpush1.msra.mxu0 %v2144
        %2580 = vmatprep.subr.mxu0 %v2067
        %2581 = vmatpush1.msra.mxu0 %v2066
        %2582 = vmatprep.subr.mxu0 %v1989
        %2583 = vmatpush1.msra.mxu0 %v1988
        %2584 = vmatprep.subr.mxu0 0.0
        %2585 = vmatpush2.msra.mxu0 0.0
        %2586 = vmatprep.subr.mxu0 0.0
        %2587 = vmatpush2.msra.mxu0 0.0
        %2588 = vmatprep.subr.mxu0 0.0
        %2589 = vmatpush2.msra.mxu0 0.0
        %2590 = vmatprep.subr.mxu0 0.0
        %2591 = vmatpush2.msra.mxu0 0.0
        %2592 = vmatprep.subr.mxu0 0.0
        %2593 = vmatpush2.msra.mxu0 0.0
        %2594 = vmatprep.subr.mxu0 0.0
        %2595 = vmatpush2.msra.mxu0 0.0
        %2596 = vmatprep.subr.mxu0 0.0
        %2597 = vmatpush2.msra.mxu0 0.0
        %2598 = vmatprep.subr.mxu0 0.0
        %2599 = vmatpush2.msra.mxu0 0.0
        %2600 = vmatprep.subr.mxu0 0.0
        %2601 = vmatpush2.msra.mxu0 0.0
        %2602 = vmatprep.subr.mxu0 0.0
        %2603 = vmatpush2.msra.mxu0 0.0
        %2604 = vmatprep.subr.mxu0 0.0
        %2605 = vmatpush2.msra.mxu0 0.0
        %2606 = vmatprep.subr.mxu0 0.0
        %2607 = vmatpush2.msra.mxu0 0.0
        %2608 = vmatprep.subr.mxu0 0.0
        %2609 = vmatpush2.msra.mxu0 0.0
        %2610 = vmatprep.subr.mxu0 0.0
        %2611 = vmatpush2.msra.mxu0 0.0
        %2612 = vmatprep.subr.mxu0 0.0
        %2613 = vmatpush2.msra.mxu0 0.0
        %2614 = vmatprep.subr.mxu0 0.0
        %2615 = vmatpush2.msra.mxu0 0.0
        %2616 = vmatprep.mubr.f32.mxu0 0.0
        %2617 = vmatmul.mubr.f32.gmra.mxu0 %v2550
        %v2618 = vpop.f32.mrf.mxu0
        %v2619 = vadd.f32 %v2547, %v2618
        %v2620 = vpop.f32.mrf.mxu0
        %v2621 = vadd.f32 %v2547, %v2620
        %2622 = vdwg.mxu0
        %2623 = vmatprep.subr.mxu0 0.0
        %2624 = vmatpush1.msra.mxu0 0.0
        %2625 = vmatprep.subr.mxu0 0.0
        %2626 = vmatpush1.msra.mxu0 0.0
        %2627 = vmatprep.subr.mxu0 0.0
        %2628 = vmatpush1.msra.mxu0 0.0
        %2629 = vmatprep.subr.mxu0 0.0
        %2630 = vmatpush1.msra.mxu0 0.0
        %2631 = vmatprep.subr.mxu0 0.0
        %2632 = vmatpush1.msra.mxu0 0.0
        %2633 = vmatprep.subr.mxu0 0.0
        %2634 = vmatpush1.msra.mxu0 0.0
        %2635 = vmatprep.subr.mxu0 0.0
        %2636 = vmatpush1.msra.mxu0 0.0
        %2637 = vmatprep.subr.mxu0 %v2537
        %2638 = vmatpush1.msra.mxu0 %v2536
        %2639 = vmatprep.subr.mxu0 %v2459
        %2640 = vmatpush1.msra.mxu0 %v2458
        %2641 = vmatprep.subr.mxu0 %v2381
        %2642 = vmatpush1.msra.mxu0 %v2380
        %2643 = vmatprep.subr.mxu0 %v2303
        %2644 = vmatpush1.msra.mxu0 %v2302
        %2645 = vmatprep.subr.mxu0 %v1775
        %2646 = vmatpush1.msra.mxu0 %v1773
        %2647 = vmatprep.subr.mxu0 %v2225
        %2648 = vmatpush1.msra.mxu0 %v2224
        %2649 = vmatprep.subr.mxu0 %v2147
        %2650 = vmatpush1.msra.mxu0 %v2146
        %2651 = vmatprep.subr.mxu0 %v2069
        %2652 = vmatpush1.msra.mxu0 %v2068
        %2653 = vmatprep.subr.mxu0 %v1991
        %2654 = vmatpush1.msra.mxu0 %v1990
        %2655 = vmatprep.subr.mxu0 0.0
        %2656 = vmatpush2.msra.mxu0 0.0
        %2657 = vmatprep.subr.mxu0 0.0
        %2658 = vmatpush2.msra.mxu0 0.0
        %2659 = vmatprep.subr.mxu0 0.0
        %2660 = vmatpush2.msra.mxu0 0.0
        %2661 = vmatprep.subr.mxu0 0.0
        %2662 = vmatpush2.msra.mxu0 0.0
        %2663 = vmatprep.subr.mxu0 0.0
        %2664 = vmatpush2.msra.mxu0 0.0
        %2665 = vmatprep.subr.mxu0 0.0
        %2666 = vmatpush2.msra.mxu0 0.0
        %2667 = vmatprep.subr.mxu0 0.0
        %2668 = vmatpush2.msra.mxu0 0.0
        %2669 = vmatprep.subr.mxu0 0.0
        %2670 = vmatpush2.msra.mxu0 0.0
        %2671 = vmatprep.subr.mxu0 0.0
        %2672 = vmatpush2.msra.mxu0 0.0
        %2673 = vmatprep.subr.mxu0 0.0
        %2674 = vmatpush2.msra.mxu0 0.0
        %2675 = vmatprep.subr.mxu0 0.0
        %2676 = vmatpush2.msra.mxu0 0.0
        %2677 = vmatprep.subr.mxu0 0.0
        %2678 = vmatpush2.msra.mxu0 0.0
        %2679 = vmatprep.subr.mxu0 0.0
        %2680 = vmatpush2.msra.mxu0 0.0
        %2681 = vmatprep.subr.mxu0 0.0
        %2682 = vmatpush2.msra.mxu0 0.0
        %2683 = vmatprep.subr.mxu0 0.0
        %2684 = vmatpush2.msra.mxu0 0.0
        %2685 = vmatprep.subr.mxu0 0.0
        %2686 = vmatpush2.msra.mxu0 0.0
        %2687 = vmatprep.mubr.f32.mxu0 0.0
        %2688 = vmatmul.mubr.f32.gmra.mxu0 %v2550
        %v2689 = vpop.f32.mrf.mxu0
        %v2690 = vadd.f32 %v2547, %v2689
        %v2691 = vpop.f32.mrf.mxu0
        %v2692 = vadd.f32 %v2547, %v2691
        %2693 = vdwg.mxu0
        %2694 = vmatprep.subr.mxu0 0.0
        %2695 = vmatpush1.msra.mxu0 0.0
        %2696 = vmatprep.subr.mxu0 0.0
        %2697 = vmatpush1.msra.mxu0 0.0
        %2698 = vmatprep.subr.mxu0 0.0
        %2699 = vmatpush1.msra.mxu0 0.0
        %2700 = vmatprep.subr.mxu0 0.0
        %2701 = vmatpush1.msra.mxu0 0.0
        %2702 = vmatprep.subr.mxu0 0.0
        %2703 = vmatpush1.msra.mxu0 0.0
        %2704 = vmatprep.subr.mxu0 0.0
        %2705 = vmatpush1.msra.mxu0 0.0
        %2706 = vmatprep.subr.mxu0 0.0
        %2707 = vmatpush1.msra.mxu0 0.0
        %2708 = vmatprep.subr.mxu0 %v2539
        %2709 = vmatpush1.msra.mxu0 %v2538
        %2710 = vmatprep.subr.mxu0 %v2461
        %2711 = vmatpush1.msra.mxu0 %v2460
        %2712 = vmatprep.subr.mxu0 %v2383
        %2713 = vmatpush1.msra.mxu0 %v2382
        %2714 = vmatprep.subr.mxu0 %v2305
        %2715 = vmatpush1.msra.mxu0 %v2304
        %2716 = vmatprep.subr.mxu0 %v1846
        %2717 = vmatpush1.msra.mxu0 %v1844
        %2718 = vmatprep.subr.mxu0 %v2227
        %2719 = vmatpush1.msra.mxu0 %v2226
        %2720 = vmatprep.subr.mxu0 %v2149
        %2721 = vmatpush1.msra.mxu0 %v2148
        %2722 = vmatprep.subr.mxu0 %v2071
        %2723 = vmatpush1.msra.mxu0 %v2070
        %2724 = vmatprep.subr.mxu0 %v1993
        %2725 = vmatpush1.msra.mxu0 %v1992
        %2726 = vmatprep.subr.mxu0 0.0
        %2727 = vmatpush2.msra.mxu0 0.0
        %2728 = vmatprep.subr.mxu0 0.0
        %2729 = vmatpush2.msra.mxu0 0.0
        %2730 = vmatprep.subr.mxu0 0.0
        %2731 = vmatpush2.msra.mxu0 0.0
        %2732 = vmatprep.subr.mxu0 0.0
        %2733 = vmatpush2.msra.mxu0 0.0
        %2734 = vmatprep.subr.mxu0 0.0
        %2735 = vmatpush2.msra.mxu0 0.0
        %2736 = vmatprep.subr.mxu0 0.0
        %2737 = vmatpush2.msra.mxu0 0.0
        %2738 = vmatprep.subr.mxu0 0.0
        %2739 = vmatpush2.msra.mxu0 0.0
        %2740 = vmatprep.subr.mxu0 0.0
        %2741 = vmatpush2.msra.mxu0 0.0
        %2742 = vmatprep.subr.mxu0 0.0
        %2743 = vmatpush2.msra.mxu0 0.0
        %2744 = vmatprep.subr.mxu0 0.0
        %2745 = vmatpush2.msra.mxu0 0.0
        %2746 = vmatprep.subr.mxu0 0.0
        %2747 = vmatpush2.msra.mxu0 0.0
        %2748 = vmatprep.subr.mxu0 0.0
        %2749 = vmatpush2.msra.mxu0 0.0
        %2750 = vmatprep.subr.mxu0 0.0
        %2751 = vmatpush2.msra.mxu0 0.0
        %2752 = vmatprep.subr.mxu0 0.0
        %2753 = vmatpush2.msra.mxu0 0.0
        %2754 = vmatprep.subr.mxu0 0.0
        %2755 = vmatpush2.msra.mxu0 0.0
        %2756 = vmatprep.subr.mxu0 0.0
        %2757 = vmatpush2.msra.mxu0 0.0
        %2758 = vmatprep.mubr.f32.mxu0 0.0
        %2759 = vmatmul.mubr.f32.gmra.mxu0 %v2550
        %v2760 = vpop.f32.mrf.mxu0
        %v2761 = vadd.f32 %v2547, %v2760
        %v2762 = vpop.f32.mrf.mxu0
        %v2763 = vadd.f32 %v2547, %v2762
        %2764 = vdwg.mxu0
        %2765 = vmatprep.subr.mxu0 0.0
        %2766 = vmatpush1.msra.mxu0 0.0
        %2767 = vmatprep.subr.mxu0 0.0
        %2768 = vmatpush1.msra.mxu0 0.0
        %2769 = vmatprep.subr.mxu0 0.0
        %2770 = vmatpush1.msra.mxu0 0.0
        %2771 = vmatprep.subr.mxu0 0.0
        %2772 = vmatpush1.msra.mxu0 0.0
        %2773 = vmatprep.subr.mxu0 0.0
        %2774 = vmatpush1.msra.mxu0 0.0
        %2775 = vmatprep.subr.mxu0 0.0
        %2776 = vmatpush1.msra.mxu0 0.0
        %2777 = vmatprep.subr.mxu0 0.0
        %2778 = vmatpush1.msra.mxu0 0.0
        %2779 = vmatprep.subr.mxu0 %v2541
        %2780 = vmatpush1.msra.mxu0 %v2540
        %2781 = vmatprep.subr.mxu0 %v2463
        %2782 = vmatpush1.msra.mxu0 %v2462
        %2783 = vmatprep.subr.mxu0 %v2385
        %2784 = vmatpush1.msra.mxu0 %v2384
        %2785 = vmatprep.subr.mxu0 %v2307
        %2786 = vmatpush1.msra.mxu0 %v2306
        %2787 = vmatprep.subr.mxu0 %v1917
        %2788 = vmatpush1.msra.mxu0 %v1915
        %2789 = vmatprep.subr.mxu0 %v2229
        %2790 = vmatpush1.msra.mxu0 %v2228
        %2791 = vmatprep.subr.mxu0 %v2151
        %2792 = vmatpush1.msra.mxu0 %v2150
        %2793 = vmatprep.subr.mxu0 %v2073
        %2794 = vmatpush1.msra.mxu0 %v2072
        %2795 = vmatprep.subr.mxu0 %v1995
        %2796 = vmatpush1.msra.mxu0 %v1994
        %2797 = vmatprep.subr.mxu0 0.0
        %2798 = vmatpush2.msra.mxu0 0.0
        %2799 = vmatprep.subr.mxu0 0.0
        %2800 = vmatpush2.msra.mxu0 0.0
        %2801 = vmatprep.subr.mxu0 0.0
        %2802 = vmatpush2.msra.mxu0 0.0
        %2803 = vmatprep.subr.mxu0 0.0
        %2804 = vmatpush2.msra.mxu0 0.0
        %2805 = vmatprep.subr.mxu0 0.0
        %2806 = vmatpush2.msra.mxu0 0.0
        %2807 = vmatprep.subr.mxu0 0.0
        %2808 = vmatpush2.msra.mxu0 0.0
        %2809 = vmatprep.subr.mxu0 0.0
        %2810 = vmatpush2.msra.mxu0 0.0
        %2811 = vmatprep.subr.mxu0 0.0
        %2812 = vmatpush2.msra.mxu0 0.0
        %2813 = vmatprep.subr.mxu0 0.0
        %2814 = vmatpush2.msra.mxu0 0.0
        %2815 = vmatprep.subr.mxu0 0.0
        %2816 = vmatpush2.msra.mxu0 0.0
        %2817 = vmatprep.subr.mxu0 0.0
        %2818 = vmatpush2.msra.mxu0 0.0
        %2819 = vmatprep.subr.mxu0 0.0
        %2820 = vmatpush2.msra.mxu0 0.0
        %2821 = vmatprep.subr.mxu0 0.0
        %2822 = vmatpush2.msra.mxu0 0.0
        %2823 = vmatprep.subr.mxu0 0.0
        %2824 = vmatpush2.msra.mxu0 0.0
        %2825 = vmatprep.subr.mxu0 0.0
        %2826 = vmatpush2.msra.mxu0 0.0
        %2827 = vmatprep.subr.mxu0 0.0
        %2828 = vmatpush2.msra.mxu0 0.0
        %2829 = vmatprep.mubr.f32.mxu0 0.0
        %2830 = vmatmul.mubr.f32.gmra.mxu0 %v2550
        %v2831 = vpop.f32.mrf.mxu0
        %v2832 = vadd.f32 %v2547, %v2831
        %v2833 = vpop.f32.mrf.mxu0
        %v2834 = vadd.f32 %v2547, %v2833
        %2835 = vdwg.mxu0
        %v2836 = vld [vmem:[%s7] sm:$0xff]
        %v2837 = vld [vmem:[%s8] sm:$0xff]
        %2839 = vset.pattern.permute.xlu0 0
        %2840 = vperm.xlu0 %2839, %v2837
        %v2841 = vpop.permute.xlu0 %2840
        %v2844 = vsel %vm503, %v2836, 0
        %2846 = vmatprep.subr.mxu0 0.0
        %2847 = vmatpush1.msra.mxu0 0.0
        %2848 = vmatprep.subr.mxu0 0.0
        %2849 = vmatpush1.msra.mxu0 0.0
        %2850 = vmatprep.subr.mxu0 0.0
        %2851 = vmatpush1.msra.mxu0 0.0
        %2852 = vmatprep.subr.mxu0 0.0
        %2853 = vmatpush1.msra.mxu0 0.0
        %2854 = vmatprep.subr.mxu0 0.0
        %2855 = vmatpush1.msra.mxu0 0.0
        %2856 = vmatprep.subr.mxu0 0.0
        %2857 = vmatpush1.msra.mxu0 0.0
        %2858 = vmatprep.subr.mxu0 0.0
        %2859 = vmatpush1.msra.mxu0 0.0
        %2860 = vmatprep.subr.mxu0 0.0
        %2861 = vmatpush1.msra.mxu0 0.0
        %2862 = vmatprep.subr.mxu0 0.0
        %2863 = vmatpush1.msra.mxu0 0.0
        %2864 = vmatprep.subr.mxu0 0.0
        %2865 = vmatpush1.msra.mxu0 0.0
        %2866 = vmatprep.subr.mxu0 0.0
        %2867 = vmatpush1.msra.mxu0 0.0
        %2868 = vmatprep.subr.mxu0 0.0
        %2869 = vmatpush1.msra.mxu0 0.0
        %2870 = vmatprep.subr.mxu0 0.0
        %2871 = vmatpush1.msra.mxu0 0.0
        %2872 = vmatprep.subr.mxu0 0.0
        %2873 = vmatpush1.msra.mxu0 0.0
        %2874 = vmatprep.subr.mxu0 0.0
        %2875 = vmatpush1.msra.mxu0 0.0
        %2876 = vmatprep.subr.mxu0 %v2621
        %2877 = vmatpush1.msra.mxu0 %v2619
        %2878 = vmatprep.subr.mxu0 0.0
        %2879 = vmatpush2.msra.mxu0 0.0
        %2880 = vmatprep.subr.mxu0 0.0
        %2881 = vmatpush2.msra.mxu0 0.0
        %2882 = vmatprep.subr.mxu0 0.0
        %2883 = vmatpush2.msra.mxu0 0.0
        %2884 = vmatprep.subr.mxu0 0.0
        %2885 = vmatpush2.msra.mxu0 0.0
        %2886 = vmatprep.subr.mxu0 0.0
        %2887 = vmatpush2.msra.mxu0 0.0
        %2888 = vmatprep.subr.mxu0 0.0
        %2889 = vmatpush2.msra.mxu0 0.0
        %2890 = vmatprep.subr.mxu0 0.0
        %2891 = vmatpush2.msra.mxu0 0.0
        %2892 = vmatprep.subr.mxu0 0.0
        %2893 = vmatpush2.msra.mxu0 0.0
        %2894 = vmatprep.subr.mxu0 0.0
        %2895 = vmatpush2.msra.mxu0 0.0
        %2896 = vmatprep.subr.mxu0 0.0
        %2897 = vmatpush2.msra.mxu0 0.0
        %2898 = vmatprep.subr.mxu0 0.0
        %2899 = vmatpush2.msra.mxu0 0.0
        %2900 = vmatprep.subr.mxu0 0.0
        %2901 = vmatpush2.msra.mxu0 0.0
        %2902 = vmatprep.subr.mxu0 0.0
        %2903 = vmatpush2.msra.mxu0 0.0
        %2904 = vmatprep.subr.mxu0 0.0
        %2905 = vmatpush2.msra.mxu0 0.0
        %2906 = vmatprep.subr.mxu0 0.0
        %2907 = vmatpush2.msra.mxu0 0.0
        %2908 = vmatprep.subr.mxu0 0.0
        %2909 = vmatpush2.msra.mxu0 0.0
        %2910 = vmatprep.mubr.f32.mxu0 0.0
        %2911 = vmatmul.mubr.f32.gmra.mxu0 %v2844
        %v2912 = vpop.f32.mrf.mxu0
        %v2913 = vadd.f32 %v2841, %v2912
        %v2914 = vpop.f32.mrf.mxu0
        %v2915 = vadd.f32 %v2841, %v2914
        %2916 = vdwg.mxu0
        %2917 = vmatprep.subr.mxu0 0.0
        %2918 = vmatpush1.msra.mxu0 0.0
        %2919 = vmatprep.subr.mxu0 0.0
        %2920 = vmatpush1.msra.mxu0 0.0
        %2921 = vmatprep.subr.mxu0 0.0
        %2922 = vmatpush1.msra.mxu0 0.0
        %2923 = vmatprep.subr.mxu0 0.0
        %2924 = vmatpush1.msra.mxu0 0.0
        %2925 = vmatprep.subr.mxu0 0.0
        %2926 = vmatpush1.msra.mxu0 0.0
        %2927 = vmatprep.subr.mxu0 0.0
        %2928 = vmatpush1.msra.mxu0 0.0
        %2929 = vmatprep.subr.mxu0 0.0
        %2930 = vmatpush1.msra.mxu0 0.0
        %2931 = vmatprep.subr.mxu0 0.0
        %2932 = vmatpush1.msra.mxu0 0.0
        %2933 = vmatprep.subr.mxu0 0.0
        %2934 = vmatpush1.msra.mxu0 0.0
        %2935 = vmatprep.subr.mxu0 0.0
        %2936 = vmatpush1.msra.mxu0 0.0
        %2937 = vmatprep.subr.mxu0 0.0
        %2938 = vmatpush1.msra.mxu0 0.0
        %2939 = vmatprep.subr.mxu0 0.0
        %2940 = vmatpush1.msra.mxu0 0.0
        %2941 = vmatprep.subr.mxu0 0.0
        %2942 = vmatpush1.msra.mxu0 0.0
        %2943 = vmatprep.subr.mxu0 0.0
        %2944 = vmatpush1.msra.mxu0 0.0
        %2945 = vmatprep.subr.mxu0 0.0
        %2946 = vmatpush1.msra.mxu0 0.0
        %2947 = vmatprep.subr.mxu0 %v2692
        %2948 = vmatpush1.msra.mxu0 %v2690
        %2949 = vmatprep.subr.mxu0 0.0
        %2950 = vmatpush2.msra.mxu0 0.0
        %2951 = vmatprep.subr.mxu0 0.0
        %2952 = vmatpush2.msra.mxu0 0.0
        %2953 = vmatprep.subr.mxu0 0.0
        %2954 = vmatpush2.msra.mxu0 0.0
        %2955 = vmatprep.subr.mxu0 0.0
        %2956 = vmatpush2.msra.mxu0 0.0
        %2957 = vmatprep.subr.mxu0 0.0
        %2958 = vmatpush2.msra.mxu0 0.0
        %2959 = vmatprep.subr.mxu0 0.0
        %2960 = vmatpush2.msra.mxu0 0.0
        %2961 = vmatprep.subr.mxu0 0.0
        %2962 = vmatpush2.msra.mxu0 0.0
        %2963 = vmatprep.subr.mxu0 0.0
        %2964 = vmatpush2.msra.mxu0 0.0
        %2965 = vmatprep.subr.mxu0 0.0
        %2966 = vmatpush2.msra.mxu0 0.0
        %2967 = vmatprep.subr.mxu0 0.0
        %2968 = vmatpush2.msra.mxu0 0.0
        %2969 = vmatprep.subr.mxu0 0.0
        %2970 = vmatpush2.msra.mxu0 0.0
        %2971 = vmatprep.subr.mxu0 0.0
        %2972 = vmatpush2.msra.mxu0 0.0
        %2973 = vmatprep.subr.mxu0 0.0
        %2974 = vmatpush2.msra.mxu0 0.0
        %2975 = vmatprep.subr.mxu0 0.0
        %2976 = vmatpush2.msra.mxu0 0.0
        %2977 = vmatprep.subr.mxu0 0.0
        %2978 = vmatpush2.msra.mxu0 0.0
        %2979 = vmatprep.subr.mxu0 0.0
        %2980 = vmatpush2.msra.mxu0 0.0
        %2981 = vmatprep.mubr.f32.mxu0 0.0
        %2982 = vmatmul.mubr.f32.gmra.mxu0 %v2844
        %v2983 = vpop.f32.mrf.mxu0
        %v2984 = vadd.f32 %v2841, %v2983
        %v2985 = vpop.f32.mrf.mxu0
        %v2986 = vadd.f32 %v2841, %v2985
        %2987 = vdwg.mxu0
        %2988 = vmatprep.subr.mxu0 0.0
        %2989 = vmatpush1.msra.mxu0 0.0
        %2990 = vmatprep.subr.mxu0 0.0
        %2991 = vmatpush1.msra.mxu0 0.0
        %2992 = vmatprep.subr.mxu0 0.0
        %2993 = vmatpush1.msra.mxu0 0.0
        %2994 = vmatprep.subr.mxu0 0.0
        %2995 = vmatpush1.msra.mxu0 0.0
        %2996 = vmatprep.subr.mxu0 0.0
        %2997 = vmatpush1.msra.mxu0 0.0
        %2998 = vmatprep.subr.mxu0 0.0
        %2999 = vmatpush1.msra.mxu0 0.0
        %3000 = vmatprep.subr.mxu0 0.0
        %3001 = vmatpush1.msra.mxu0 0.0
        %3002 = vmatprep.subr.mxu0 0.0
        %3003 = vmatpush1.msra.mxu0 0.0
        %3004 = vmatprep.subr.mxu0 0.0
        %3005 = vmatpush1.msra.mxu0 0.0
        %3006 = vmatprep.subr.mxu0 0.0
        %3007 = vmatpush1.msra.mxu0 0.0
        %3008 = vmatprep.subr.mxu0 0.0
        %3009 = vmatpush1.msra.mxu0 0.0
        %3010 = vmatprep.subr.mxu0 0.0
        %3011 = vmatpush1.msra.mxu0 0.0
        %3012 = vmatprep.subr.mxu0 0.0
        %3013 = vmatpush1.msra.mxu0 0.0
        %3014 = vmatprep.subr.mxu0 0.0
        %3015 = vmatpush1.msra.mxu0 0.0
        %3016 = vmatprep.subr.mxu0 0.0
        %3017 = vmatpush1.msra.mxu0 0.0
        %3018 = vmatprep.subr.mxu0 %v2763
        %3019 = vmatpush1.msra.mxu0 %v2761
        %3020 = vmatprep.subr.mxu0 0.0
        %3021 = vmatpush2.msra.mxu0 0.0
        %3022 = vmatprep.subr.mxu0 0.0
        %3023 = vmatpush2.msra.mxu0 0.0
        %3024 = vmatprep.subr.mxu0 0.0
        %3025 = vmatpush2.msra.mxu0 0.0
        %3026 = vmatprep.subr.mxu0 0.0
        %3027 = vmatpush2.msra.mxu0 0.0
        %3028 = vmatprep.subr.mxu0 0.0
        %3029 = vmatpush2.msra.mxu0 0.0
        %3030 = vmatprep.subr.mxu0 0.0
        %3031 = vmatpush2.msra.mxu0 0.0
        %3032 = vmatprep.subr.mxu0 0.0
        %3033 = vmatpush2.msra.mxu0 0.0
        %3034 = vmatprep.subr.mxu0 0.0
        %3035 = vmatpush2.msra.mxu0 0.0
        %3036 = vmatprep.subr.mxu0 0.0
        %3037 = vmatpush2.msra.mxu0 0.0
        %3038 = vmatprep.subr.mxu0 0.0
        %3039 = vmatpush2.msra.mxu0 0.0
        %3040 = vmatprep.subr.mxu0 0.0
        %3041 = vmatpush2.msra.mxu0 0.0
        %3042 = vmatprep.subr.mxu0 0.0
        %3043 = vmatpush2.msra.mxu0 0.0
        %3044 = vmatprep.subr.mxu0 0.0
        %3045 = vmatpush2.msra.mxu0 0.0
        %3046 = vmatprep.subr.mxu0 0.0
        %3047 = vmatpush2.msra.mxu0 0.0
        %3048 = vmatprep.subr.mxu0 0.0
        %3049 = vmatpush2.msra.mxu0 0.0
        %3050 = vmatprep.subr.mxu0 0.0
        %3051 = vmatpush2.msra.mxu0 0.0
        %3052 = vmatprep.mubr.f32.mxu0 0.0
        %3053 = vmatmul.mubr.f32.gmra.mxu0 %v2844
        %v3054 = vpop.f32.mrf.mxu0
        %v3055 = vadd.f32 %v2841, %v3054
        %v3056 = vpop.f32.mrf.mxu0
        %v3057 = vadd.f32 %v2841, %v3056
        %3058 = vdwg.mxu0
        %3059 = vmatprep.subr.mxu0 0.0
        %3060 = vmatpush1.msra.mxu0 0.0
        %3061 = vmatprep.subr.mxu0 0.0
        %3062 = vmatpush1.msra.mxu0 0.0
        %3063 = vmatprep.subr.mxu0 0.0
        %3064 = vmatpush1.msra.mxu0 0.0
        %3065 = vmatprep.subr.mxu0 0.0
        %3066 = vmatpush1.msra.mxu0 0.0
        %3067 = vmatprep.subr.mxu0 0.0
        %3068 = vmatpush1.msra.mxu0 0.0
        %3069 = vmatprep.subr.mxu0 0.0
        %3070 = vmatpush1.msra.mxu0 0.0
        %3071 = vmatprep.subr.mxu0 0.0
        %3072 = vmatpush1.msra.mxu0 0.0
        %3073 = vmatprep.subr.mxu0 0.0
        %3074 = vmatpush1.msra.mxu0 0.0
        %3075 = vmatprep.subr.mxu0 0.0
        %3076 = vmatpush1.msra.mxu0 0.0
        %3077 = vmatprep.subr.mxu0 0.0
        %3078 = vmatpush1.msra.mxu0 0.0
        %3079 = vmatprep.subr.mxu0 0.0
        %3080 = vmatpush1.msra.mxu0 0.0
        %3081 = vmatprep.subr.mxu0 0.0
        %3082 = vmatpush1.msra.mxu0 0.0
        %3083 = vmatprep.subr.mxu0 0.0
        %3084 = vmatpush1.msra.mxu0 0.0
        %3085 = vmatprep.subr.mxu0 0.0
        %3086 = vmatpush1.msra.mxu0 0.0
        %3087 = vmatprep.subr.mxu0 0.0
        %3088 = vmatpush1.msra.mxu0 0.0
        %3089 = vmatprep.subr.mxu0 %v2834
        %3090 = vmatpush1.msra.mxu0 %v2832
        %3091 = vmatprep.subr.mxu0 0.0
        %3092 = vmatpush2.msra.mxu0 0.0
        %3093 = vmatprep.subr.mxu0 0.0
        %3094 = vmatpush2.msra.mxu0 0.0
        %3095 = vmatprep.subr.mxu0 0.0
        %3096 = vmatpush2.msra.mxu0 0.0
        %3097 = vmatprep.subr.mxu0 0.0
        %3098 = vmatpush2.msra.mxu0 0.0
        %3099 = vmatprep.subr.mxu0 0.0
        %3100 = vmatpush2.msra.mxu0 0.0
        %3101 = vmatprep.subr.mxu0 0.0
        %3102 = vmatpush2.msra.mxu0 0.0
        %3103 = vmatprep.subr.mxu0 0.0
        %3104 = vmatpush2.msra.mxu0 0.0
        %3105 = vmatprep.subr.mxu0 0.0
        %3106 = vmatpush2.msra.mxu0 0.0
        %3107 = vmatprep.subr.mxu0 0.0
        %3108 = vmatpush2.msra.mxu0 0.0
        %3109 = vmatprep.subr.mxu0 0.0
        %3110 = vmatpush2.msra.mxu0 0.0
        %3111 = vmatprep.subr.mxu0 0.0
        %3112 = vmatpush2.msra.mxu0 0.0
        %3113 = vmatprep.subr.mxu0 0.0
        %3114 = vmatpush2.msra.mxu0 0.0
        %3115 = vmatprep.subr.mxu0 0.0
        %3116 = vmatpush2.msra.mxu0 0.0
        %3117 = vmatprep.subr.mxu0 0.0
        %3118 = vmatpush2.msra.mxu0 0.0
        %3119 = vmatprep.subr.mxu0 0.0
        %3120 = vmatpush2.msra.mxu0 0.0
        %3121 = vmatprep.subr.mxu0 0.0
        %3122 = vmatpush2.msra.mxu0 0.0
        %3123 = vmatprep.mubr.f32.mxu0 0.0
        %3124 = vmatmul.mubr.f32.gmra.mxu0 %v2844
        %v3125 = vpop.f32.mrf.mxu0
        %v3126 = vadd.f32 %v2841, %v3125
        %v3127 = vpop.f32.mrf.mxu0
        %v3128 = vadd.f32 %v2841, %v3127
        %3129 = vdwg.mxu0
        %v3130 = vmul.f32 %v991, %v2913
        %v3131 = vmul.f32 %v992, %v2915
        %v3132 = vmul.f32 %v993, %v2984
        %v3133 = vmul.f32 %v994, %v2986
        %v3134 = vmul.f32 %v995, %v3055
        %v3135 = vmul.f32 %v996, %v3057
        %v3136 = vmul.f32 %v997, %v3126
        %v3137 = vmul.f32 %v998, %v3128
        %v3138 = vld [vmem:[%s9] sm:$0xff]
        %v3139 = vld [vmem:[%s10] sm:$0xff]
        %3141 = vset.pattern.permute.xlu0 0
        %3142 = vperm.xlu0 %3141, %v3139
        %v3143 = vpop.permute.xlu0 %3142
        %v3146 = vsel %vm503, %v3138, 0
        %3148 = vmatprep.subr.mxu0 0.0
        %3149 = vmatpush1.msra.mxu0 0.0
        %3150 = vmatprep.subr.mxu0 0.0
        %3151 = vmatpush1.msra.mxu0 0.0
        %3152 = vmatprep.subr.mxu0 0.0
        %3153 = vmatpush1.msra.mxu0 0.0
        %3154 = vmatprep.subr.mxu0 0.0
        %3155 = vmatpush1.msra.mxu0 0.0
        %3156 = vmatprep.subr.mxu0 0.0
        %3157 = vmatpush1.msra.mxu0 0.0
        %3158 = vmatprep.subr.mxu0 0.0
        %3159 = vmatpush1.msra.mxu0 0.0
        %3160 = vmatprep.subr.mxu0 0.0
        %3161 = vmatpush1.msra.mxu0 0.0
        %3162 = vmatprep.subr.mxu0 0.0
        %3163 = vmatpush1.msra.mxu0 0.0
        %3164 = vmatprep.subr.mxu0 0.0
        %3165 = vmatpush1.msra.mxu0 0.0
        %3166 = vmatprep.subr.mxu0 0.0
        %3167 = vmatpush1.msra.mxu0 0.0
        %3168 = vmatprep.subr.mxu0 0.0
        %3169 = vmatpush1.msra.mxu0 0.0
        %3170 = vmatprep.subr.mxu0 0.0
        %3171 = vmatpush1.msra.mxu0 0.0
        %3172 = vmatprep.subr.mxu0 0.0
        %3173 = vmatpush1.msra.mxu0 0.0
        %3174 = vmatprep.subr.mxu0 0.0
        %3175 = vmatpush1.msra.mxu0 0.0
        %3176 = vmatprep.subr.mxu0 0.0
        %3177 = vmatpush1.msra.mxu0 0.0
        %3178 = vmatprep.subr.mxu0 %v3131
        %3179 = vmatpush1.msra.mxu0 %v3130
        %3180 = vmatprep.subr.mxu0 0.0
        %3181 = vmatpush2.msra.mxu0 0.0
        %3182 = vmatprep.subr.mxu0 0.0
        %3183 = vmatpush2.msra.mxu0 0.0
        %3184 = vmatprep.subr.mxu0 0.0
        %3185 = vmatpush2.msra.mxu0 0.0
        %3186 = vmatprep.subr.mxu0 0.0
        %3187 = vmatpush2.msra.mxu0 0.0
        %3188 = vmatprep.subr.mxu0 0.0
        %3189 = vmatpush2.msra.mxu0 0.0
        %3190 = vmatprep.subr.mxu0 0.0
        %3191 = vmatpush2.msra.mxu0 0.0
        %3192 = vmatprep.subr.mxu0 0.0
        %3193 = vmatpush2.msra.mxu0 0.0
        %3194 = vmatprep.subr.mxu0 0.0
        %3195 = vmatpush2.msra.mxu0 0.0
        %3196 = vmatprep.subr.mxu0 0.0
        %3197 = vmatpush2.msra.mxu0 0.0
        %3198 = vmatprep.subr.mxu0 0.0
        %3199 = vmatpush2.msra.mxu0 0.0
        %3200 = vmatprep.subr.mxu0 0.0
        %3201 = vmatpush2.msra.mxu0 0.0
        %3202 = vmatprep.subr.mxu0 0.0
        %3203 = vmatpush2.msra.mxu0 0.0
        %3204 = vmatprep.subr.mxu0 0.0
        %3205 = vmatpush2.msra.mxu0 0.0
        %3206 = vmatprep.subr.mxu0 0.0
        %3207 = vmatpush2.msra.mxu0 0.0
        %3208 = vmatprep.subr.mxu0 0.0
        %3209 = vmatpush2.msra.mxu0 0.0
        %3210 = vmatprep.subr.mxu0 0.0
        %3211 = vmatpush2.msra.mxu0 0.0
        %3212 = vmatprep.mubr.f32.mxu0 0.0
        %3213 = vmatmul.mubr.f32.gmra.mxu0 %v3146
        %v3214 = vpop.f32.mrf.mxu0
        %v3215 = vadd.f32 %v3143, %v3214
        %v3216 = vpop.f32.mrf.mxu0
        %v3217 = vadd.f32 %v3143, %v3216
        %3218 = vdwg.mxu0
        %3219 = vmatprep.subr.mxu0 0.0
        %3220 = vmatpush1.msra.mxu0 0.0
        %3221 = vmatprep.subr.mxu0 0.0
        %3222 = vmatpush1.msra.mxu0 0.0
        %3223 = vmatprep.subr.mxu0 0.0
        %3224 = vmatpush1.msra.mxu0 0.0
        %3225 = vmatprep.subr.mxu0 0.0
        %3226 = vmatpush1.msra.mxu0 0.0
        %3227 = vmatprep.subr.mxu0 0.0
        %3228 = vmatpush1.msra.mxu0 0.0
        %3229 = vmatprep.subr.mxu0 0.0
        %3230 = vmatpush1.msra.mxu0 0.0
        %3231 = vmatprep.subr.mxu0 0.0
        %3232 = vmatpush1.msra.mxu0 0.0
        %3233 = vmatprep.subr.mxu0 0.0
        %3234 = vmatpush1.msra.mxu0 0.0
        %3235 = vmatprep.subr.mxu0 0.0
        %3236 = vmatpush1.msra.mxu0 0.0
        %3237 = vmatprep.subr.mxu0 0.0
        %3238 = vmatpush1.msra.mxu0 0.0
        %3239 = vmatprep.subr.mxu0 0.0
        %3240 = vmatpush1.msra.mxu0 0.0
        %3241 = vmatprep.subr.mxu0 0.0
        %3242 = vmatpush1.msra.mxu0 0.0
        %3243 = vmatprep.subr.mxu0 0.0
        %3244 = vmatpush1.msra.mxu0 0.0
        %3245 = vmatprep.subr.mxu0 0.0
        %3246 = vmatpush1.msra.mxu0 0.0
        %3247 = vmatprep.subr.mxu0 0.0
        %3248 = vmatpush1.msra.mxu0 0.0
        %3249 = vmatprep.subr.mxu0 %v3133
        %3250 = vmatpush1.msra.mxu0 %v3132
        %3251 = vmatprep.subr.mxu0 0.0
        %3252 = vmatpush2.msra.mxu0 0.0
        %3253 = vmatprep.subr.mxu0 0.0
        %3254 = vmatpush2.msra.mxu0 0.0
        %3255 = vmatprep.subr.mxu0 0.0
        %3256 = vmatpush2.msra.mxu0 0.0
        %3257 = vmatprep.subr.mxu0 0.0
        %3258 = vmatpush2.msra.mxu0 0.0
        %3259 = vmatprep.subr.mxu0 0.0
        %3260 = vmatpush2.msra.mxu0 0.0
        %3261 = vmatprep.subr.mxu0 0.0
        %3262 = vmatpush2.msra.mxu0 0.0
        %3263 = vmatprep.subr.mxu0 0.0
        %3264 = vmatpush2.msra.mxu0 0.0
        %3265 = vmatprep.subr.mxu0 0.0
        %3266 = vmatpush2.msra.mxu0 0.0
        %3267 = vmatprep.subr.mxu0 0.0
        %3268 = vmatpush2.msra.mxu0 0.0
        %3269 = vmatprep.subr.mxu0 0.0
        %3270 = vmatpush2.msra.mxu0 0.0
        %3271 = vmatprep.subr.mxu0 0.0
        %3272 = vmatpush2.msra.mxu0 0.0
        %3273 = vmatprep.subr.mxu0 0.0
        %3274 = vmatpush2.msra.mxu0 0.0
        %3275 = vmatprep.subr.mxu0 0.0
        %3276 = vmatpush2.msra.mxu0 0.0
        %3277 = vmatprep.subr.mxu0 0.0
        %3278 = vmatpush2.msra.mxu0 0.0
        %3279 = vmatprep.subr.mxu0 0.0
        %3280 = vmatpush2.msra.mxu0 0.0
        %3281 = vmatprep.subr.mxu0 0.0
        %3282 = vmatpush2.msra.mxu0 0.0
        %3283 = vmatprep.mubr.f32.mxu0 0.0
        %3284 = vmatmul.mubr.f32.gmra.mxu0 %v3146
        %v3285 = vpop.f32.mrf.mxu0
        %v3286 = vadd.f32 %v3143, %v3285
        %v3287 = vpop.f32.mrf.mxu0
        %v3288 = vadd.f32 %v3143, %v3287
        %3289 = vdwg.mxu0
        %3290 = vmatprep.subr.mxu0 0.0
        %3291 = vmatpush1.msra.mxu0 0.0
        %3292 = vmatprep.subr.mxu0 0.0
        %3293 = vmatpush1.msra.mxu0 0.0
        %3294 = vmatprep.subr.mxu0 0.0
        %3295 = vmatpush1.msra.mxu0 0.0
        %3296 = vmatprep.subr.mxu0 0.0
        %3297 = vmatpush1.msra.mxu0 0.0
        %3298 = vmatprep.subr.mxu0 0.0
        %3299 = vmatpush1.msra.mxu0 0.0
        %3300 = vmatprep.subr.mxu0 0.0
        %3301 = vmatpush1.msra.mxu0 0.0
        %3302 = vmatprep.subr.mxu0 0.0
        %3303 = vmatpush1.msra.mxu0 0.0
        %3304 = vmatprep.subr.mxu0 0.0
        %3305 = vmatpush1.msra.mxu0 0.0
        %3306 = vmatprep.subr.mxu0 0.0
        %3307 = vmatpush1.msra.mxu0 0.0
        %3308 = vmatprep.subr.mxu0 0.0
        %3309 = vmatpush1.msra.mxu0 0.0
        %3310 = vmatprep.subr.mxu0 0.0
        %3311 = vmatpush1.msra.mxu0 0.0
        %3312 = vmatprep.subr.mxu0 0.0
        %3313 = vmatpush1.msra.mxu0 0.0
        %3314 = vmatprep.subr.mxu0 0.0
        %3315 = vmatpush1.msra.mxu0 0.0
        %3316 = vmatprep.subr.mxu0 0.0
        %3317 = vmatpush1.msra.mxu0 0.0
        %3318 = vmatprep.subr.mxu0 0.0
        %3319 = vmatpush1.msra.mxu0 0.0
        %3320 = vmatprep.subr.mxu0 %v3135
        %3321 = vmatpush1.msra.mxu0 %v3134
        %3322 = vmatprep.subr.mxu0 0.0
        %3323 = vmatpush2.msra.mxu0 0.0
        %3324 = vmatprep.subr.mxu0 0.0
        %3325 = vmatpush2.msra.mxu0 0.0
        %3326 = vmatprep.subr.mxu0 0.0
        %3327 = vmatpush2.msra.mxu0 0.0
        %3328 = vmatprep.subr.mxu0 0.0
        %3329 = vmatpush2.msra.mxu0 0.0
        %3330 = vmatprep.subr.mxu0 0.0
        %3331 = vmatpush2.msra.mxu0 0.0
        %3332 = vmatprep.subr.mxu0 0.0
        %3333 = vmatpush2.msra.mxu0 0.0
        %3334 = vmatprep.subr.mxu0 0.0
        %3335 = vmatpush2.msra.mxu0 0.0
        %3336 = vmatprep.subr.mxu0 0.0
        %3337 = vmatpush2.msra.mxu0 0.0
        %3338 = vmatprep.subr.mxu0 0.0
        %3339 = vmatpush2.msra.mxu0 0.0
        %3340 = vmatprep.subr.mxu0 0.0
        %3341 = vmatpush2.msra.mxu0 0.0
        %3342 = vmatprep.subr.mxu0 0.0
        %3343 = vmatpush2.msra.mxu0 0.0
        %3344 = vmatprep.subr.mxu0 0.0
        %3345 = vmatpush2.msra.mxu0 0.0
        %3346 = vmatprep.subr.mxu0 0.0
        %3347 = vmatpush2.msra.mxu0 0.0
        %3348 = vmatprep.subr.mxu0 0.0
        %3349 = vmatpush2.msra.mxu0 0.0
        %3350 = vmatprep.subr.mxu0 0.0
        %3351 = vmatpush2.msra.mxu0 0.0
        %3352 = vmatprep.subr.mxu0 0.0
        %3353 = vmatpush2.msra.mxu0 0.0
        %3354 = vmatprep.mubr.f32.mxu0 0.0
        %3355 = vmatmul.mubr.f32.gmra.mxu0 %v3146
        %v3356 = vpop.f32.mrf.mxu0
        %v3357 = vadd.f32 %v3143, %v3356
        %v3358 = vpop.f32.mrf.mxu0
        %v3359 = vadd.f32 %v3143, %v3358
        %3360 = vdwg.mxu0
        %3361 = vmatprep.subr.mxu0 0.0
        %3362 = vmatpush1.msra.mxu0 0.0
        %3363 = vmatprep.subr.mxu0 0.0
        %3364 = vmatpush1.msra.mxu0 0.0
        %3365 = vmatprep.subr.mxu0 0.0
        %3366 = vmatpush1.msra.mxu0 0.0
        %3367 = vmatprep.subr.mxu0 0.0
        %3368 = vmatpush1.msra.mxu0 0.0
        %3369 = vmatprep.subr.mxu0 0.0
        %3370 = vmatpush1.msra.mxu0 0.0
        %3371 = vmatprep.subr.mxu0 0.0
        %3372 = vmatpush1.msra.mxu0 0.0
        %3373 = vmatprep.subr.mxu0 0.0
        %3374 = vmatpush1.msra.mxu0 0.0
        %3375 = vmatprep.subr.mxu0 0.0
        %3376 = vmatpush1.msra.mxu0 0.0
        %3377 = vmatprep.subr.mxu0 0.0
        %3378 = vmatpush1.msra.mxu0 0.0
        %3379 = vmatprep.subr.mxu0 0.0
        %3380 = vmatpush1.msra.mxu0 0.0
        %3381 = vmatprep.subr.mxu0 0.0
        %3382 = vmatpush1.msra.mxu0 0.0
        %3383 = vmatprep.subr.mxu0 0.0
        %3384 = vmatpush1.msra.mxu0 0.0
        %3385 = vmatprep.subr.mxu0 0.0
        %3386 = vmatpush1.msra.mxu0 0.0
        %3387 = vmatprep.subr.mxu0 0.0
        %3388 = vmatpush1.msra.mxu0 0.0
        %3389 = vmatprep.subr.mxu0 0.0
        %3390 = vmatpush1.msra.mxu0 0.0
        %3391 = vmatprep.subr.mxu0 %v3137
        %3392 = vmatpush1.msra.mxu0 %v3136
        %3393 = vmatprep.subr.mxu0 0.0
        %3394 = vmatpush2.msra.mxu0 0.0
        %3395 = vmatprep.subr.mxu0 0.0
        %3396 = vmatpush2.msra.mxu0 0.0
        %3397 = vmatprep.subr.mxu0 0.0
        %3398 = vmatpush2.msra.mxu0 0.0
        %3399 = vmatprep.subr.mxu0 0.0
        %3400 = vmatpush2.msra.mxu0 0.0
        %3401 = vmatprep.subr.mxu0 0.0
        %3402 = vmatpush2.msra.mxu0 0.0
        %3403 = vmatprep.subr.mxu0 0.0
        %3404 = vmatpush2.msra.mxu0 0.0
        %3405 = vmatprep.subr.mxu0 0.0
        %3406 = vmatpush2.msra.mxu0 0.0
        %3407 = vmatprep.subr.mxu0 0.0
        %3408 = vmatpush2.msra.mxu0 0.0
        %3409 = vmatprep.subr.mxu0 0.0
        %3410 = vmatpush2.msra.mxu0 0.0
        %3411 = vmatprep.subr.mxu0 0.0
        %3412 = vmatpush2.msra.mxu0 0.0
        %3413 = vmatprep.subr.mxu0 0.0
        %3414 = vmatpush2.msra.mxu0 0.0
        %3415 = vmatprep.subr.mxu0 0.0
        %3416 = vmatpush2.msra.mxu0 0.0
        %3417 = vmatprep.subr.mxu0 0.0
        %3418 = vmatpush2.msra.mxu0 0.0
        %3419 = vmatprep.subr.mxu0 0.0
        %3420 = vmatpush2.msra.mxu0 0.0
        %3421 = vmatprep.subr.mxu0 0.0
        %3422 = vmatpush2.msra.mxu0 0.0
        %3423 = vmatprep.subr.mxu0 0.0
        %3424 = vmatpush2.msra.mxu0 0.0
        %3425 = vmatprep.mubr.f32.mxu0 0.0
        %3426 = vmatmul.mubr.f32.gmra.mxu0 %v3146
        %v3427 = vpop.f32.mrf.mxu0
        %v3428 = vadd.f32 %v3143, %v3427
        %v3429 = vpop.f32.mrf.mxu0
        %v3430 = vadd.f32 %v3143, %v3429
        %3431 = vdwg.mxu0
        %v3432 = vadd.f32 %v3215, %v488
        %v3433 = vadd.f32 %v3217, %v489
        %v3434 = vadd.f32 %v3286, %v490
        %v3435 = vadd.f32 %v3288, %v491
        %v3436 = vadd.f32 %v3357, %v492
        %v3437 = vadd.f32 %v3359, %v493
        %v3438 = vadd.f32 %v3428, %v494
        %v3439 = vadd.f32 %v3430, %v495
        %3440 = vst [vmem:[%s485] sm:$0xff] %v3432
        %3441 = vst [vmem:[%s485 + $0x8] sm:$0xff] %v3433
        %3442 = vst [vmem:[%s485 + $0x10] sm:$0xff] %v3434
        %3443 = vst [vmem:[%s485 + $0x18] sm:$0xff] %v3435
        %3444 = vst [vmem:[%s485 + $0x20] sm:$0xff] %v3436
        %3445 = vst [vmem:[%s485 + $0x28] sm:$0xff] %v3437
        %3446 = vst [vmem:[%s485 + $0x30] sm:$0xff] %v3438
        %3447 = vst [vmem:[%s485 + $0x38] sm:$0xff] %v3439
        %s3448 = sand.u32 %s317, 1
        %s3449 = scalar_lea.sflag [#allocation4], %s3448
        %s3450 = sand.u32 %s317, 1
        %s3451 = smul.addr %s3450, 64
        %s3452 = scalar_lea.vmem [#allocation8], %s3451
        // Predicated region
        $region85: #{tpu_custom_call.1} parent=71 // pred_check
          %p3453 = pneg %p327
        $region86: #{tpu_custom_call.1} parent=71 // pred_check_branch
          %3455 = sbr.rel (%p3453) target = $region88
        $region87: #{tpu_custom_call.1} parent=71 // pred_region
          %s3456 = smul.u32 8, %s31
          %s3458 = ssub.s32 1024, 1024
          %3459 = vsyncadd %s3449, %s3458
          %s3460 = smul.addr %s3456, 128
          %s3461 = scalar_lea.hbm %s13, %s3460
          %s3463 = sshll.u32 %s3452, 4
          %s3464 = int_to_ptr.vmem [resolvable:$true] %s3463
          %3466 = dma.vmem_to_hbm [thread:$0]  %s3464, 1024, %s3461, %s3449
        $region88: #{tpu_custom_call.1} parent=71 // pred_fallthru
          _
      $region72: #{tpu_custom_call.1} parent=5 // pred_fallthru
        _
      %p3467 = scmp.le.s32.totalorder 2, %s26
      // Predicated region
      $region89: #{tpu_custom_call.1} parent=5 // pred_check
        %p3468 = pneg %p3467
      $region90: #{tpu_custom_call.1} parent=5 // pred_check_branch
        %3470 = sbr.rel (%p3468) target = $region92
      $region91: #{tpu_custom_call.1} parent=5 // pred_region
        %s3471 = ssub.s32 %s26, 2
        // Predicated region
        $region93: #{tpu_custom_call.1} parent=91 // pred_check
          %p3472 = pneg %p333
        $region94: #{tpu_custom_call.1} parent=91 // pred_check_branch
          %3474 = sbr.rel (%p3472) target = $region96
        $region95: #{tpu_custom_call.1} parent=91 // pred_region
          %s3475 = sand.u32 %s318, 1
          %s3476 = scalar_lea.sflag [#allocation4], %s3475
          %s3477 = sand.u32 %s318, 1
          %s3478 = smul.addr %s3477, 64
          %s3479 = scalar_lea.vmem [#allocation8], %s3478
          %3480 = dma.done %s3476, 1024
        $region96: #{tpu_custom_call.1} parent=91 // pred_fallthru
          _
      $region92: #{tpu_custom_call.1} parent=5 // pred_fallthru
        _
    $region6: #{tpu_custom_call.1} parent=1 // loop_footer
      %s30 = sadd.s32 1, %s26
    $region7: #{tpu_custom_call.1} parent=1 // loop_footer_branch
      %25 = sbr.rel target = $region3
    $region8: #{tpu_custom_call.1} parent=1 // loop_exit
      _
    %3481 = vsyncpa [#allocation3], 1
    %s3482 = scalar_lea.sflag [#allocation3], 1
    %3483 = vsyncpa %s3482, 1
    %3484 = vsyncpa [#allocation6], 1
    %3485 = vsyncpa [#allocation4], 1
    %s3486 = scalar_lea.sflag [#allocation4], 1
    %3487 = vsyncpa %s3486, 1

</llo_original>
